<compile_context>
chip_gen: v7x
topology: tpu7x:2x2x1
jax: 0.10.0
libtpu: 0.0.40
codegen_flags: <defaults>
</compile_context>

<pallas_src>
import jax
import jax.numpy as jnp
from jax.experimental import pallas as pl
from jax.experimental.pallas import tpu as pltpu

NEG_SLOPE = 0.01          # nn.LeakyReLU default
NORM_EPS = 1e-9           # feature / (feature.norm(dim=1) + 1e-9)
LANE = 128                # TPU lane width

RADI_SEGS = (17, 324, 375, 975)   # shape / first-order / second-order / high-level
RADI_IN = sum(RADI_SEGS)          # 1691
RADI_IN_PAD = 1792                # next multiple of 128
DVB_IN, HLQ_IN = 5, 64


def _round_up(x, m):
    return (x + m - 1) // m * m


# --------------------------------------------------------------------------- #
# Fused kernel
# --------------------------------------------------------------------------- #
def _covidnet_kernel(
    radi_ref, dvb_ref, hlq_ref,
    w_rbd_ref, b_rbd_ref, w_rf1_ref, b_rf1_ref, w_rp_ref, b_rp_ref,
    w_d1_ref, b_d1_ref, w_d2_ref, b_d2_ref, w_dp_ref, b_dp_ref,
    w_h1_ref, b_h1_ref, w_hp_ref, b_hp_ref,
    w_f_ref, b_f_ref,
    pred_ref, radi_pred_ref, dvb_pred_ref, hlq_pred_ref,
):
    bf16 = jnp.bfloat16

    def dense(x_bf16, w_ref, b_ref, relu=True):
        # MXU matmul in bf16 with f32 accumulation; bias / LeakyReLU in f32.
        y = jnp.dot(x_bf16, w_ref[...], preferred_element_type=jnp.float32)
        y = y + b_ref[...]
        if relu:
            y = jnp.where(y > 0, y, NEG_SLOPE * y)
        return y

    def l2norm(f):
        # Padded lanes are exactly zero, so the norm equals the unpadded norm.
        nrm = jnp.sqrt(jnp.sum(f * f, axis=1, keepdims=True))
        return f / (nrm + NORM_EPS)

    # ---- Radi branch: 4 sub-FCs fused as one block-diagonal matmul, then fc_1.
    h = dense(radi_ref[...], w_rbd_ref, b_rbd_ref)              # (TB,128) lanes 0..63 valid
    h = dense(h.astype(bf16), w_rf1_ref, b_rf1_ref)             # lanes 0..15 valid
    radi_feat = l2norm(h)
    radi_pred_ref[...] = dense(radi_feat.astype(bf16), w_rp_ref, b_rp_ref, relu=False)

    # ---- DVB branch: 5 -> 16 -> 8, normalise, predict.
    h = dense(dvb_ref[...], w_d1_ref, b_d1_ref)
    h = dense(h.astype(bf16), w_d2_ref, b_d2_ref)               # lanes 0..7 valid
    dvb_feat = l2norm(h)
    dvb_pred_ref[...] = dense(dvb_feat.astype(bf16), w_dp_ref, b_dp_ref, relu=False)

    # ---- HLQ branch: 64 -> 16, normalise, predict.
    h = dense(hlq_ref[...], w_h1_ref, b_h1_ref)                 # lanes 0..15 valid
    hlq_feat = l2norm(h)
    hlq_pred_ref[...] = dense(hlq_feat.astype(bf16), w_hp_ref, b_hp_ref, relu=False)

    # ---- Fusion head: cat([hlq, dvb, radi]) (one 128-lane slab each), renorm, FC.
    fused = l2norm(jnp.concatenate([hlq_feat, dvb_feat, radi_feat], axis=1))
    pred_ref[...] = dense(fused.astype(bf16), w_f_ref, b_f_ref, relu=False)


# --------------------------------------------------------------------------- #
# Host-side packing (transpose / pad to lane-dense layouts, fuse radi sub-FCs)
# --------------------------------------------------------------------------- #
_PACKED_ORDER = (
    "w_radi_bd", "b_radi_bd",
    "w_radi_fc1", "b_radi_fc1",
    "w_radi_pred", "b_radi_pred",
    "w_dvb1", "b_dvb1",
    "w_dvb2", "b_dvb2",
    "w_dvb_pred", "b_dvb_pred",
    "w_hlq1", "b_hlq1",
    "w_hlq_pred", "b_hlq_pred",
    "w_fuse", "b_fuse",
)


def init_params(key, num_classes=2):
    """Torch-layout params (weight [out, in], bias [out]) with nn.Linear init."""
    layer_defs = (
        ("radi_shape", 16, 17),
        ("radi_first", 16, 324),
        ("radi_second", 16, 375),
        ("radi_high", 16, 975),
        ("radi_fc1", 16, 64),
        ("radi_pred", num_classes, 16),
        ("dvb_fuse1", 16, 5),
        ("dvb_fuse2", 8, 16),
        ("dvb_pred", num_classes, 8),
        ("hlq_fc1", 16, 64),
        ("hlq_pred", num_classes, 16),
        ("fuse_pred", num_classes, 40),
    )
    keys = jax.random.split(key, len(layer_defs))
    params = {}
    for k, (name, out_f, in_f) in zip(keys, layer_defs):
        kw, kb = jax.random.split(k)
        bound = 1.0 / (in_f ** 0.5)
        w = jax.random.uniform(kw, (out_f, in_f), jnp.float32, -bound, bound)
        b = jax.random.uniform(kb, (out_f,), jnp.float32, -bound, bound)
        params[name] = (w, b)
    return params


def pack_params(params, num_classes):
    """Pad / transpose the torch-layout params into lane-dense TPU operands.

    Weights become [K_pad, N_pad] bf16 (x @ W layout), biases [1, N_pad] f32.
    The four radi sub-branch Linears are fused into one block-diagonal weight.
    """
    cp = _round_up(num_classes, LANE)

    def pad_wt(w, k_pad, n_pad):
        wt = jnp.transpose(w)
        k, n = wt.shape
        return (jnp.zeros((k_pad, n_pad), jnp.float32)
                .at[:k, :n].set(wt).astype(jnp.bfloat16))

    def pad_b(b, n_pad):
        return jnp.zeros((1, n_pad), jnp.float32).at[0, :b.shape[0]].set(b)

    # Block-diagonal fusion of the 4 radi sub-branch FCs -> one [1792, 128] matmul.
    w_bd = jnp.zeros((RADI_IN_PAD, LANE), jnp.float32)
    b_bd = jnp.zeros((1, LANE), jnp.float32)
    k_off, n_off = 0, 0
    for name in ("radi_shape", "radi_first", "radi_second", "radi_high"):
        w, b = params[name]
        o, k = w.shape
        w_bd = w_bd.at[k_off:k_off + k, n_off:n_off + o].set(jnp.transpose(w))
        b_bd = b_bd.at[0, n_off:n_off + o].set(b)
        k_off += k
        n_off += o

    # fuse_pred consumes cat([hlq(16), dvb(8), radi(16)]); in the kernel each
    # feature lives in its own 128-lane slab, so scatter weight rows accordingly.
    w_fuse, b_fuse = params["fuse_pred"]
    wt = jnp.transpose(w_fuse)                                      # [40, C]
    w_f = jnp.zeros((3 * LANE, cp), jnp.float32)
    w_f = w_f.at[0:16, :num_classes].set(wt[0:16])                  # hlq slab
    w_f = w_f.at[LANE:LANE + 8, :num_classes].set(wt[16:24])        # dvb slab
    w_f = w_f.at[2 * LANE:2 * LANE + 16, :num_classes].set(wt[24:40])  # radi slab

    return {
        "w_radi_bd": w_bd.astype(jnp.bfloat16),
        "b_radi_bd": b_bd,
        "w_radi_fc1": pad_wt(params["radi_fc1"][0], LANE, LANE),
        "b_radi_fc1": pad_b(params["radi_fc1"][1], LANE),
        "w_radi_pred": pad_wt(params["radi_pred"][0], LANE, cp),
        "b_radi_pred": pad_b(params["radi_pred"][1], cp),
        "w_dvb1": pad_wt(params["dvb_fuse1"][0], LANE, LANE),
        "b_dvb1": pad_b(params["dvb_fuse1"][1], LANE),
        "w_dvb2": pad_wt(params["dvb_fuse2"][0], LANE, LANE),
        "b_dvb2": pad_b(params["dvb_fuse2"][1], LANE),
        "w_dvb_pred": pad_wt(params["dvb_pred"][0], LANE, cp),
        "b_dvb_pred": pad_b(params["dvb_pred"][1], cp),
        "w_hlq1": pad_wt(params["hlq_fc1"][0], LANE, LANE),
        "b_hlq1": pad_b(params["hlq_fc1"][1], LANE),
        "w_hlq_pred": pad_wt(params["hlq_pred"][0], LANE, cp),
        "b_hlq_pred": pad_b(params["hlq_pred"][1], cp),
        "w_fuse": w_f.astype(jnp.bfloat16),
        "b_fuse": pad_b(b_fuse, cp),
    }


def _pad_input(x, k_pad, b_pad):
    b, k = x.shape
    out = jnp.zeros((b_pad, k_pad), jnp.float32).at[:b, :k].set(x)
    return out.astype(jnp.bfloat16)


def covidnet_forward(packed, radi, dvb, hlq, num_classes):
    """radi [B,1691], dvb [B,5], hlq [B,64] -> (pred, radi_pred, dvb_pred, hlq_pred)."""
    B = radi.shape[0]
    cp = _round_up(num_classes, LANE)
    tb = min(128, _round_up(B, 16))          # batch tile (bf16 sublane friendly)
    b_pad = _round_up(B, tb)

    radi_p = _pad_input(radi, RADI_IN_PAD, b_pad)
    dvb_p = _pad_input(dvb, LANE, b_pad)
    hlq_p = _pad_input(hlq, LANE, b_pad)

    row_map = lambda i: (i, 0)       # data / outputs walk the batch tiles
    const_map = lambda i: (0, 0)     # weights: single block, stays VMEM-resident

    weights = [packed[name] for name in _PACKED_ORDER]

    in_specs = (
        [pl.BlockSpec((tb, RADI_IN_PAD), row_map),
         pl.BlockSpec((tb, LANE), row_map),
         pl.BlockSpec((tb, LANE), row_map)]
        + [pl.BlockSpec(w.shape, const_map) for w in weights]
    )
    out_specs = [pl.BlockSpec((tb, cp), row_map)] * 4
    out_shape = tuple(jax.ShapeDtypeStruct((b_pad, cp), jnp.float32) for _ in range(4))

    pred, radi_pred, dvb_pred, hlq_pred = pl.pallas_call(
        _covidnet_kernel,
        grid=(b_pad // tb,),
        in_specs=in_specs,
        out_specs=out_specs,
        out_shape=out_shape,
        compiler_params=pltpu.CompilerParams(
            dimension_semantics=("parallel",)),   # v7x: the 2 TCs split batch tiles
    )(radi_p, dvb_p, hlq_p, *weights)

    crop = lambda y: y[:B, :num_classes]
    return crop(pred), crop(radi_pred), crop(dvb_pred), crop(hlq_pred)


# --------------------------------------------------------------------------- #
# Pure-JAX reference mirroring the kernel math (bf16 matmul operands, f32 rest)
# --------------------------------------------------------------------------- #
def reference_forward(params, radi, dvb, hlq):
    bf16 = jnp.bfloat16

    def dense(x, w, b, relu=True):
        y = jnp.dot(x.astype(bf16), jnp.transpose(w).astype(bf16),
                    preferred_element_type=jnp.float32) + b
        if relu:
            y = jnp.where(y > 0, y, NEG_SLOPE * y)
        return y

    def l2norm(f):
        return f / (jnp.sqrt(jnp.sum(f * f, axis=1, keepdims=True)) + NORM_EPS)

    # Radi branch
    segs, off = [], 0
    for s in RADI_SEGS:
        segs.append(radi[:, off:off + s])
        off += s
    sub = [dense(x, *params[name]) for x, name in
           zip(segs, ("radi_shape", "radi_first", "radi_second", "radi_high"))]
    r = dense(jnp.concatenate(sub, axis=1), *params["radi_fc1"])
    radi_feat = l2norm(r)
    radi_pred = dense(radi_feat, *params["radi_pred"], relu=False)

    # DVB branch
    d = dense(dvb, *params["dvb_fuse1"])
    d = dense(d, *params["dvb_fuse2"])
    dvb_feat = l2norm(d)
    dvb_pred = dense(dvb_feat, *params["dvb_pred"], relu=False)

    # HLQ branch
    h = dense(hlq, *params["hlq_fc1"])
    hlq_feat = l2norm(h)
    hlq_pred = dense(hlq_feat, *params["hlq_pred"], relu=False)

    # Fusion head
    feat = l2norm(jnp.concatenate([hlq_feat, dvb_feat, radi_feat], axis=1))
    pred = dense(feat, *params["fuse_pred"], relu=False)
    return pred, radi_pred, dvb_pred, hlq_pred


if __name__ == "__main__":
    B, NUM_CLASSES = 4, 2

    key = jax.random.PRNGKey(0)
    k_param, k_radi, k_dvb, k_hlq = jax.random.split(key, 4)

    params = init_params(k_param, NUM_CLASSES)
    radi = jax.random.normal(k_radi, (B, RADI_IN), dtype=jnp.float32)
    dvb = jax.random.normal(k_dvb, (B, DVB_IN), dtype=jnp.float32)
    hlq = jax.random.normal(k_hlq, (B, HLQ_IN), dtype=jnp.float32)

    packed = pack_params(params, NUM_CLASSES)
    outs = covidnet_forward(packed, radi, dvb, hlq, NUM_CLASSES)
    outs = jax.block_until_ready(outs)

    refs = reference_forward(params, radi, dvb, hlq)
    for name, got, want in zip(("pred", "radi_pred", "dvb_pred", "hlq_pred"), outs, refs):
        assert got.shape == want.shape, (name, got.shape, want.shape)
        assert jnp.allclose(got, want, atol=1e-3, rtol=1e-3), (
            name, float(jnp.max(jnp.abs(got - want))))

    # TODO(synk): nn.Dropout path (dout=True) would need pltpu PRNG; default
    # COVIDNet disables it (and it is identity at inference), so it is omitted.
    print("KERNEL_OK")
</pallas_src>

<mosaic_0001>
module attributes {stable_mosaic.version = 11 : i64} {
  func.func @_covidnet_kernel(%arg0: i32, %arg1: memref<16x1792xbf16, #tpu.memory_space<vmem>>, %arg2: memref<16x128xbf16, #tpu.memory_space<vmem>>, %arg3: memref<16x128xbf16, #tpu.memory_space<vmem>>, %arg4: memref<1792x128xbf16, #tpu.memory_space<vmem>>, %arg5: memref<1x128xf32, #tpu.memory_space<vmem>>, %arg6: memref<128x128xbf16, #tpu.memory_space<vmem>>, %arg7: memref<1x128xf32, #tpu.memory_space<vmem>>, %arg8: memref<128x128xbf16, #tpu.memory_space<vmem>>, %arg9: memref<1x128xf32, #tpu.memory_space<vmem>>, %arg10: memref<128x128xbf16, #tpu.memory_space<vmem>>, %arg11: memref<1x128xf32, #tpu.memory_space<vmem>>, %arg12: memref<128x128xbf16, #tpu.memory_space<vmem>>, %arg13: memref<1x128xf32, #tpu.memory_space<vmem>>, %arg14: memref<128x128xbf16, #tpu.memory_space<vmem>>, %arg15: memref<1x128xf32, #tpu.memory_space<vmem>>, %arg16: memref<128x128xbf16, #tpu.memory_space<vmem>>, %arg17: memref<1x128xf32, #tpu.memory_space<vmem>>, %arg18: memref<128x128xbf16, #tpu.memory_space<vmem>>, %arg19: memref<1x128xf32, #tpu.memory_space<vmem>>, %arg20: memref<384x128xbf16, #tpu.memory_space<vmem>>, %arg21: memref<1x128xf32, #tpu.memory_space<vmem>>, %arg22: memref<16x128xf32, #tpu.memory_space<vmem>>, %arg23: memref<16x128xf32, #tpu.memory_space<vmem>>, %arg24: memref<16x128xf32, #tpu.memory_space<vmem>>, %arg25: memref<16x128xf32, #tpu.memory_space<vmem>>) attributes {dimension_semantics = [#tpu.dimension_semantics<parallel>], iteration_bounds = array<i64: 1>, scalar_prefetch = 0 : i64, scratch_operands = 0 : i64, tpu.core_type = #tpu.core_type<tc>, window_params = [{transform_indices = @transform_0, window_bounds = array<i64: 16, 1792>}, {transform_indices = @transform_1, window_bounds = array<i64: 16, 128>}, {transform_indices = @transform_2, window_bounds = array<i64: 16, 128>}, {pipeline_mode = #tpu.pipeline_mode<synchronous>, transform_indices = @transform_3, window_bounds = array<i64: 1792, 128>}, {pipeline_mode = #tpu.pipeline_mode<synchronous>, transform_indices = @transform_4, window_bounds = array<i64: 1, 128>}, {pipeline_mode = #tpu.pipeline_mode<synchronous>, transform_indices = @transform_5, window_bounds = array<i64: 128, 128>}, {pipeline_mode = #tpu.pipeline_mode<synchronous>, transform_indices = @transform_6, window_bounds = array<i64: 1, 128>}, {pipeline_mode = #tpu.pipeline_mode<synchronous>, transform_indices = @transform_7, window_bounds = array<i64: 128, 128>}, {pipeline_mode = #tpu.pipeline_mode<synchronous>, transform_indices = @transform_8, window_bounds = array<i64: 1, 128>}, {pipeline_mode = #tpu.pipeline_mode<synchronous>, transform_indices = @transform_9, window_bounds = array<i64: 128, 128>}, {pipeline_mode = #tpu.pipeline_mode<synchronous>, transform_indices = @transform_10, window_bounds = array<i64: 1, 128>}, {pipeline_mode = #tpu.pipeline_mode<synchronous>, transform_indices = @transform_11, window_bounds = array<i64: 128, 128>}, {pipeline_mode = #tpu.pipeline_mode<synchronous>, transform_indices = @transform_12, window_bounds = array<i64: 1, 128>}, {pipeline_mode = #tpu.pipeline_mode<synchronous>, transform_indices = @transform_13, window_bounds = array<i64: 128, 128>}, {pipeline_mode = #tpu.pipeline_mode<synchronous>, transform_indices = @transform_14, window_bounds = array<i64: 1, 128>}, {pipeline_mode = #tpu.pipeline_mode<synchronous>, transform_indices = @transform_15, window_bounds = array<i64: 128, 128>}, {pipeline_mode = #tpu.pipeline_mode<synchronous>, transform_indices = @transform_16, window_bounds = array<i64: 1, 128>}, {pipeline_mode = #tpu.pipeline_mode<synchronous>, transform_indices = @transform_17, window_bounds = array<i64: 128, 128>}, {pipeline_mode = #tpu.pipeline_mode<synchronous>, transform_indices = @transform_18, window_bounds = array<i64: 1, 128>}, {pipeline_mode = #tpu.pipeline_mode<synchronous>, transform_indices = @transform_19, window_bounds = array<i64: 384, 128>}, {pipeline_mode = #tpu.pipeline_mode<synchronous>, transform_indices = @transform_20, window_bounds = array<i64: 1, 128>}, {transform_indices = @transform_21, window_bounds = array<i64: 16, 128>}, {transform_indices = @transform_22, window_bounds = array<i64: 16, 128>}, {transform_indices = @transform_23, window_bounds = array<i64: 16, 128>}, {transform_indices = @transform_24, window_bounds = array<i64: 16, 128>}]} {
    %c0 = arith.constant 0 : index
    %c0_0 = arith.constant 0 : index
    %0 = vector.load %arg1[%c0, %c0_0] : memref<16x1792xbf16, #tpu.memory_space<vmem>>, vector<16x1792xbf16>
    %c0_1 = arith.constant 0 : index
    %c0_2 = arith.constant 0 : index
    %1 = vector.load %arg4[%c0_1, %c0_2] : memref<1792x128xbf16, #tpu.memory_space<vmem>>, vector<1792x128xbf16>
    %cst = arith.constant dense<0.000000e+00> : vector<16x128xf32>
    %2 = tpu.matmul %0, %1, %cst {dimension_numbers = #tpu.dot_dimension_numbers<[1], [0], [0], [1], [0, 0, 1, 1], [], []>} : vector<16x1792xbf16>, vector<1792x128xbf16>, vector<16x128xf32> -> vector<16x128xf32>
    %c0_3 = arith.constant 0 : index
    %c0_4 = arith.constant 0 : index
    %3 = vector.load %arg5[%c0_3, %c0_4] : memref<1x128xf32, #tpu.memory_space<vmem>>, vector<1x128xf32>
    %4 = vector.broadcast %3 : vector<1x128xf32> to vector<16x128xf32>
    %5 = arith.addf %2, %4 : vector<16x128xf32>
    %cst_5 = arith.constant 0.000000e+00 : f32
    %6 = vector.broadcast %cst_5 : f32 to vector<16x128xf32>
    %7 = arith.cmpf ogt, %5, %6 : vector<16x128xf32>
    %cst_6 = arith.constant 0.00999999977 : f32
    %8 = vector.broadcast %cst_6 : f32 to vector<16x128xf32>
    %9 = arith.mulf %8, %5 : vector<16x128xf32>
    %10 = arith.select %7, %5, %9 : vector<16x128xi1>, vector<16x128xf32>
    %11 = arith.truncf %10 : vector<16x128xf32> to vector<16x128xbf16>
    %c0_7 = arith.constant 0 : index
    %c0_8 = arith.constant 0 : index
    %12 = vector.load %arg6[%c0_7, %c0_8] : memref<128x128xbf16, #tpu.memory_space<vmem>>, vector<128x128xbf16>
    %cst_9 = arith.constant dense<0.000000e+00> : vector<16x128xf32>
    %13 = tpu.matmul %11, %12, %cst_9 {dimension_numbers = #tpu.dot_dimension_numbers<[1], [0], [0], [1], [0, 0, 1, 1], [], []>} : vector<16x128xbf16>, vector<128x128xbf16>, vector<16x128xf32> -> vector<16x128xf32>
    %c0_10 = arith.constant 0 : index
    %c0_11 = arith.constant 0 : index
    %14 = vector.load %arg7[%c0_10, %c0_11] : memref<1x128xf32, #tpu.memory_space<vmem>>, vector<1x128xf32>
    %15 = vector.broadcast %14 : vector<1x128xf32> to vector<16x128xf32>
    %16 = arith.addf %13, %15 : vector<16x128xf32>
    %cst_12 = arith.constant 0.000000e+00 : f32
    %17 = vector.broadcast %cst_12 : f32 to vector<16x128xf32>
    %18 = arith.cmpf ogt, %16, %17 : vector<16x128xf32>
    %cst_13 = arith.constant 0.00999999977 : f32
    %19 = vector.broadcast %cst_13 : f32 to vector<16x128xf32>
    %20 = arith.mulf %19, %16 : vector<16x128xf32>
    %21 = arith.select %18, %16, %20 : vector<16x128xi1>, vector<16x128xf32>
    %22 = arith.mulf %21, %21 : vector<16x128xf32>
    %cst_14 = arith.constant dense<0.000000e+00> : vector<16xf32>
    %23 = vector.multi_reduction <add>, %22, %cst_14 [1] : vector<16x128xf32> to vector<16xf32>
    %24 = vector.shape_cast %23 : vector<16xf32> to vector<16x1xf32>
    %25 = math.sqrt %24 : vector<16x1xf32>
    %cst_15 = arith.constant 9.99999971E-10 : f32
    %26 = vector.broadcast %cst_15 : f32 to vector<16x1xf32>
    %27 = arith.addf %25, %26 : vector<16x1xf32>
    %28 = vector.broadcast %27 : vector<16x1xf32> to vector<16x128xf32>
    %29 = arith.divf %21, %28 : vector<16x128xf32>
    %30 = arith.truncf %29 : vector<16x128xf32> to vector<16x128xbf16>
    %c0_16 = arith.constant 0 : index
    %c0_17 = arith.constant 0 : index
    %31 = vector.load %arg8[%c0_16, %c0_17] : memref<128x128xbf16, #tpu.memory_space<vmem>>, vector<128x128xbf16>
    %cst_18 = arith.constant dense<0.000000e+00> : vector<16x128xf32>
    %32 = tpu.matmul %30, %31, %cst_18 {dimension_numbers = #tpu.dot_dimension_numbers<[1], [0], [0], [1], [0, 0, 1, 1], [], []>} : vector<16x128xbf16>, vector<128x128xbf16>, vector<16x128xf32> -> vector<16x128xf32>
    %c0_19 = arith.constant 0 : index
    %c0_20 = arith.constant 0 : index
    %33 = vector.load %arg9[%c0_19, %c0_20] : memref<1x128xf32, #tpu.memory_space<vmem>>, vector<1x128xf32>
    %34 = vector.broadcast %33 : vector<1x128xf32> to vector<16x128xf32>
    %35 = arith.addf %32, %34 : vector<16x128xf32>
    %c0_21 = arith.constant 0 : index
    %c0_22 = arith.constant 0 : index
    %36 = vector.load %arg23[%c0_21, %c0_22] : memref<16x128xf32, #tpu.memory_space<vmem>>, vector<16x128xf32>
    tpu.vector_store %arg23[%c0_21, %c0_22], %35 {strides = array<i32>} : memref<16x128xf32, #tpu.memory_space<vmem>>, vector<16x128xf32>,
    %c0_23 = arith.constant 0 : index
    %c0_24 = arith.constant 0 : index
    %37 = vector.load %arg2[%c0_23, %c0_24] : memref<16x128xbf16, #tpu.memory_space<vmem>>, vector<16x128xbf16>
    %c0_25 = arith.constant 0 : index
    %c0_26 = arith.constant 0 : index
    %38 = vector.load %arg10[%c0_25, %c0_26] : memref<128x128xbf16, #tpu.memory_space<vmem>>, vector<128x128xbf16>
    %cst_27 = arith.constant dense<0.000000e+00> : vector<16x128xf32>
    %39 = tpu.matmul %37, %38, %cst_27 {dimension_numbers = #tpu.dot_dimension_numbers<[1], [0], [0], [1], [0, 0, 1, 1], [], []>} : vector<16x128xbf16>, vector<128x128xbf16>, vector<16x128xf32> -> vector<16x128xf32>
    %c0_28 = arith.constant 0 : index
    %c0_29 = arith.constant 0 : index
    %40 = vector.load %arg11[%c0_28, %c0_29] : memref<1x128xf32, #tpu.memory_space<vmem>>, vector<1x128xf32>
    %41 = vector.broadcast %40 : vector<1x128xf32> to vector<16x128xf32>
    %42 = arith.addf %39, %41 : vector<16x128xf32>
    %cst_30 = arith.constant 0.000000e+00 : f32
    %43 = vector.broadcast %cst_30 : f32 to vector<16x128xf32>
    %44 = arith.cmpf ogt, %42, %43 : vector<16x128xf32>
    %cst_31 = arith.constant 0.00999999977 : f32
    %45 = vector.broadcast %cst_31 : f32 to vector<16x128xf32>
    %46 = arith.mulf %45, %42 : vector<16x128xf32>
    %47 = arith.select %44, %42, %46 : vector<16x128xi1>, vector<16x128xf32>
    %48 = arith.truncf %47 : vector<16x128xf32> to vector<16x128xbf16>
    %c0_32 = arith.constant 0 : index
    %c0_33 = arith.constant 0 : index
    %49 = vector.load %arg12[%c0_32, %c0_33] : memref<128x128xbf16, #tpu.memory_space<vmem>>, vector<128x128xbf16>
    %cst_34 = arith.constant dense<0.000000e+00> : vector<16x128xf32>
    %50 = tpu.matmul %48, %49, %cst_34 {dimension_numbers = #tpu.dot_dimension_numbers<[1], [0], [0], [1], [0, 0, 1, 1], [], []>} : vector<16x128xbf16>, vector<128x128xbf16>, vector<16x128xf32> -> vector<16x128xf32>
    %c0_35 = arith.constant 0 : index
    %c0_36 = arith.constant 0 : index
    %51 = vector.load %arg13[%c0_35, %c0_36] : memref<1x128xf32, #tpu.memory_space<vmem>>, vector<1x128xf32>
    %52 = vector.broadcast %51 : vector<1x128xf32> to vector<16x128xf32>
    %53 = arith.addf %50, %52 : vector<16x128xf32>
    %cst_37 = arith.constant 0.000000e+00 : f32
    %54 = vector.broadcast %cst_37 : f32 to vector<16x128xf32>
    %55 = arith.cmpf ogt, %53, %54 : vector<16x128xf32>
    %cst_38 = arith.constant 0.00999999977 : f32
    %56 = vector.broadcast %cst_38 : f32 to vector<16x128xf32>
    %57 = arith.mulf %56, %53 : vector<16x128xf32>
    %58 = arith.select %55, %53, %57 : vector<16x128xi1>, vector<16x128xf32>
    %59 = arith.mulf %58, %58 : vector<16x128xf32>
    %cst_39 = arith.constant dense<0.000000e+00> : vector<16xf32>
    %60 = vector.multi_reduction <add>, %59, %cst_39 [1] : vector<16x128xf32> to vector<16xf32>
    %61 = vector.shape_cast %60 : vector<16xf32> to vector<16x1xf32>
    %62 = math.sqrt %61 : vector<16x1xf32>
    %cst_40 = arith.constant 9.99999971E-10 : f32
    %63 = vector.broadcast %cst_40 : f32 to vector<16x1xf32>
    %64 = arith.addf %62, %63 : vector<16x1xf32>
    %65 = vector.broadcast %64 : vector<16x1xf32> to vector<16x128xf32>
    %66 = arith.divf %58, %65 : vector<16x128xf32>
    %67 = arith.truncf %66 : vector<16x128xf32> to vector<16x128xbf16>
    %c0_41 = arith.constant 0 : index
    %c0_42 = arith.constant 0 : index
    %68 = vector.load %arg14[%c0_41, %c0_42] : memref<128x128xbf16, #tpu.memory_space<vmem>>, vector<128x128xbf16>
    %cst_43 = arith.constant dense<0.000000e+00> : vector<16x128xf32>
    %69 = tpu.matmul %67, %68, %cst_43 {dimension_numbers = #tpu.dot_dimension_numbers<[1], [0], [0], [1], [0, 0, 1, 1], [], []>} : vector<16x128xbf16>, vector<128x128xbf16>, vector<16x128xf32> -> vector<16x128xf32>
    %c0_44 = arith.constant 0 : index
    %c0_45 = arith.constant 0 : index
    %70 = vector.load %arg15[%c0_44, %c0_45] : memref<1x128xf32, #tpu.memory_space<vmem>>, vector<1x128xf32>
    %71 = vector.broadcast %70 : vector<1x128xf32> to vector<16x128xf32>
    %72 = arith.addf %69, %71 : vector<16x128xf32>
    %c0_46 = arith.constant 0 : index
    %c0_47 = arith.constant 0 : index
    %73 = vector.load %arg24[%c0_46, %c0_47] : memref<16x128xf32, #tpu.memory_space<vmem>>, vector<16x128xf32>
    tpu.vector_store %arg24[%c0_46, %c0_47], %72 {strides = array<i32>} : memref<16x128xf32, #tpu.memory_space<vmem>>, vector<16x128xf32>,
    %c0_48 = arith.constant 0 : index
    %c0_49 = arith.constant 0 : index
    %74 = vector.load %arg3[%c0_48, %c0_49] : memref<16x128xbf16, #tpu.memory_space<vmem>>, vector<16x128xbf16>
    %c0_50 = arith.constant 0 : index
    %c0_51 = arith.constant 0 : index
    %75 = vector.load %arg16[%c0_50, %c0_51] : memref<128x128xbf16, #tpu.memory_space<vmem>>, vector<128x128xbf16>
    %cst_52 = arith.constant dense<0.000000e+00> : vector<16x128xf32>
    %76 = tpu.matmul %74, %75, %cst_52 {dimension_numbers = #tpu.dot_dimension_numbers<[1], [0], [0], [1], [0, 0, 1, 1], [], []>} : vector<16x128xbf16>, vector<128x128xbf16>, vector<16x128xf32> -> vector<16x128xf32>
    %c0_53 = arith.constant 0 : index
    %c0_54 = arith.constant 0 : index
    %77 = vector.load %arg17[%c0_53, %c0_54] : memref<1x128xf32, #tpu.memory_space<vmem>>, vector<1x128xf32>
    %78 = vector.broadcast %77 : vector<1x128xf32> to vector<16x128xf32>
    %79 = arith.addf %76, %78 : vector<16x128xf32>
    %cst_55 = arith.constant 0.000000e+00 : f32
    %80 = vector.broadcast %cst_55 : f32 to vector<16x128xf32>
    %81 = arith.cmpf ogt, %79, %80 : vector<16x128xf32>
    %cst_56 = arith.constant 0.00999999977 : f32
    %82 = vector.broadcast %cst_56 : f32 to vector<16x128xf32>
    %83 = arith.mulf %82, %79 : vector<16x128xf32>
    %84 = arith.select %81, %79, %83 : vector<16x128xi1>, vector<16x128xf32>
    %85 = arith.mulf %84, %84 : vector<16x128xf32>
    %cst_57 = arith.constant dense<0.000000e+00> : vector<16xf32>
    %86 = vector.multi_reduction <add>, %85, %cst_57 [1] : vector<16x128xf32> to vector<16xf32>
    %87 = vector.shape_cast %86 : vector<16xf32> to vector<16x1xf32>
    %88 = math.sqrt %87 : vector<16x1xf32>
    %cst_58 = arith.constant 9.99999971E-10 : f32
    %89 = vector.broadcast %cst_58 : f32 to vector<16x1xf32>
    %90 = arith.addf %88, %89 : vector<16x1xf32>
    %91 = vector.broadcast %90 : vector<16x1xf32> to vector<16x128xf32>
    %92 = arith.divf %84, %91 : vector<16x128xf32>
    %93 = arith.truncf %92 : vector<16x128xf32> to vector<16x128xbf16>
    %c0_59 = arith.constant 0 : index
    %c0_60 = arith.constant 0 : index
    %94 = vector.load %arg18[%c0_59, %c0_60] : memref<128x128xbf16, #tpu.memory_space<vmem>>, vector<128x128xbf16>
    %cst_61 = arith.constant dense<0.000000e+00> : vector<16x128xf32>
    %95 = tpu.matmul %93, %94, %cst_61 {dimension_numbers = #tpu.dot_dimension_numbers<[1], [0], [0], [1], [0, 0, 1, 1], [], []>} : vector<16x128xbf16>, vector<128x128xbf16>, vector<16x128xf32> -> vector<16x128xf32>
    %c0_62 = arith.constant 0 : index
    %c0_63 = arith.constant 0 : index
    %96 = vector.load %arg19[%c0_62, %c0_63] : memref<1x128xf32, #tpu.memory_space<vmem>>, vector<1x128xf32>
    %97 = vector.broadcast %96 : vector<1x128xf32> to vector<16x128xf32>
    %98 = arith.addf %95, %97 : vector<16x128xf32>
    %c0_64 = arith.constant 0 : index
    %c0_65 = arith.constant 0 : index
    %99 = vector.load %arg25[%c0_64, %c0_65] : memref<16x128xf32, #tpu.memory_space<vmem>>, vector<16x128xf32>
    tpu.vector_store %arg25[%c0_64, %c0_65], %98 {strides = array<i32>} : memref<16x128xf32, #tpu.memory_space<vmem>>, vector<16x128xf32>,
    %100 = tpu.concatenate %92, %66, %29 in 1 : vector<16x128xf32>, vector<16x128xf32>, vector<16x128xf32> -> vector<16x384xf32>
    %101 = arith.mulf %100, %100 : vector<16x384xf32>
    %cst_66 = arith.constant dense<0.000000e+00> : vector<16xf32>
    %102 = vector.multi_reduction <add>, %101, %cst_66 [1] : vector<16x384xf32> to vector<16xf32>
    %103 = vector.shape_cast %102 : vector<16xf32> to vector<16x1xf32>
    %104 = math.sqrt %103 : vector<16x1xf32>
    %cst_67 = arith.constant 9.99999971E-10 : f32
    %105 = vector.broadcast %cst_67 : f32 to vector<16x1xf32>
    %106 = arith.addf %104, %105 : vector<16x1xf32>
    %107 = vector.broadcast %106 : vector<16x1xf32> to vector<16x384xf32>
    %108 = arith.divf %100, %107 : vector<16x384xf32>
    %109 = arith.truncf %108 : vector<16x384xf32> to vector<16x384xbf16>
    %c0_68 = arith.constant 0 : index
    %c0_69 = arith.constant 0 : index
    %110 = vector.load %arg20[%c0_68, %c0_69] : memref<384x128xbf16, #tpu.memory_space<vmem>>, vector<384x128xbf16>
    %cst_70 = arith.constant dense<0.000000e+00> : vector<16x128xf32>
    %111 = tpu.matmul %109, %110, %cst_70 {dimension_numbers = #tpu.dot_dimension_numbers<[1], [0], [0], [1], [0, 0, 1, 1], [], []>} : vector<16x384xbf16>, vector<384x128xbf16>, vector<16x128xf32> -> vector<16x128xf32>
    %c0_71 = arith.constant 0 : index
    %c0_72 = arith.constant 0 : index
    %112 = vector.load %arg21[%c0_71, %c0_72] : memref<1x128xf32, #tpu.memory_space<vmem>>, vector<1x128xf32>
    %113 = vector.broadcast %112 : vector<1x128xf32> to vector<16x128xf32>
    %114 = arith.addf %111, %113 : vector<16x128xf32>
    %c0_73 = arith.constant 0 : index
    %c0_74 = arith.constant 0 : index
    %115 = vector.load %arg22[%c0_73, %c0_74] : memref<16x128xf32, #tpu.memory_space<vmem>>, vector<16x128xf32>
    tpu.vector_store %arg22[%c0_73, %c0_74], %114 {strides = array<i32>} : memref<16x128xf32, #tpu.memory_space<vmem>>, vector<16x128xf32>,
    return
  }
  func.func @transform_0(%arg0: i32) -> (i32, i32) {
    %c0_i32 = arith.constant 0 : i32
    %c0_i32_0 = arith.constant 0 : i32
    return %arg0, %c0_i32 : i32, i32
  }
  func.func @transform_1(%arg0: i32) -> (i32, i32) {
    %c0_i32 = arith.constant 0 : i32
    %c0_i32_0 = arith.constant 0 : i32
    return %arg0, %c0_i32 : i32, i32
  }
  func.func @transform_2(%arg0: i32) -> (i32, i32) {
    %c0_i32 = arith.constant 0 : i32
    %c0_i32_0 = arith.constant 0 : i32
    return %arg0, %c0_i32 : i32, i32
  }
  func.func @transform_3(%arg0: i32) -> (i32, i32) {
    %c0_i32 = arith.constant 0 : i32
    %c0_i32_0 = arith.constant 0 : i32
    %c0_i32_1 = arith.constant 0 : i32
    return %c0_i32, %c0_i32_0 : i32, i32
  }
  func.func @transform_4(%arg0: i32) -> (i32, i32) {
    %c0_i32 = arith.constant 0 : i32
    %c0_i32_0 = arith.constant 0 : i32
    %c0_i32_1 = arith.constant 0 : i32
    return %c0_i32, %c0_i32_0 : i32, i32
  }
  func.func @transform_5(%arg0: i32) -> (i32, i32) {
    %c0_i32 = arith.constant 0 : i32
    %c0_i32_0 = arith.constant 0 : i32
    %c0_i32_1 = arith.constant 0 : i32
    return %c0_i32, %c0_i32_0 : i32, i32
  }
  func.func @transform_6(%arg0: i32) -> (i32, i32) {
    %c0_i32 = arith.constant 0 : i32
    %c0_i32_0 = arith.constant 0 : i32
    %c0_i32_1 = arith.constant 0 : i32
    return %c0_i32, %c0_i32_0 : i32, i32
  }
  func.func @transform_7(%arg0: i32) -> (i32, i32) {
    %c0_i32 = arith.constant 0 : i32
    %c0_i32_0 = arith.constant 0 : i32
    %c0_i32_1 = arith.constant 0 : i32
    return %c0_i32, %c0_i32_0 : i32, i32
  }
  func.func @transform_8(%arg0: i32) -> (i32, i32) {
    %c0_i32 = arith.constant 0 : i32
    %c0_i32_0 = arith.constant 0 : i32
    %c0_i32_1 = arith.constant 0 : i32
    return %c0_i32, %c0_i32_0 : i32, i32
  }
  func.func @transform_9(%arg0: i32) -> (i32, i32) {
    %c0_i32 = arith.constant 0 : i32
    %c0_i32_0 = arith.constant 0 : i32
    %c0_i32_1 = arith.constant 0 : i32
    return %c0_i32, %c0_i32_0 : i32, i32
  }
  func.func @transform_10(%arg0: i32) -> (i32, i32) {
    %c0_i32 = arith.constant 0 : i32
    %c0_i32_0 = arith.constant 0 : i32
    %c0_i32_1 = arith.constant 0 : i32
    return %c0_i32, %c0_i32_0 : i32, i32
  }
  func.func @transform_11(%arg0: i32) -> (i32, i32) {
    %c0_i32 = arith.constant 0 : i32
    %c0_i32_0 = arith.constant 0 : i32
    %c0_i32_1 = arith.constant 0 : i32
    return %c0_i32, %c0_i32_0 : i32, i32
  }
  func.func @transform_12(%arg0: i32) -> (i32, i32) {
    %c0_i32 = arith.constant 0 : i32
    %c0_i32_0 = arith.constant 0 : i32
    %c0_i32_1 = arith.constant 0 : i32
    return %c0_i32, %c0_i32_0 : i32, i32
  }
  func.func @transform_13(%arg0: i32) -> (i32, i32) {
    %c0_i32 = arith.constant 0 : i32
    %c0_i32_0 = arith.constant 0 : i32
    %c0_i32_1 = arith.constant 0 : i32
    return %c0_i32, %c0_i32_0 : i32, i32
  }
  func.func @transform_14(%arg0: i32) -> (i32, i32) {
    %c0_i32 = arith.constant 0 : i32
    %c0_i32_0 = arith.constant 0 : i32
    %c0_i32_1 = arith.constant 0 : i32
    return %c0_i32, %c0_i32_0 : i32, i32
  }
  func.func @transform_15(%arg0: i32) -> (i32, i32) {
    %c0_i32 = arith.constant 0 : i32
    %c0_i32_0 = arith.constant 0 : i32
    %c0_i32_1 = arith.constant 0 : i32
    return %c0_i32, %c0_i32_0 : i32, i32
  }
  func.func @transform_16(%arg0: i32) -> (i32, i32) {
    %c0_i32 = arith.constant 0 : i32
    %c0_i32_0 = arith.constant 0 : i32
    %c0_i32_1 = arith.constant 0 : i32
    return %c0_i32, %c0_i32_0 : i32, i32
  }
  func.func @transform_17(%arg0: i32) -> (i32, i32) {
    %c0_i32 = arith.constant 0 : i32
    %c0_i32_0 = arith.constant 0 : i32
    %c0_i32_1 = arith.constant 0 : i32
    return %c0_i32, %c0_i32_0 : i32, i32
  }
  func.func @transform_18(%arg0: i32) -> (i32, i32) {
    %c0_i32 = arith.constant 0 : i32
    %c0_i32_0 = arith.constant 0 : i32
    %c0_i32_1 = arith.constant 0 : i32
    return %c0_i32, %c0_i32_0 : i32, i32
  }
  func.func @transform_19(%arg0: i32) -> (i32, i32) {
    %c0_i32 = arith.constant 0 : i32
    %c0_i32_0 = arith.constant 0 : i32
    %c0_i32_1 = arith.constant 0 : i32
    return %c0_i32, %c0_i32_0 : i32, i32
  }
  func.func @transform_20(%arg0: i32) -> (i32, i32) {
    %c0_i32 = arith.constant 0 : i32
    %c0_i32_0 = arith.constant 0 : i32
    %c0_i32_1 = arith.constant 0 : i32
    return %c0_i32, %c0_i32_0 : i32, i32
  }
  func.func @transform_21(%arg0: i32) -> (i32, i32) {
    %c0_i32 = arith.constant 0 : i32
    %c0_i32_0 = arith.constant 0 : i32
    return %arg0, %c0_i32 : i32, i32
  }
  func.func @transform_22(%arg0: i32) -> (i32, i32) {
    %c0_i32 = arith.constant 0 : i32
    %c0_i32_0 = arith.constant 0 : i32
    return %arg0, %c0_i32 : i32, i32
  }
  func.func @transform_23(%arg0: i32) -> (i32, i32) {
    %c0_i32 = arith.constant 0 : i32
    %c0_i32_0 = arith.constant 0 : i32
    return %arg0, %c0_i32 : i32, i32
  }
  func.func @transform_24(%arg0: i32) -> (i32, i32) {
    %c0_i32 = arith.constant 0 : i32
    %c0_i32_0 = arith.constant 0 : i32
    return %arg0, %c0_i32 : i32, i32
  }
}

</mosaic_0001>

<llo_original>
// kernel: tpu_custom_call.1
$region0: #{tpu_custom_call.1}
  #allocation0 [shape = 'u32[]', space=smem, size = 0x4, offset = 0x4, fixed_abs, tag = 'smem constant byte address 0x4 - core index']
  #allocation1 [shape = 'u32[144,128]{1,0:T(1,128)}', space=vmem, size = 0x12000, scoped, tag = 'internal scratch']
  %s0 = inlined_call_operand.hbm [shape: bf16[16,1792], index: 0, kind: input, shape index: {}]
  %s1 = inlined_call_operand.hbm [shape: bf16[16,128], index: 1, kind: input, shape index: {}]
  %s2 = inlined_call_operand.hbm [shape: bf16[16,128], index: 2, kind: input, shape index: {}]
  %s3 = inlined_call_operand.hbm [shape: bf16[1792,128], index: 3, kind: input, shape index: {}]
  %s4 = inlined_call_operand.hbm [shape: f32[1,128], index: 4, kind: input, shape index: {}]
  %s5 = inlined_call_operand.hbm [shape: bf16[128,128], index: 5, kind: input, shape index: {}]
  %s6 = inlined_call_operand.hbm [shape: f32[1,128], index: 6, kind: input, shape index: {}]
  %s7 = inlined_call_operand.hbm [shape: bf16[128,128], index: 7, kind: input, shape index: {}]
  %s8 = inlined_call_operand.hbm [shape: f32[1,128], index: 8, kind: input, shape index: {}]
  %s9 = inlined_call_operand.hbm [shape: bf16[128,128], index: 9, kind: input, shape index: {}]
  %s10 = inlined_call_operand.hbm [shape: f32[1,128], index: 10, kind: input, shape index: {}]
  %s11 = inlined_call_operand.hbm [shape: bf16[128,128], index: 11, kind: input, shape index: {}]
  %s12 = inlined_call_operand.hbm [shape: f32[1,128], index: 12, kind: input, shape index: {}]
  %s13 = inlined_call_operand.hbm [shape: bf16[128,128], index: 13, kind: input, shape index: {}]
  %s14 = inlined_call_operand.hbm [shape: f32[1,128], index: 14, kind: input, shape index: {}]
  %s15 = inlined_call_operand.hbm [shape: bf16[128,128], index: 15, kind: input, shape index: {}]
  %s16 = inlined_call_operand.hbm [shape: f32[1,128], index: 16, kind: input, shape index: {}]
  %s17 = inlined_call_operand.vmem [shape: bf16[128,128], index: 17, kind: input, shape index: {}]
  %s18 = inlined_call_operand.vmem [shape: f32[1,128], index: 18, kind: input, shape index: {}]
  %s19 = inlined_call_operand.hbm [shape: bf16[384,128], index: 19, kind: input, shape index: {}]
  %s20 = inlined_call_operand.vmem [shape: f32[1,128], index: 20, kind: input, shape index: {}]
  %s21 = inlined_call_operand.hbm [shape: f32[16,128], index: 21, kind: output, shape index: {0}]
  %s22 = inlined_call_operand.hbm [shape: f32[16,128], index: 22, kind: output, shape index: {1}]
  %s23 = inlined_call_operand.hbm [shape: f32[16,128], index: 23, kind: output, shape index: {2}]
  %s24 = inlined_call_operand.hbm [shape: f32[16,128], index: 24, kind: output, shape index: {3}]
  %25 = xla_tuple %s21, %s22, %s23, %s24
  %s26 = sld [smem:[#allocation0]]
  $region190: #{tpu_custom_call.1} parent=0
    _
  %s28 = ssub.s32 1, %s26
  %s29 = scalar_select 0, %s28, %s26
  $region1: #{tpu_custom_call.1} parent=0
    #allocation2 [shape = 'u8[57344]{0}', space=vmem, size = 0xe000, scoped, tag = 'input window, operand 0, single buffered']
    #allocation3 [shape = 's32[1]{0}', space=sflag, size = 0x4, scoped, tag = 'scoped memory for tpu_custom_call.1']
    #allocation4 [shape = 's32[1]{0}', space=sflag, size = 0x4, scoped, tag = 'scoped memory for tpu_custom_call.1']
    #allocation5 [shape = 'u8[4096]{0}', space=vmem, size = 0x1000, scoped, tag = 'input window, operand 1, single buffered']
    #allocation6 [shape = 's32[1]{0}', space=sflag, size = 0x4, scoped, tag = 'scoped memory for tpu_custom_call.1']
    #allocation7 [shape = 'u8[4096]{0}', space=vmem, size = 0x1000, scoped, tag = 'input window, operand 2, single buffered']
    #allocation8 [shape = 'u8[458752]{0}', space=vmem, size = 0x70000, scoped, tag = 'input window, operand 3, single buffered']
    #allocation9 [shape = 's32[1]{0}', space=sflag, size = 0x4, scoped, tag = 'scoped memory for tpu_custom_call.1']
    #allocation10 [shape = 'u8[512]{0}', space=vmem, size = 0x400, scoped, tag = 'input window, operand 4, single buffered']
    #allocation11 [shape = 'u8[32768]{0}', space=vmem, size = 0x8000, scoped, tag = 'input window, operand 5, single buffered']
    #allocation12 [shape = 's32[1]{0}', space=sflag, size = 0x4, scoped, tag = 'scoped memory for tpu_custom_call.1']
    #allocation13 [shape = 'u8[512]{0}', space=vmem, size = 0x400, scoped, tag = 'input window, operand 6, single buffered']
    #allocation14 [shape = 'u8[32768]{0}', space=vmem, size = 0x8000, scoped, tag = 'input window, operand 7, single buffered']
    #allocation15 [shape = 's32[1]{0}', space=sflag, size = 0x4, scoped, tag = 'scoped memory for tpu_custom_call.1']
    #allocation16 [shape = 'u8[512]{0}', space=vmem, size = 0x400, scoped, tag = 'input window, operand 8, single buffered']
    #allocation17 [shape = 'u8[32768]{0}', space=vmem, size = 0x8000, scoped, tag = 'input window, operand 9, single buffered']
    #allocation18 [shape = 's32[1]{0}', space=sflag, size = 0x4, scoped, tag = 'scoped memory for tpu_custom_call.1']
    #allocation19 [shape = 'u8[512]{0}', space=vmem, size = 0x400, scoped, tag = 'input window, operand 10, single buffered']
    #allocation20 [shape = 'u8[32768]{0}', space=vmem, size = 0x8000, scoped, tag = 'input window, operand 11, single buffered']
    #allocation21 [shape = 's32[1]{0}', space=sflag, size = 0x4, scoped, tag = 'scoped memory for tpu_custom_call.1']
    #allocation22 [shape = 'u8[512]{0}', space=vmem, size = 0x400, scoped, tag = 'input window, operand 12, single buffered']
    #allocation23 [shape = 'u8[32768]{0}', space=vmem, size = 0x8000, scoped, tag = 'input window, operand 13, single buffered']
    #allocation24 [shape = 's32[1]{0}', space=sflag, size = 0x4, scoped, tag = 'scoped memory for tpu_custom_call.1']
    #allocation25 [shape = 'u8[512]{0}', space=vmem, size = 0x400, scoped, tag = 'input window, operand 14, single buffered']
    #allocation26 [shape = 'u8[32768]{0}', space=vmem, size = 0x8000, scoped, tag = 'input window, operand 15, single buffered']
    #allocation27 [shape = 's32[1]{0}', space=sflag, size = 0x4, scoped, tag = 'scoped memory for tpu_custom_call.1']
    #allocation28 [shape = 'u8[512]{0}', space=vmem, size = 0x400, scoped, tag = 'input window, operand 16, single buffered']
    #allocation29 [shape = 'u8[98304]{0}', space=vmem, size = 0x18000, scoped, tag = 'input window, operand 19, single buffered']
    #allocation30 [shape = 's32[1]{0}', space=sflag, size = 0x4, scoped, tag = 'scoped memory for tpu_custom_call.1']
    #allocation31 [shape = 'u8[8192]{0}', space=vmem, size = 0x2000, scoped, tag = 'output window, operand 0, single buffered']
    #allocation32 [shape = 'u8[8192]{0}', space=vmem, size = 0x2000, scoped, tag = 'output window, operand 1, single buffered']
    #allocation33 [shape = 's32[1]{0}', space=sflag, size = 0x4, scoped, tag = 'scoped memory for tpu_custom_call.1']
    #allocation34 [shape = 'u8[8192]{0}', space=vmem, size = 0x2000, scoped, tag = 'output window, operand 2, single buffered']
    #allocation35 [shape = 'u8[8192]{0}', space=vmem, size = 0x2000, scoped, tag = 'output window, operand 3, single buffered']
    #allocation36 [shape = 's32[1]{0}', space=sflag, size = 0x4, scoped, tag = 'scoped memory for tpu_custom_call.1']
    %30 = vsyncpa [#allocation3], 0
    %31 = vsyncpa [#allocation6], 0
    %32 = vsyncpa [#allocation9], 0
    %33 = vsyncpa [#allocation12], 0
    %34 = vsyncpa [#allocation15], 0
    %35 = vsyncpa [#allocation18], 0
    %36 = vsyncpa [#allocation21], 0
    %37 = vsyncpa [#allocation24], 0
    %38 = vsyncpa [#allocation27], 0
    %39 = vsyncpa [#allocation30], 0
    %40 = vsyncpa [#allocation4], 0
    %41 = vsyncpa [#allocation33], 0
    %42 = vsyncpa [#allocation36], 0
    // Predicated region
    $region2: #{tpu_custom_call.1} parent=1 // pred_check
      _
    $region3: #{tpu_custom_call.1} parent=1 // pred_check_branch
      %44 = sbr.rel (0) target = $region5
    $region4: #{tpu_custom_call.1} parent=1 // pred_region
      %s46 = ssub.s32 1792, 1792
      %47 = vsyncadd [#allocation3], %s46
      %s48 = sshll.u32 [#allocation2], 4
      %s49 = int_to_ptr.vmem [resolvable:$true] %s48
      %54 = dma.hbm_to_vmem [thread:$0]  %s0, 1792, %s49, [#allocation3], 896, 896, 56
    $region5: #{tpu_custom_call.1} parent=1 // pred_fallthru
      _
    // Predicated region
    $region6: #{tpu_custom_call.1} parent=1 // pred_check
      _
    $region7: #{tpu_custom_call.1} parent=1 // pred_check_branch
      %56 = sbr.rel (0) target = $region9
    $region8: #{tpu_custom_call.1} parent=1 // pred_region
      %s58 = ssub.s32 128, 128
      %59 = vsyncadd [#allocation6], %s58
      %s60 = sshll.u32 [#allocation5], 4
      %s61 = int_to_ptr.vmem [resolvable:$true] %s60
      %66 = dma.hbm_to_vmem [thread:$0]  %s1, 128, %s61, [#allocation6], 64, 64, 4
    $region9: #{tpu_custom_call.1} parent=1 // pred_fallthru
      _
    // Predicated region
    $region10: #{tpu_custom_call.1} parent=1 // pred_check
      _
    $region11: #{tpu_custom_call.1} parent=1 // pred_check_branch
      %68 = sbr.rel (0) target = $region13
    $region12: #{tpu_custom_call.1} parent=1 // pred_region
      %s70 = ssub.s32 128, 128
      %71 = vsyncadd [#allocation6], %s70
      %s72 = sshll.u32 [#allocation7], 4
      %s73 = int_to_ptr.vmem [resolvable:$true] %s72
      %78 = dma.hbm_to_vmem [thread:$0]  %s2, 128, %s73, [#allocation6], 64, 64, 4
    $region13: #{tpu_custom_call.1} parent=1 // pred_fallthru
      _
    // Predicated region
    $region14: #{tpu_custom_call.1} parent=1 // pred_check
      _
    $region15: #{tpu_custom_call.1} parent=1 // pred_check_branch
      %80 = sbr.rel (0) target = $region17
    $region16: #{tpu_custom_call.1} parent=1 // pred_region
      %s82 = ssub.s32 14336, 14336
      %83 = vsyncadd [#allocation9], %s82
      %s84 = sshll.u32 [#allocation8], 4
      %s85 = int_to_ptr.vmem [resolvable:$true] %s84
      %90 = dma.hbm_to_vmem [thread:$0]  %s3, 14336, %s85, [#allocation9], 64, 64, 4
    $region17: #{tpu_custom_call.1} parent=1 // pred_fallthru
      _
    // Predicated region
    $region18: #{tpu_custom_call.1} parent=1 // pred_check
      _
    $region19: #{tpu_custom_call.1} parent=1 // pred_check_branch
      %92 = sbr.rel (0) target = $region21
    $region20: #{tpu_custom_call.1} parent=1 // pred_region
      %s94 = ssub.s32 16, 16
      %95 = vsyncadd [#allocation9], %s94
      %s97 = sshll.u32 [#allocation10], 4
      %s98 = int_to_ptr.vmem [resolvable:$true] %s97
      %100 = dma.hbm_to_vmem [thread:$0]  %s4, 16, %s98, [#allocation9]
    $region21: #{tpu_custom_call.1} parent=1 // pred_fallthru
      _
    // Predicated region
    $region22: #{tpu_custom_call.1} parent=1 // pred_check
      _
    $region23: #{tpu_custom_call.1} parent=1 // pred_check_branch
      %102 = sbr.rel (0) target = $region25
    $region24: #{tpu_custom_call.1} parent=1 // pred_region
      %s104 = ssub.s32 1024, 1024
      %105 = vsyncadd [#allocation12], %s104
      %s106 = sshll.u32 [#allocation11], 4
      %s107 = int_to_ptr.vmem [resolvable:$true] %s106
      %112 = dma.hbm_to_vmem [thread:$0]  %s5, 1024, %s107, [#allocation12], 64, 64, 4
    $region25: #{tpu_custom_call.1} parent=1 // pred_fallthru
      _
    // Predicated region
    $region26: #{tpu_custom_call.1} parent=1 // pred_check
      _
    $region27: #{tpu_custom_call.1} parent=1 // pred_check_branch
      %114 = sbr.rel (0) target = $region29
    $region28: #{tpu_custom_call.1} parent=1 // pred_region
      %s116 = ssub.s32 16, 16
      %117 = vsyncadd [#allocation12], %s116
      %s119 = sshll.u32 [#allocation13], 4
      %s120 = int_to_ptr.vmem [resolvable:$true] %s119
      %122 = dma.hbm_to_vmem [thread:$0]  %s6, 16, %s120, [#allocation12]
    $region29: #{tpu_custom_call.1} parent=1 // pred_fallthru
      _
    // Predicated region
    $region30: #{tpu_custom_call.1} parent=1 // pred_check
      _
    $region31: #{tpu_custom_call.1} parent=1 // pred_check_branch
      %124 = sbr.rel (0) target = $region33
    $region32: #{tpu_custom_call.1} parent=1 // pred_region
      %s126 = ssub.s32 1024, 1024
      %127 = vsyncadd [#allocation15], %s126
      %s128 = sshll.u32 [#allocation14], 4
      %s129 = int_to_ptr.vmem [resolvable:$true] %s128
      %134 = dma.hbm_to_vmem [thread:$0]  %s7, 1024, %s129, [#allocation15], 64, 64, 4
    $region33: #{tpu_custom_call.1} parent=1 // pred_fallthru
      _
    // Predicated region
    $region34: #{tpu_custom_call.1} parent=1 // pred_check
      _
    $region35: #{tpu_custom_call.1} parent=1 // pred_check_branch
      %136 = sbr.rel (0) target = $region37
    $region36: #{tpu_custom_call.1} parent=1 // pred_region
      %s138 = ssub.s32 16, 16
      %139 = vsyncadd [#allocation15], %s138
      %s141 = sshll.u32 [#allocation16], 4
      %s142 = int_to_ptr.vmem [resolvable:$true] %s141
      %144 = dma.hbm_to_vmem [thread:$0]  %s8, 16, %s142, [#allocation15]
    $region37: #{tpu_custom_call.1} parent=1 // pred_fallthru
      _
    // Predicated region
    $region38: #{tpu_custom_call.1} parent=1 // pred_check
      _
    $region39: #{tpu_custom_call.1} parent=1 // pred_check_branch
      %146 = sbr.rel (0) target = $region41
    $region40: #{tpu_custom_call.1} parent=1 // pred_region
      %s148 = ssub.s32 1024, 1024
      %149 = vsyncadd [#allocation18], %s148
      %s150 = sshll.u32 [#allocation17], 4
      %s151 = int_to_ptr.vmem [resolvable:$true] %s150
      %156 = dma.hbm_to_vmem [thread:$0]  %s9, 1024, %s151, [#allocation18], 64, 64, 4
    $region41: #{tpu_custom_call.1} parent=1 // pred_fallthru
      _
    // Predicated region
    $region42: #{tpu_custom_call.1} parent=1 // pred_check
      _
    $region43: #{tpu_custom_call.1} parent=1 // pred_check_branch
      %158 = sbr.rel (0) target = $region45
    $region44: #{tpu_custom_call.1} parent=1 // pred_region
      %s160 = ssub.s32 16, 16
      %161 = vsyncadd [#allocation18], %s160
      %s163 = sshll.u32 [#allocation19], 4
      %s164 = int_to_ptr.vmem [resolvable:$true] %s163
      %166 = dma.hbm_to_vmem [thread:$0]  %s10, 16, %s164, [#allocation18]
    $region45: #{tpu_custom_call.1} parent=1 // pred_fallthru
      _
    // Predicated region
    $region46: #{tpu_custom_call.1} parent=1 // pred_check
      _
    $region47: #{tpu_custom_call.1} parent=1 // pred_check_branch
      %168 = sbr.rel (0) target = $region49
    $region48: #{tpu_custom_call.1} parent=1 // pred_region
      %s170 = ssub.s32 1024, 1024
      %171 = vsyncadd [#allocation21], %s170
      %s172 = sshll.u32 [#allocation20], 4
      %s173 = int_to_ptr.vmem [resolvable:$true] %s172
      %178 = dma.hbm_to_vmem [thread:$0]  %s11, 1024, %s173, [#allocation21], 64, 64, 4
    $region49: #{tpu_custom_call.1} parent=1 // pred_fallthru
      _
    // Predicated region
    $region50: #{tpu_custom_call.1} parent=1 // pred_check
      _
    $region51: #{tpu_custom_call.1} parent=1 // pred_check_branch
      %180 = sbr.rel (0) target = $region53
    $region52: #{tpu_custom_call.1} parent=1 // pred_region
      %s182 = ssub.s32 16, 16
      %183 = vsyncadd [#allocation21], %s182
      %s185 = sshll.u32 [#allocation22], 4
      %s186 = int_to_ptr.vmem [resolvable:$true] %s185
      %188 = dma.hbm_to_vmem [thread:$0]  %s12, 16, %s186, [#allocation21]
    $region53: #{tpu_custom_call.1} parent=1 // pred_fallthru
      _
    // Predicated region
    $region54: #{tpu_custom_call.1} parent=1 // pred_check
      _
    $region55: #{tpu_custom_call.1} parent=1 // pred_check_branch
      %190 = sbr.rel (0) target = $region57
    $region56: #{tpu_custom_call.1} parent=1 // pred_region
      %s192 = ssub.s32 1024, 1024
      %193 = vsyncadd [#allocation24], %s192
      %s194 = sshll.u32 [#allocation23], 4
      %s195 = int_to_ptr.vmem [resolvable:$true] %s194
      %200 = dma.hbm_to_vmem [thread:$0]  %s13, 1024, %s195, [#allocation24], 64, 64, 4
    $region57: #{tpu_custom_call.1} parent=1 // pred_fallthru
      _
    // Predicated region
    $region58: #{tpu_custom_call.1} parent=1 // pred_check
      _
    $region59: #{tpu_custom_call.1} parent=1 // pred_check_branch
      %202 = sbr.rel (0) target = $region61
    $region60: #{tpu_custom_call.1} parent=1 // pred_region
      %s204 = ssub.s32 16, 16
      %205 = vsyncadd [#allocation24], %s204
      %s207 = sshll.u32 [#allocation25], 4
      %s208 = int_to_ptr.vmem [resolvable:$true] %s207
      %210 = dma.hbm_to_vmem [thread:$0]  %s14, 16, %s208, [#allocation24]
    $region61: #{tpu_custom_call.1} parent=1 // pred_fallthru
      _
    // Predicated region
    $region62: #{tpu_custom_call.1} parent=1 // pred_check
      _
    $region63: #{tpu_custom_call.1} parent=1 // pred_check_branch
      %212 = sbr.rel (0) target = $region65
    $region64: #{tpu_custom_call.1} parent=1 // pred_region
      %s214 = ssub.s32 1024, 1024
      %215 = vsyncadd [#allocation27], %s214
      %s216 = sshll.u32 [#allocation26], 4
      %s217 = int_to_ptr.vmem [resolvable:$true] %s216
      %222 = dma.hbm_to_vmem [thread:$0]  %s15, 1024, %s217, [#allocation27], 64, 64, 4
    $region65: #{tpu_custom_call.1} parent=1 // pred_fallthru
      _
    // Predicated region
    $region66: #{tpu_custom_call.1} parent=1 // pred_check
      _
    $region67: #{tpu_custom_call.1} parent=1 // pred_check_branch
      %224 = sbr.rel (0) target = $region69
    $region68: #{tpu_custom_call.1} parent=1 // pred_region
      %s226 = ssub.s32 16, 16
      %227 = vsyncadd [#allocation27], %s226
      %s229 = sshll.u32 [#allocation28], 4
      %s230 = int_to_ptr.vmem [resolvable:$true] %s229
      %232 = dma.hbm_to_vmem [thread:$0]  %s16, 16, %s230, [#allocation27]
    $region69: #{tpu_custom_call.1} parent=1 // pred_fallthru
      _
    // Predicated region
    $region70: #{tpu_custom_call.1} parent=1 // pred_check
      _
    $region71: #{tpu_custom_call.1} parent=1 // pred_check_branch
      %234 = sbr.rel (0) target = $region73
    $region72: #{tpu_custom_call.1} parent=1 // pred_region
      _
    $region73: #{tpu_custom_call.1} parent=1 // pred_fallthru
      _
    // Predicated region
    $region74: #{tpu_custom_call.1} parent=1 // pred_check
      _
    $region75: #{tpu_custom_call.1} parent=1 // pred_check_branch
      %236 = sbr.rel (0) target = $region77
    $region76: #{tpu_custom_call.1} parent=1 // pred_region
      _
    $region77: #{tpu_custom_call.1} parent=1 // pred_fallthru
      _
    // Predicated region
    $region78: #{tpu_custom_call.1} parent=1 // pred_check
      _
    $region79: #{tpu_custom_call.1} parent=1 // pred_check_branch
      %238 = sbr.rel (0) target = $region81
    $region80: #{tpu_custom_call.1} parent=1 // pred_region
      %s240 = ssub.s32 3072, 3072
      %241 = vsyncadd [#allocation30], %s240
      %s242 = sshll.u32 [#allocation29], 4
      %s243 = int_to_ptr.vmem [resolvable:$true] %s242
      %248 = dma.hbm_to_vmem [thread:$0]  %s19, 3072, %s243, [#allocation30], 64, 64, 4
    $region81: #{tpu_custom_call.1} parent=1 // pred_fallthru
      _
    // Predicated region
    $region82: #{tpu_custom_call.1} parent=1 // pred_check
      _
    $region83: #{tpu_custom_call.1} parent=1 // pred_check_branch
      %250 = sbr.rel (0) target = $region85
    $region84: #{tpu_custom_call.1} parent=1 // pred_region
      _
    $region85: #{tpu_custom_call.1} parent=1 // pred_fallthru
      _
    // Predicated region
    $region86: #{tpu_custom_call.1} parent=1 // pred_check
      _
    $region87: #{tpu_custom_call.1} parent=1 // pred_check_branch
      %252 = sbr.rel (0) target = $region89
    $region88: #{tpu_custom_call.1} parent=1 // pred_region
      %253 = dma.done [#allocation3], 1792
    $region89: #{tpu_custom_call.1} parent=1 // pred_fallthru
      _
    // Predicated region
    $region90: #{tpu_custom_call.1} parent=1 // pred_check
      _
    $region91: #{tpu_custom_call.1} parent=1 // pred_check_branch
      %255 = sbr.rel (0) target = $region93
    $region92: #{tpu_custom_call.1} parent=1 // pred_region
      %256 = dma.done [#allocation6], 128
    $region93: #{tpu_custom_call.1} parent=1 // pred_fallthru
      _
    // Predicated region
    $region94: #{tpu_custom_call.1} parent=1 // pred_check
      _
    $region95: #{tpu_custom_call.1} parent=1 // pred_check_branch
      %258 = sbr.rel (0) target = $region97
    $region96: #{tpu_custom_call.1} parent=1 // pred_region
      %259 = dma.done [#allocation6], 128
    $region97: #{tpu_custom_call.1} parent=1 // pred_fallthru
      _
    // Predicated region
    $region98: #{tpu_custom_call.1} parent=1 // pred_check
      _
    $region99: #{tpu_custom_call.1} parent=1 // pred_check_branch
      %261 = sbr.rel (0) target = $region101
    $region100: #{tpu_custom_call.1} parent=1 // pred_region
      %262 = dma.done [#allocation9], 14336
    $region101: #{tpu_custom_call.1} parent=1 // pred_fallthru
      _
    // Predicated region
    $region102: #{tpu_custom_call.1} parent=1 // pred_check
      _
    $region103: #{tpu_custom_call.1} parent=1 // pred_check_branch
      %264 = sbr.rel (0) target = $region105
    $region104: #{tpu_custom_call.1} parent=1 // pred_region
      %265 = dma.done [#allocation9], 16
    $region105: #{tpu_custom_call.1} parent=1 // pred_fallthru
      _
    // Predicated region
    $region106: #{tpu_custom_call.1} parent=1 // pred_check
      _
    $region107: #{tpu_custom_call.1} parent=1 // pred_check_branch
      %267 = sbr.rel (0) target = $region109
    $region108: #{tpu_custom_call.1} parent=1 // pred_region
      %268 = dma.done [#allocation12], 1024
    $region109: #{tpu_custom_call.1} parent=1 // pred_fallthru
      _
    // Predicated region
    $region110: #{tpu_custom_call.1} parent=1 // pred_check
      _
    $region111: #{tpu_custom_call.1} parent=1 // pred_check_branch
      %270 = sbr.rel (0) target = $region113
    $region112: #{tpu_custom_call.1} parent=1 // pred_region
      %271 = dma.done [#allocation12], 16
    $region113: #{tpu_custom_call.1} parent=1 // pred_fallthru
      _
    // Predicated region
    $region114: #{tpu_custom_call.1} parent=1 // pred_check
      _
    $region115: #{tpu_custom_call.1} parent=1 // pred_check_branch
      %273 = sbr.rel (0) target = $region117
    $region116: #{tpu_custom_call.1} parent=1 // pred_region
      %274 = dma.done [#allocation15], 1024
    $region117: #{tpu_custom_call.1} parent=1 // pred_fallthru
      _
    // Predicated region
    $region118: #{tpu_custom_call.1} parent=1 // pred_check
      _
    $region119: #{tpu_custom_call.1} parent=1 // pred_check_branch
      %276 = sbr.rel (0) target = $region121
    $region120: #{tpu_custom_call.1} parent=1 // pred_region
      %277 = dma.done [#allocation15], 16
    $region121: #{tpu_custom_call.1} parent=1 // pred_fallthru
      _
    // Predicated region
    $region122: #{tpu_custom_call.1} parent=1 // pred_check
      _
    $region123: #{tpu_custom_call.1} parent=1 // pred_check_branch
      %279 = sbr.rel (0) target = $region125
    $region124: #{tpu_custom_call.1} parent=1 // pred_region
      %280 = dma.done [#allocation18], 1024
    $region125: #{tpu_custom_call.1} parent=1 // pred_fallthru
      _
    // Predicated region
    $region126: #{tpu_custom_call.1} parent=1 // pred_check
      _
    $region127: #{tpu_custom_call.1} parent=1 // pred_check_branch
      %282 = sbr.rel (0) target = $region129
    $region128: #{tpu_custom_call.1} parent=1 // pred_region
      %283 = dma.done [#allocation18], 16
    $region129: #{tpu_custom_call.1} parent=1 // pred_fallthru
      _
    // Predicated region
    $region130: #{tpu_custom_call.1} parent=1 // pred_check
      _
    $region131: #{tpu_custom_call.1} parent=1 // pred_check_branch
      %285 = sbr.rel (0) target = $region133
    $region132: #{tpu_custom_call.1} parent=1 // pred_region
      %286 = dma.done [#allocation21], 1024
    $region133: #{tpu_custom_call.1} parent=1 // pred_fallthru
      _
    // Predicated region
    $region134: #{tpu_custom_call.1} parent=1 // pred_check
      _
    $region135: #{tpu_custom_call.1} parent=1 // pred_check_branch
      %288 = sbr.rel (0) target = $region137
    $region136: #{tpu_custom_call.1} parent=1 // pred_region
      %289 = dma.done [#allocation21], 16
    $region137: #{tpu_custom_call.1} parent=1 // pred_fallthru
      _
    // Predicated region
    $region138: #{tpu_custom_call.1} parent=1 // pred_check
      _
    $region139: #{tpu_custom_call.1} parent=1 // pred_check_branch
      %291 = sbr.rel (0) target = $region141
    $region140: #{tpu_custom_call.1} parent=1 // pred_region
      %292 = dma.done [#allocation24], 1024
    $region141: #{tpu_custom_call.1} parent=1 // pred_fallthru
      _
    // Predicated region
    $region142: #{tpu_custom_call.1} parent=1 // pred_check
      _
    $region143: #{tpu_custom_call.1} parent=1 // pred_check_branch
      %294 = sbr.rel (0) target = $region145
    $region144: #{tpu_custom_call.1} parent=1 // pred_region
      %295 = dma.done [#allocation24], 16
    $region145: #{tpu_custom_call.1} parent=1 // pred_fallthru
      _
    // Predicated region
    $region146: #{tpu_custom_call.1} parent=1 // pred_check
      _
    $region147: #{tpu_custom_call.1} parent=1 // pred_check_branch
      %297 = sbr.rel (0) target = $region149
    $region148: #{tpu_custom_call.1} parent=1 // pred_region
      %298 = dma.done [#allocation27], 1024
    $region149: #{tpu_custom_call.1} parent=1 // pred_fallthru
      _
    // Predicated region
    $region150: #{tpu_custom_call.1} parent=1 // pred_check
      _
    $region151: #{tpu_custom_call.1} parent=1 // pred_check_branch
      %300 = sbr.rel (0) target = $region153
    $region152: #{tpu_custom_call.1} parent=1 // pred_region
      %301 = dma.done [#allocation27], 16
    $region153: #{tpu_custom_call.1} parent=1 // pred_fallthru
      _
    // Predicated region
    $region154: #{tpu_custom_call.1} parent=1 // pred_check
      _
    $region155: #{tpu_custom_call.1} parent=1 // pred_check_branch
      %303 = sbr.rel (0) target = $region157
    $region156: #{tpu_custom_call.1} parent=1 // pred_region
      %304 = dma.done [#allocation30], 3072
    $region157: #{tpu_custom_call.1} parent=1 // pred_fallthru
      _
    %v306 = vld [vmem:[#allocation2] sm:$0xff]
    %v307 = vld [vmem:[#allocation2 + $0x8] sm:$0xff]
    %v308 = vld [vmem:[#allocation2 + $0x10] sm:$0xff]
    %v309 = vld [vmem:[#allocation2 + $0x18] sm:$0xff]
    %v310 = vld [vmem:[#allocation2 + $0x20] sm:$0xff]
    %v311 = vld [vmem:[#allocation2 + $0x28] sm:$0xff]
    %v312 = vld [vmem:[#allocation2 + $0x30] sm:$0xff]
    %v313 = vld [vmem:[#allocation2 + $0x38] sm:$0xff]
    %v314 = vld [vmem:[#allocation2 + $0x40] sm:$0xff]
    %v315 = vld [vmem:[#allocation2 + $0x48] sm:$0xff]
    %v316 = vld [vmem:[#allocation2 + $0x50] sm:$0xff]
    %v317 = vld [vmem:[#allocation2 + $0x58] sm:$0xff]
    %v318 = vld [vmem:[#allocation2 + $0x60] sm:$0xff]
    %v319 = vld [vmem:[#allocation2 + $0x68] sm:$0xff]
    %v320 = vld [vmem:[#allocation8] sm:$0xf]
    %v321 = vld [vmem:[#allocation8 + $0x4] sm:$0xf]
    %v322 = vld [vmem:[#allocation8 + $0x8] sm:$0xf]
    %v323 = vld [vmem:[#allocation8 + $0xc] sm:$0xf]
    %v324 = vld [vmem:[#allocation8 + $0x10] sm:$0xf]
    %v325 = vld [vmem:[#allocation8 + $0x14] sm:$0xf]
    %v326 = vld [vmem:[#allocation8 + $0x18] sm:$0xf]
    %v327 = vld [vmem:[#allocation8 + $0x1c] sm:$0xf]
    %v328 = vld [vmem:[#allocation8 + $0x20] sm:$0xf]
    %v329 = vld [vmem:[#allocation8 + $0x24] sm:$0xf]
    %v330 = vld [vmem:[#allocation8 + $0x28] sm:$0xf]
    %v331 = vld [vmem:[#allocation8 + $0x2c] sm:$0xf]
    %v332 = vld [vmem:[#allocation8 + $0x30] sm:$0xf]
    %v333 = vld [vmem:[#allocation8 + $0x34] sm:$0xf]
    %v334 = vld [vmem:[#allocation8 + $0x38] sm:$0xf]
    %v335 = vld [vmem:[#allocation8 + $0x3c] sm:$0xf]
    %v336 = vld [vmem:[#allocation8 + $0x40] sm:$0xf]
    %v337 = vld [vmem:[#allocation8 + $0x44] sm:$0xf]
    %v338 = vld [vmem:[#allocation8 + $0x48] sm:$0xf]
    %v339 = vld [vmem:[#allocation8 + $0x4c] sm:$0xf]
    %v340 = vld [vmem:[#allocation8 + $0x50] sm:$0xf]
    %v341 = vld [vmem:[#allocation8 + $0x54] sm:$0xf]
    %v342 = vld [vmem:[#allocation8 + $0x58] sm:$0xf]
    %v343 = vld [vmem:[#allocation8 + $0x5c] sm:$0xf]
    %v344 = vld [vmem:[#allocation8 + $0x60] sm:$0xf]
    %v345 = vld [vmem:[#allocation8 + $0x64] sm:$0xf]
    %v346 = vld [vmem:[#allocation8 + $0x68] sm:$0xf]
    %v347 = vld [vmem:[#allocation8 + $0x6c] sm:$0xf]
    %v348 = vld [vmem:[#allocation8 + $0x70] sm:$0xf]
    %v349 = vld [vmem:[#allocation8 + $0x74] sm:$0xf]
    %v350 = vld [vmem:[#allocation8 + $0x78] sm:$0xf]
    %v351 = vld [vmem:[#allocation8 + $0x7c] sm:$0xf]
    %v352 = vld [vmem:[#allocation8 + $0x80] sm:$0xf]
    %v353 = vld [vmem:[#allocation8 + $0x84] sm:$0xf]
    %v354 = vld [vmem:[#allocation8 + $0x88] sm:$0xf]
    %v355 = vld [vmem:[#allocation8 + $0x8c] sm:$0xf]
    %v356 = vld [vmem:[#allocation8 + $0x90] sm:$0xf]
    %v357 = vld [vmem:[#allocation8 + $0x94] sm:$0xf]
    %v358 = vld [vmem:[#allocation8 + $0x98] sm:$0xf]
    %v359 = vld [vmem:[#allocation8 + $0x9c] sm:$0xf]
    %v360 = vld [vmem:[#allocation8 + $0xa0] sm:$0xf]
    %v361 = vld [vmem:[#allocation8 + $0xa4] sm:$0xf]
    %v362 = vld [vmem:[#allocation8 + $0xa8] sm:$0xf]
    %v363 = vld [vmem:[#allocation8 + $0xac] sm:$0xf]
    %v364 = vld [vmem:[#allocation8 + $0xb0] sm:$0xf]
    %v365 = vld [vmem:[#allocation8 + $0xb4] sm:$0xf]
    %v366 = vld [vmem:[#allocation8 + $0xb8] sm:$0xf]
    %v367 = vld [vmem:[#allocation8 + $0xbc] sm:$0xf]
    %v368 = vld [vmem:[#allocation8 + $0xc0] sm:$0xf]
    %v369 = vld [vmem:[#allocation8 + $0xc4] sm:$0xf]
    %v370 = vld [vmem:[#allocation8 + $0xc8] sm:$0xf]
    %v371 = vld [vmem:[#allocation8 + $0xcc] sm:$0xf]
    %v372 = vld [vmem:[#allocation8 + $0xd0] sm:$0xf]
    %v373 = vld [vmem:[#allocation8 + $0xd4] sm:$0xf]
    %v374 = vld [vmem:[#allocation8 + $0xd8] sm:$0xf]
    %v375 = vld [vmem:[#allocation8 + $0xdc] sm:$0xf]
    %v376 = vld [vmem:[#allocation8 + $0xe0] sm:$0xf]
    %v377 = vld [vmem:[#allocation8 + $0xe4] sm:$0xf]
    %v378 = vld [vmem:[#allocation8 + $0xe8] sm:$0xf]
    %v379 = vld [vmem:[#allocation8 + $0xec] sm:$0xf]
    %v380 = vld [vmem:[#allocation8 + $0xf0] sm:$0xf]
    %v381 = vld [vmem:[#allocation8 + $0xf4] sm:$0xf]
    %v382 = vld [vmem:[#allocation8 + $0xf8] sm:$0xf]
    %v383 = vld [vmem:[#allocation8 + $0xfc] sm:$0xf]
    %v384 = vld [vmem:[#allocation8 + $0x100] sm:$0xf]
    %v385 = vld [vmem:[#allocation8 + $0x104] sm:$0xf]
    %v386 = vld [vmem:[#allocation8 + $0x108] sm:$0xf]
    %v387 = vld [vmem:[#allocation8 + $0x10c] sm:$0xf]
    %v388 = vld [vmem:[#allocation8 + $0x110] sm:$0xf]
    %v389 = vld [vmem:[#allocation8 + $0x114] sm:$0xf]
    %v390 = vld [vmem:[#allocation8 + $0x118] sm:$0xf]
    %v391 = vld [vmem:[#allocation8 + $0x11c] sm:$0xf]
    %v392 = vld [vmem:[#allocation8 + $0x120] sm:$0xf]
    %v393 = vld [vmem:[#allocation8 + $0x124] sm:$0xf]
    %v394 = vld [vmem:[#allocation8 + $0x128] sm:$0xf]
    %v395 = vld [vmem:[#allocation8 + $0x12c] sm:$0xf]
    %v396 = vld [vmem:[#allocation8 + $0x130] sm:$0xf]
    %v397 = vld [vmem:[#allocation8 + $0x134] sm:$0xf]
    %v398 = vld [vmem:[#allocation8 + $0x138] sm:$0xf]
    %v399 = vld [vmem:[#allocation8 + $0x13c] sm:$0xf]
    %v400 = vld [vmem:[#allocation8 + $0x140] sm:$0xf]
    %v401 = vld [vmem:[#allocation8 + $0x144] sm:$0xf]
    %v402 = vld [vmem:[#allocation8 + $0x148] sm:$0xf]
    %v403 = vld [vmem:[#allocation8 + $0x14c] sm:$0xf]
    %v404 = vld [vmem:[#allocation8 + $0x150] sm:$0xf]
    %v405 = vld [vmem:[#allocation8 + $0x154] sm:$0xf]
    %v406 = vld [vmem:[#allocation8 + $0x158] sm:$0xf]
    %v407 = vld [vmem:[#allocation8 + $0x15c] sm:$0xf]
    %v408 = vld [vmem:[#allocation8 + $0x160] sm:$0xf]
    %v409 = vld [vmem:[#allocation8 + $0x164] sm:$0xf]
    %v410 = vld [vmem:[#allocation8 + $0x168] sm:$0xf]
    %v411 = vld [vmem:[#allocation8 + $0x16c] sm:$0xf]
    %v412 = vld [vmem:[#allocation8 + $0x170] sm:$0xf]
    %v413 = vld [vmem:[#allocation8 + $0x174] sm:$0xf]
    %v414 = vld [vmem:[#allocation8 + $0x178] sm:$0xf]
    %v415 = vld [vmem:[#allocation8 + $0x17c] sm:$0xf]
    %v416 = vld [vmem:[#allocation8 + $0x180] sm:$0xf]
    %v417 = vld [vmem:[#allocation8 + $0x184] sm:$0xf]
    %v418 = vld [vmem:[#allocation8 + $0x188] sm:$0xf]
    %v419 = vld [vmem:[#allocation8 + $0x18c] sm:$0xf]
    %v420 = vld [vmem:[#allocation8 + $0x190] sm:$0xf]
    %v421 = vld [vmem:[#allocation8 + $0x194] sm:$0xf]
    %v422 = vld [vmem:[#allocation8 + $0x198] sm:$0xf]
    %v423 = vld [vmem:[#allocation8 + $0x19c] sm:$0xf]
    %v424 = vld [vmem:[#allocation8 + $0x1a0] sm:$0xf]
    %v425 = vld [vmem:[#allocation8 + $0x1a4] sm:$0xf]
    %v426 = vld [vmem:[#allocation8 + $0x1a8] sm:$0xf]
    %v427 = vld [vmem:[#allocation8 + $0x1ac] sm:$0xf]
    %v428 = vld [vmem:[#allocation8 + $0x1b0] sm:$0xf]
    %v429 = vld [vmem:[#allocation8 + $0x1b4] sm:$0xf]
    %v430 = vld [vmem:[#allocation8 + $0x1b8] sm:$0xf]
    %v431 = vld [vmem:[#allocation8 + $0x1bc] sm:$0xf]
    %v432 = vld [vmem:[#allocation8 + $0x1c0] sm:$0xf]
    %v433 = vld [vmem:[#allocation8 + $0x1c4] sm:$0xf]
    %v434 = vld [vmem:[#allocation8 + $0x1c8] sm:$0xf]
    %v435 = vld [vmem:[#allocation8 + $0x1cc] sm:$0xf]
    %v436 = vld [vmem:[#allocation8 + $0x1d0] sm:$0xf]
    %v437 = vld [vmem:[#allocation8 + $0x1d4] sm:$0xf]
    %v438 = vld [vmem:[#allocation8 + $0x1d8] sm:$0xf]
    %v439 = vld [vmem:[#allocation8 + $0x1dc] sm:$0xf]
    %v440 = vld [vmem:[#allocation8 + $0x1e0] sm:$0xf]
    %v441 = vld [vmem:[#allocation8 + $0x1e4] sm:$0xf]
    %v442 = vld [vmem:[#allocation8 + $0x1e8] sm:$0xf]
    %v443 = vld [vmem:[#allocation8 + $0x1ec] sm:$0xf]
    %v444 = vld [vmem:[#allocation8 + $0x1f0] sm:$0xf]
    %v445 = vld [vmem:[#allocation8 + $0x1f4] sm:$0xf]
    %v446 = vld [vmem:[#allocation8 + $0x1f8] sm:$0xf]
    %v447 = vld [vmem:[#allocation8 + $0x1fc] sm:$0xf]
    %v448 = vld [vmem:[#allocation8 + $0x200] sm:$0xf]
    %v449 = vld [vmem:[#allocation8 + $0x204] sm:$0xf]
    %v450 = vld [vmem:[#allocation8 + $0x208] sm:$0xf]
    %v451 = vld [vmem:[#allocation8 + $0x20c] sm:$0xf]
    %v452 = vld [vmem:[#allocation8 + $0x210] sm:$0xf]
    %v453 = vld [vmem:[#allocation8 + $0x214] sm:$0xf]
    %v454 = vld [vmem:[#allocation8 + $0x218] sm:$0xf]
    %v455 = vld [vmem:[#allocation8 + $0x21c] sm:$0xf]
    %v456 = vld [vmem:[#allocation8 + $0x220] sm:$0xf]
    %v457 = vld [vmem:[#allocation8 + $0x224] sm:$0xf]
    %v458 = vld [vmem:[#allocation8 + $0x228] sm:$0xf]
    %v459 = vld [vmem:[#allocation8 + $0x22c] sm:$0xf]
    %v460 = vld [vmem:[#allocation8 + $0x230] sm:$0xf]
    %v461 = vld [vmem:[#allocation8 + $0x234] sm:$0xf]
    %v462 = vld [vmem:[#allocation8 + $0x238] sm:$0xf]
    %v463 = vld [vmem:[#allocation8 + $0x23c] sm:$0xf]
    %v464 = vld [vmem:[#allocation8 + $0x240] sm:$0xf]
    %v465 = vld [vmem:[#allocation8 + $0x244] sm:$0xf]
    %v466 = vld [vmem:[#allocation8 + $0x248] sm:$0xf]
    %v467 = vld [vmem:[#allocation8 + $0x24c] sm:$0xf]
    %v468 = vld [vmem:[#allocation8 + $0x250] sm:$0xf]
    %v469 = vld [vmem:[#allocation8 + $0x254] sm:$0xf]
    %v470 = vld [vmem:[#allocation8 + $0x258] sm:$0xf]
    %v471 = vld [vmem:[#allocation8 + $0x25c] sm:$0xf]
    %v472 = vld [vmem:[#allocation8 + $0x260] sm:$0xf]
    %v473 = vld [vmem:[#allocation8 + $0x264] sm:$0xf]
    %v474 = vld [vmem:[#allocation8 + $0x268] sm:$0xf]
    %v475 = vld [vmem:[#allocation8 + $0x26c] sm:$0xf]
    %v476 = vld [vmem:[#allocation8 + $0x270] sm:$0xf]
    %v477 = vld [vmem:[#allocation8 + $0x274] sm:$0xf]
    %v478 = vld [vmem:[#allocation8 + $0x278] sm:$0xf]
    %v479 = vld [vmem:[#allocation8 + $0x27c] sm:$0xf]
    %v480 = vld [vmem:[#allocation8 + $0x280] sm:$0xf]
    %v481 = vld [vmem:[#allocation8 + $0x284] sm:$0xf]
    %v482 = vld [vmem:[#allocation8 + $0x288] sm:$0xf]
    %v483 = vld [vmem:[#allocation8 + $0x28c] sm:$0xf]
    %v484 = vld [vmem:[#allocation8 + $0x290] sm:$0xf]
    %v485 = vld [vmem:[#allocation8 + $0x294] sm:$0xf]
    %v486 = vld [vmem:[#allocation8 + $0x298] sm:$0xf]
    %v487 = vld [vmem:[#allocation8 + $0x29c] sm:$0xf]
    %v488 = vld [vmem:[#allocation8 + $0x2a0] sm:$0xf]
    %v489 = vld [vmem:[#allocation8 + $0x2a4] sm:$0xf]
    %v490 = vld [vmem:[#allocation8 + $0x2a8] sm:$0xf]
    %v491 = vld [vmem:[#allocation8 + $0x2ac] sm:$0xf]
    %v492 = vld [vmem:[#allocation8 + $0x2b0] sm:$0xf]
    %v493 = vld [vmem:[#allocation8 + $0x2b4] sm:$0xf]
    %v494 = vld [vmem:[#allocation8 + $0x2b8] sm:$0xf]
    %v495 = vld [vmem:[#allocation8 + $0x2bc] sm:$0xf]
    %v496 = vld [vmem:[#allocation8 + $0x2c0] sm:$0xf]
    %v497 = vld [vmem:[#allocation8 + $0x2c4] sm:$0xf]
    %v498 = vld [vmem:[#allocation8 + $0x2c8] sm:$0xf]
    %v499 = vld [vmem:[#allocation8 + $0x2cc] sm:$0xf]
    %v500 = vld [vmem:[#allocation8 + $0x2d0] sm:$0xf]
    %v501 = vld [vmem:[#allocation8 + $0x2d4] sm:$0xf]
    %v502 = vld [vmem:[#allocation8 + $0x2d8] sm:$0xf]
    %v503 = vld [vmem:[#allocation8 + $0x2dc] sm:$0xf]
    %v504 = vld [vmem:[#allocation8 + $0x2e0] sm:$0xf]
    %v505 = vld [vmem:[#allocation8 + $0x2e4] sm:$0xf]
    %v506 = vld [vmem:[#allocation8 + $0x2e8] sm:$0xf]
    %v507 = vld [vmem:[#allocation8 + $0x2ec] sm:$0xf]
    %v508 = vld [vmem:[#allocation8 + $0x2f0] sm:$0xf]
    %v509 = vld [vmem:[#allocation8 + $0x2f4] sm:$0xf]
    %v510 = vld [vmem:[#allocation8 + $0x2f8] sm:$0xf]
    %v511 = vld [vmem:[#allocation8 + $0x2fc] sm:$0xf]
    %v512 = vld [vmem:[#allocation8 + $0x300] sm:$0xf]
    %v513 = vld [vmem:[#allocation8 + $0x304] sm:$0xf]
    %v514 = vld [vmem:[#allocation8 + $0x308] sm:$0xf]
    %v515 = vld [vmem:[#allocation8 + $0x30c] sm:$0xf]
    %v516 = vld [vmem:[#allocation8 + $0x310] sm:$0xf]
    %v517 = vld [vmem:[#allocation8 + $0x314] sm:$0xf]
    %v518 = vld [vmem:[#allocation8 + $0x318] sm:$0xf]
    %v519 = vld [vmem:[#allocation8 + $0x31c] sm:$0xf]
    %v520 = vld [vmem:[#allocation8 + $0x320] sm:$0xf]
    %v521 = vld [vmem:[#allocation8 + $0x324] sm:$0xf]
    %v522 = vld [vmem:[#allocation8 + $0x328] sm:$0xf]
    %v523 = vld [vmem:[#allocation8 + $0x32c] sm:$0xf]
    %v524 = vld [vmem:[#allocation8 + $0x330] sm:$0xf]
    %v525 = vld [vmem:[#allocation8 + $0x334] sm:$0xf]
    %v526 = vld [vmem:[#allocation8 + $0x338] sm:$0xf]
    %v527 = vld [vmem:[#allocation8 + $0x33c] sm:$0xf]
    %v528 = vld [vmem:[#allocation8 + $0x340] sm:$0xf]
    %v529 = vld [vmem:[#allocation8 + $0x344] sm:$0xf]
    %v530 = vld [vmem:[#allocation8 + $0x348] sm:$0xf]
    %v531 = vld [vmem:[#allocation8 + $0x34c] sm:$0xf]
    %v532 = vld [vmem:[#allocation8 + $0x350] sm:$0xf]
    %v533 = vld [vmem:[#allocation8 + $0x354] sm:$0xf]
    %v534 = vld [vmem:[#allocation8 + $0x358] sm:$0xf]
    %v535 = vld [vmem:[#allocation8 + $0x35c] sm:$0xf]
    %v536 = vld [vmem:[#allocation8 + $0x360] sm:$0xf]
    %v537 = vld [vmem:[#allocation8 + $0x364] sm:$0xf]
    %v538 = vld [vmem:[#allocation8 + $0x368] sm:$0xf]
    %v539 = vld [vmem:[#allocation8 + $0x36c] sm:$0xf]
    %v540 = vld [vmem:[#allocation8 + $0x370] sm:$0xf]
    %v541 = vld [vmem:[#allocation8 + $0x374] sm:$0xf]
    %v542 = vld [vmem:[#allocation8 + $0x378] sm:$0xf]
    %v543 = vld [vmem:[#allocation8 + $0x37c] sm:$0xf]
    %v544 = vld [vmem:[#allocation10] sm:$0x1]
    %v546 = vlaneseq
    %v547 = vshrl.u32 %v546, 7
    %v548 = vsub.s32 0, %v547
    %v549 = vrot.slane %v544, %v548
    %v565 = vunpack.c.l.b16 %v306
    %v566 = vunpack.c.h.b16 %v306
    %v567 = vunpack.c.l.b16 %v307
    %v568 = vunpack.c.h.b16 %v307
    %v569 = vunpack.c.l.b16 %v308
    %v570 = vunpack.c.h.b16 %v308
    %v571 = vunpack.c.l.b16 %v309
    %v572 = vunpack.c.h.b16 %v309
    %v573 = vunpack.c.l.b16 %v310
    %v574 = vunpack.c.h.b16 %v310
    %v575 = vunpack.c.l.b16 %v311
    %v576 = vunpack.c.h.b16 %v311
    %v577 = vunpack.c.l.b16 %v312
    %v578 = vunpack.c.h.b16 %v312
    %v579 = vunpack.c.l.b16 %v313
    %v580 = vunpack.c.h.b16 %v313
    %v581 = vunpack.c.l.b16 %v314
    %v582 = vunpack.c.h.b16 %v314
    %v583 = vunpack.c.l.b16 %v315
    %v584 = vunpack.c.h.b16 %v315
    %v585 = vunpack.c.l.b16 %v316
    %v586 = vunpack.c.h.b16 %v316
    %v587 = vunpack.c.l.b16 %v317
    %v588 = vunpack.c.h.b16 %v317
    %v589 = vunpack.c.l.b16 %v318
    %v590 = vunpack.c.h.b16 %v318
    %v591 = vunpack.c.l.b16 %v319
    %v592 = vunpack.c.h.b16 %v319
    %v593 = vpack.c.b16 %v579, %v565
    %v594 = vpack.c.b16 %v580, %v566
    %v595 = vpack.c.b16 %v581, %v567
    %v596 = vpack.c.b16 %v582, %v568
    %v597 = vpack.c.b16 %v583, %v569
    %v598 = vpack.c.b16 %v584, %v570
    %v599 = vpack.c.b16 %v585, %v571
    %v600 = vpack.c.b16 %v586, %v572
    %v601 = vpack.c.b16 %v587, %v573
    %v602 = vpack.c.b16 %v588, %v574
    %v603 = vpack.c.b16 %v589, %v575
    %v604 = vpack.c.b16 %v590, %v576
    %v605 = vpack.c.b16 %v591, %v577
    %v606 = vpack.c.b16 %v592, %v578
    %v845 = vunpack.c.l.b16 %v320
    %v846 = vunpack.c.l.b16 %v321
    %v847 = vunpack.c.l.b16 %v322
    %v848 = vunpack.c.l.b16 %v323
    %v849 = vunpack.c.l.b16 %v324
    %v850 = vunpack.c.l.b16 %v325
    %v851 = vunpack.c.l.b16 %v326
    %v852 = vunpack.c.l.b16 %v327
    %v853 = vunpack.c.l.b16 %v328
    %v854 = vunpack.c.l.b16 %v329
    %v855 = vunpack.c.l.b16 %v330
    %v856 = vunpack.c.l.b16 %v331
    %v857 = vunpack.c.l.b16 %v332
    %v858 = vunpack.c.l.b16 %v333
    %v859 = vunpack.c.l.b16 %v334
    %v860 = vunpack.c.l.b16 %v335
    %v861 = vunpack.c.l.b16 %v336
    %v862 = vunpack.c.l.b16 %v337
    %v863 = vunpack.c.l.b16 %v338
    %v864 = vunpack.c.l.b16 %v339
    %v865 = vunpack.c.l.b16 %v340
    %v866 = vunpack.c.l.b16 %v341
    %v867 = vunpack.c.l.b16 %v342
    %v868 = vunpack.c.l.b16 %v343
    %v869 = vunpack.c.l.b16 %v344
    %v870 = vunpack.c.l.b16 %v345
    %v871 = vunpack.c.l.b16 %v346
    %v872 = vunpack.c.l.b16 %v347
    %v873 = vunpack.c.l.b16 %v348
    %v874 = vunpack.c.l.b16 %v349
    %v875 = vunpack.c.l.b16 %v350
    %v876 = vunpack.c.l.b16 %v351
    %v877 = vunpack.c.l.b16 %v352
    %v878 = vunpack.c.l.b16 %v353
    %v879 = vunpack.c.l.b16 %v354
    %v880 = vunpack.c.l.b16 %v355
    %v881 = vunpack.c.l.b16 %v356
    %v882 = vunpack.c.l.b16 %v357
    %v883 = vunpack.c.l.b16 %v358
    %v884 = vunpack.c.l.b16 %v359
    %v885 = vunpack.c.l.b16 %v360
    %v886 = vunpack.c.l.b16 %v361
    %v887 = vunpack.c.l.b16 %v362
    %v888 = vunpack.c.l.b16 %v363
    %v889 = vunpack.c.l.b16 %v364
    %v890 = vunpack.c.l.b16 %v365
    %v891 = vunpack.c.l.b16 %v366
    %v892 = vunpack.c.l.b16 %v367
    %v893 = vunpack.c.l.b16 %v368
    %v894 = vunpack.c.l.b16 %v369
    %v895 = vunpack.c.l.b16 %v370
    %v896 = vunpack.c.l.b16 %v371
    %v897 = vunpack.c.l.b16 %v372
    %v898 = vunpack.c.l.b16 %v373
    %v899 = vunpack.c.l.b16 %v374
    %v900 = vunpack.c.l.b16 %v375
    %v901 = vunpack.c.l.b16 %v376
    %v902 = vunpack.c.l.b16 %v377
    %v903 = vunpack.c.l.b16 %v378
    %v904 = vunpack.c.l.b16 %v379
    %v905 = vunpack.c.l.b16 %v380
    %v906 = vunpack.c.l.b16 %v381
    %v907 = vunpack.c.l.b16 %v382
    %v908 = vunpack.c.l.b16 %v383
    %v909 = vunpack.c.l.b16 %v384
    %v910 = vunpack.c.l.b16 %v385
    %v911 = vunpack.c.l.b16 %v386
    %v912 = vunpack.c.l.b16 %v387
    %v913 = vunpack.c.l.b16 %v388
    %v914 = vunpack.c.l.b16 %v389
    %v915 = vunpack.c.l.b16 %v390
    %v916 = vunpack.c.l.b16 %v391
    %v917 = vunpack.c.l.b16 %v392
    %v918 = vunpack.c.l.b16 %v393
    %v919 = vunpack.c.l.b16 %v394
    %v920 = vunpack.c.l.b16 %v395
    %v921 = vunpack.c.l.b16 %v396
    %v922 = vunpack.c.l.b16 %v397
    %v923 = vunpack.c.l.b16 %v398
    %v924 = vunpack.c.l.b16 %v399
    %v925 = vunpack.c.l.b16 %v400
    %v926 = vunpack.c.l.b16 %v401
    %v927 = vunpack.c.l.b16 %v402
    %v928 = vunpack.c.l.b16 %v403
    %v929 = vunpack.c.l.b16 %v404
    %v930 = vunpack.c.l.b16 %v405
    %v931 = vunpack.c.l.b16 %v406
    %v932 = vunpack.c.l.b16 %v407
    %v933 = vunpack.c.l.b16 %v408
    %v934 = vunpack.c.l.b16 %v409
    %v935 = vunpack.c.l.b16 %v410
    %v936 = vunpack.c.l.b16 %v411
    %v937 = vunpack.c.l.b16 %v412
    %v938 = vunpack.c.l.b16 %v413
    %v939 = vunpack.c.l.b16 %v414
    %v940 = vunpack.c.l.b16 %v415
    %v941 = vunpack.c.l.b16 %v416
    %v942 = vunpack.c.l.b16 %v417
    %v943 = vunpack.c.l.b16 %v418
    %v944 = vunpack.c.l.b16 %v419
    %v945 = vunpack.c.l.b16 %v420
    %v946 = vunpack.c.l.b16 %v421
    %v947 = vunpack.c.l.b16 %v422
    %v948 = vunpack.c.l.b16 %v423
    %v949 = vunpack.c.l.b16 %v424
    %v950 = vunpack.c.l.b16 %v425
    %v951 = vunpack.c.l.b16 %v426
    %v952 = vunpack.c.l.b16 %v427
    %v953 = vunpack.c.l.b16 %v428
    %v954 = vunpack.c.l.b16 %v429
    %v955 = vunpack.c.l.b16 %v430
    %v956 = vunpack.c.l.b16 %v431
    %v957 = vunpack.c.l.b16 %v432
    %v958 = vunpack.c.l.b16 %v433
    %v959 = vunpack.c.l.b16 %v434
    %v960 = vunpack.c.l.b16 %v435
    %v961 = vunpack.c.l.b16 %v436
    %v962 = vunpack.c.l.b16 %v437
    %v963 = vunpack.c.l.b16 %v438
    %v964 = vunpack.c.l.b16 %v439
    %v965 = vunpack.c.l.b16 %v440
    %v966 = vunpack.c.l.b16 %v441
    %v967 = vunpack.c.l.b16 %v442
    %v968 = vunpack.c.l.b16 %v443
    %v969 = vunpack.c.l.b16 %v444
    %v970 = vunpack.c.l.b16 %v445
    %v971 = vunpack.c.l.b16 %v446
    %v972 = vunpack.c.l.b16 %v447
    %v973 = vunpack.c.l.b16 %v448
    %v974 = vunpack.c.l.b16 %v449
    %v975 = vunpack.c.l.b16 %v450
    %v976 = vunpack.c.l.b16 %v451
    %v977 = vunpack.c.l.b16 %v452
    %v978 = vunpack.c.l.b16 %v453
    %v979 = vunpack.c.l.b16 %v454
    %v980 = vunpack.c.l.b16 %v455
    %v981 = vunpack.c.l.b16 %v456
    %v982 = vunpack.c.l.b16 %v457
    %v983 = vunpack.c.l.b16 %v458
    %v984 = vunpack.c.l.b16 %v459
    %v985 = vunpack.c.l.b16 %v460
    %v986 = vunpack.c.l.b16 %v461
    %v987 = vunpack.c.l.b16 %v462
    %v988 = vunpack.c.l.b16 %v463
    %v989 = vunpack.c.l.b16 %v464
    %v990 = vunpack.c.l.b16 %v465
    %v991 = vunpack.c.l.b16 %v466
    %v992 = vunpack.c.l.b16 %v467
    %v993 = vunpack.c.l.b16 %v468
    %v994 = vunpack.c.l.b16 %v469
    %v995 = vunpack.c.l.b16 %v470
    %v996 = vunpack.c.l.b16 %v471
    %v997 = vunpack.c.l.b16 %v472
    %v998 = vunpack.c.l.b16 %v473
    %v999 = vunpack.c.l.b16 %v474
    %v1000 = vunpack.c.l.b16 %v475
    %v1001 = vunpack.c.l.b16 %v476
    %v1002 = vunpack.c.l.b16 %v477
    %v1003 = vunpack.c.l.b16 %v478
    %v1004 = vunpack.c.l.b16 %v479
    %v1005 = vunpack.c.l.b16 %v480
    %v1006 = vunpack.c.l.b16 %v481
    %v1007 = vunpack.c.l.b16 %v482
    %v1008 = vunpack.c.l.b16 %v483
    %v1009 = vunpack.c.l.b16 %v484
    %v1010 = vunpack.c.l.b16 %v485
    %v1011 = vunpack.c.l.b16 %v486
    %v1012 = vunpack.c.l.b16 %v487
    %v1013 = vunpack.c.l.b16 %v488
    %v1014 = vunpack.c.l.b16 %v489
    %v1015 = vunpack.c.l.b16 %v490
    %v1016 = vunpack.c.l.b16 %v491
    %v1017 = vunpack.c.l.b16 %v492
    %v1018 = vunpack.c.l.b16 %v493
    %v1019 = vunpack.c.l.b16 %v494
    %v1020 = vunpack.c.l.b16 %v495
    %v1021 = vunpack.c.l.b16 %v496
    %v1022 = vunpack.c.l.b16 %v497
    %v1023 = vunpack.c.l.b16 %v498
    %v1024 = vunpack.c.l.b16 %v499
    %v1025 = vunpack.c.l.b16 %v500
    %v1026 = vunpack.c.l.b16 %v501
    %v1027 = vunpack.c.l.b16 %v502
    %v1028 = vunpack.c.l.b16 %v503
    %v1029 = vunpack.c.l.b16 %v504
    %v1030 = vunpack.c.l.b16 %v505
    %v1031 = vunpack.c.l.b16 %v506
    %v1032 = vunpack.c.l.b16 %v507
    %v1033 = vunpack.c.l.b16 %v508
    %v1034 = vunpack.c.l.b16 %v509
    %v1035 = vunpack.c.l.b16 %v510
    %v1036 = vunpack.c.l.b16 %v511
    %v1037 = vunpack.c.l.b16 %v512
    %v1038 = vunpack.c.l.b16 %v513
    %v1039 = vunpack.c.l.b16 %v514
    %v1040 = vunpack.c.l.b16 %v515
    %v1041 = vunpack.c.l.b16 %v516
    %v1042 = vunpack.c.l.b16 %v517
    %v1043 = vunpack.c.l.b16 %v518
    %v1044 = vunpack.c.l.b16 %v519
    %v1045 = vunpack.c.l.b16 %v520
    %v1046 = vunpack.c.l.b16 %v521
    %v1047 = vunpack.c.l.b16 %v522
    %v1048 = vunpack.c.l.b16 %v523
    %v1049 = vunpack.c.l.b16 %v524
    %v1050 = vunpack.c.l.b16 %v525
    %v1051 = vunpack.c.l.b16 %v526
    %v1052 = vunpack.c.l.b16 %v527
    %v1053 = vunpack.c.l.b16 %v528
    %v1054 = vunpack.c.l.b16 %v529
    %v1055 = vunpack.c.l.b16 %v530
    %v1056 = vunpack.c.l.b16 %v531
    %v1057 = vunpack.c.l.b16 %v532
    %v1058 = vunpack.c.l.b16 %v533
    %v1059 = vunpack.c.l.b16 %v534
    %v1060 = vunpack.c.l.b16 %v535
    %v1061 = vunpack.c.l.b16 %v536
    %v1062 = vunpack.c.l.b16 %v537
    %v1063 = vunpack.c.l.b16 %v538
    %v1064 = vunpack.c.l.b16 %v539
    %v1065 = vunpack.c.l.b16 %v540
    %v1066 = vunpack.c.l.b16 %v541
    %v1067 = vunpack.c.l.b16 %v542
    %v1068 = vunpack.c.l.b16 %v543
    %v1069 = vpack.c.b16 %v846, %v845
    %v1070 = vpack.c.b16 %v848, %v847
    %v1071 = vpack.c.b16 %v850, %v849
    %v1072 = vpack.c.b16 %v852, %v851
    %v1073 = vpack.c.b16 %v854, %v853
    %v1074 = vpack.c.b16 %v856, %v855
    %v1075 = vpack.c.b16 %v858, %v857
    %v1076 = vpack.c.b16 %v860, %v859
    %v1077 = vpack.c.b16 %v862, %v861
    %v1078 = vpack.c.b16 %v864, %v863
    %v1079 = vpack.c.b16 %v866, %v865
    %v1080 = vpack.c.b16 %v868, %v867
    %v1081 = vpack.c.b16 %v870, %v869
    %v1082 = vpack.c.b16 %v872, %v871
    %v1083 = vpack.c.b16 %v874, %v873
    %v1084 = vpack.c.b16 %v876, %v875
    %v1085 = vpack.c.b16 %v878, %v877
    %v1086 = vpack.c.b16 %v880, %v879
    %v1087 = vpack.c.b16 %v882, %v881
    %v1088 = vpack.c.b16 %v884, %v883
    %v1089 = vpack.c.b16 %v886, %v885
    %v1090 = vpack.c.b16 %v888, %v887
    %v1091 = vpack.c.b16 %v890, %v889
    %v1092 = vpack.c.b16 %v892, %v891
    %v1093 = vpack.c.b16 %v894, %v893
    %v1094 = vpack.c.b16 %v896, %v895
    %v1095 = vpack.c.b16 %v898, %v897
    %v1096 = vpack.c.b16 %v900, %v899
    %v1097 = vpack.c.b16 %v902, %v901
    %v1098 = vpack.c.b16 %v904, %v903
    %v1099 = vpack.c.b16 %v906, %v905
    %v1100 = vpack.c.b16 %v908, %v907
    %v1101 = vpack.c.b16 %v910, %v909
    %v1102 = vpack.c.b16 %v912, %v911
    %v1103 = vpack.c.b16 %v914, %v913
    %v1104 = vpack.c.b16 %v916, %v915
    %v1105 = vpack.c.b16 %v918, %v917
    %v1106 = vpack.c.b16 %v920, %v919
    %v1107 = vpack.c.b16 %v922, %v921
    %v1108 = vpack.c.b16 %v924, %v923
    %v1109 = vpack.c.b16 %v926, %v925
    %v1110 = vpack.c.b16 %v928, %v927
    %v1111 = vpack.c.b16 %v930, %v929
    %v1112 = vpack.c.b16 %v932, %v931
    %v1113 = vpack.c.b16 %v934, %v933
    %v1114 = vpack.c.b16 %v936, %v935
    %v1115 = vpack.c.b16 %v938, %v937
    %v1116 = vpack.c.b16 %v940, %v939
    %v1117 = vpack.c.b16 %v942, %v941
    %v1118 = vpack.c.b16 %v944, %v943
    %v1119 = vpack.c.b16 %v946, %v945
    %v1120 = vpack.c.b16 %v948, %v947
    %v1121 = vpack.c.b16 %v950, %v949
    %v1122 = vpack.c.b16 %v952, %v951
    %v1123 = vpack.c.b16 %v954, %v953
    %v1124 = vpack.c.b16 %v956, %v955
    %v1125 = vpack.c.b16 %v958, %v957
    %v1126 = vpack.c.b16 %v960, %v959
    %v1127 = vpack.c.b16 %v962, %v961
    %v1128 = vpack.c.b16 %v964, %v963
    %v1129 = vpack.c.b16 %v966, %v965
    %v1130 = vpack.c.b16 %v968, %v967
    %v1131 = vpack.c.b16 %v970, %v969
    %v1132 = vpack.c.b16 %v972, %v971
    %v1133 = vpack.c.b16 %v974, %v973
    %v1134 = vpack.c.b16 %v976, %v975
    %v1135 = vpack.c.b16 %v978, %v977
    %v1136 = vpack.c.b16 %v980, %v979
    %v1137 = vpack.c.b16 %v982, %v981
    %v1138 = vpack.c.b16 %v984, %v983
    %v1139 = vpack.c.b16 %v986, %v985
    %v1140 = vpack.c.b16 %v988, %v987
    %v1141 = vpack.c.b16 %v990, %v989
    %v1142 = vpack.c.b16 %v992, %v991
    %v1143 = vpack.c.b16 %v994, %v993
    %v1144 = vpack.c.b16 %v996, %v995
    %v1145 = vpack.c.b16 %v998, %v997
    %v1146 = vpack.c.b16 %v1000, %v999
    %v1147 = vpack.c.b16 %v1002, %v1001
    %v1148 = vpack.c.b16 %v1004, %v1003
    %v1149 = vpack.c.b16 %v1006, %v1005
    %v1150 = vpack.c.b16 %v1008, %v1007
    %v1151 = vpack.c.b16 %v1010, %v1009
    %v1152 = vpack.c.b16 %v1012, %v1011
    %v1153 = vpack.c.b16 %v1014, %v1013
    %v1154 = vpack.c.b16 %v1016, %v1015
    %v1155 = vpack.c.b16 %v1018, %v1017
    %v1156 = vpack.c.b16 %v1020, %v1019
    %v1157 = vpack.c.b16 %v1022, %v1021
    %v1158 = vpack.c.b16 %v1024, %v1023
    %v1159 = vpack.c.b16 %v1026, %v1025
    %v1160 = vpack.c.b16 %v1028, %v1027
    %v1161 = vpack.c.b16 %v1030, %v1029
    %v1162 = vpack.c.b16 %v1032, %v1031
    %v1163 = vpack.c.b16 %v1034, %v1033
    %v1164 = vpack.c.b16 %v1036, %v1035
    %v1165 = vpack.c.b16 %v1038, %v1037
    %v1166 = vpack.c.b16 %v1040, %v1039
    %v1167 = vpack.c.b16 %v1042, %v1041
    %v1168 = vpack.c.b16 %v1044, %v1043
    %v1169 = vpack.c.b16 %v1046, %v1045
    %v1170 = vpack.c.b16 %v1048, %v1047
    %v1171 = vpack.c.b16 %v1050, %v1049
    %v1172 = vpack.c.b16 %v1052, %v1051
    %v1173 = vpack.c.b16 %v1054, %v1053
    %v1174 = vpack.c.b16 %v1056, %v1055
    %v1175 = vpack.c.b16 %v1058, %v1057
    %v1176 = vpack.c.b16 %v1060, %v1059
    %v1177 = vpack.c.b16 %v1062, %v1061
    %v1178 = vpack.c.b16 %v1064, %v1063
    %v1179 = vpack.c.b16 %v1066, %v1065
    %v1180 = vpack.c.b16 %v1068, %v1067
    %1293 = vmatprep.subr.bf16.mxu0 0
    %1294 = vmatpush1.bf16.msra.mxu0 %v1069
    %1295 = vmatprep.subr.bf16.mxu0 0
    %1296 = vmatpush1.bf16.msra.mxu0 %v1070
    %1297 = vmatprep.subr.bf16.mxu0 0
    %1298 = vmatpush1.bf16.msra.mxu0 %v1071
    %1299 = vmatprep.subr.bf16.mxu0 0
    %1300 = vmatpush1.bf16.msra.mxu0 %v1072
    %1301 = vmatprep.subr.bf16.mxu0 0
    %1302 = vmatpush1.bf16.msra.mxu0 %v1073
    %1303 = vmatprep.subr.bf16.mxu0 0
    %1304 = vmatpush1.bf16.msra.mxu0 %v1074
    %1305 = vmatprep.subr.bf16.mxu0 0
    %1306 = vmatpush1.bf16.msra.mxu0 %v1075
    %1307 = vmatprep.subr.bf16.mxu0 0
    %1308 = vmatpush1.bf16.msra.mxu0 %v1076
    %1309 = vmatprep.subr.bf16.mxu0 0
    %1310 = vmatpush1.bf16.msra.mxu0 %v1077
    %1311 = vmatprep.subr.bf16.mxu0 0
    %1312 = vmatpush1.bf16.msra.mxu0 %v1078
    %1313 = vmatprep.subr.bf16.mxu0 0
    %1314 = vmatpush1.bf16.msra.mxu0 %v1079
    %1315 = vmatprep.subr.bf16.mxu0 0
    %1316 = vmatpush1.bf16.msra.mxu0 %v1080
    %1317 = vmatprep.subr.bf16.mxu0 0
    %1318 = vmatpush1.bf16.msra.mxu0 %v1081
    %1319 = vmatprep.subr.bf16.mxu0 0
    %1320 = vmatpush1.bf16.msra.mxu0 %v1082
    %1321 = vmatprep.subr.bf16.mxu0 0
    %1322 = vmatpush1.bf16.msra.mxu0 %v1083
    %1323 = vmatprep.subr.bf16.mxu0 0
    %1324 = vmatpush1.bf16.msra.mxu0 %v1084
    %1325 = vmatprep.mubr.bf16.mxu0 %v594
    %1326 = vmatmul.mubr.bf16.gmra.mrb[0].mxu0 %v593
    %v1327 = vpop.f32.mrb[0].mxu0
    %v1328 = vadd.f32 %v549, %v1327
    %v1329 = vpop.f32.mrb[0].mxu0
    %v1330 = vpop.f32.mrb[0].mxu0
    %v1331 = vadd.f32 %v549, %v1330
    %v1332 = vpop.f32.mrb[0].mxu0
    %1333 = vdwg.mxu0
    %1334 = vmatprep.subr.bf16.mxu0 0
    %1335 = vmatpush1.bf16.msra.mxu0 %v1085
    %1336 = vmatprep.subr.bf16.mxu0 0
    %1337 = vmatpush1.bf16.msra.mxu0 %v1086
    %1338 = vmatprep.subr.bf16.mxu0 0
    %1339 = vmatpush1.bf16.msra.mxu0 %v1087
    %1340 = vmatprep.subr.bf16.mxu0 0
    %1341 = vmatpush1.bf16.msra.mxu0 %v1088
    %1342 = vmatprep.subr.bf16.mxu0 0
    %1343 = vmatpush1.bf16.msra.mxu0 %v1089
    %1344 = vmatprep.subr.bf16.mxu0 0
    %1345 = vmatpush1.bf16.msra.mxu0 %v1090
    %1346 = vmatprep.subr.bf16.mxu0 0
    %1347 = vmatpush1.bf16.msra.mxu0 %v1091
    %1348 = vmatprep.subr.bf16.mxu0 0
    %1349 = vmatpush1.bf16.msra.mxu0 %v1092
    %1350 = vmatprep.subr.bf16.mxu0 0
    %1351 = vmatpush1.bf16.msra.mxu0 %v1093
    %1352 = vmatprep.subr.bf16.mxu0 0
    %1353 = vmatpush1.bf16.msra.mxu0 %v1094
    %1354 = vmatprep.subr.bf16.mxu0 0
    %1355 = vmatpush1.bf16.msra.mxu0 %v1095
    %1356 = vmatprep.subr.bf16.mxu0 0
    %1357 = vmatpush1.bf16.msra.mxu0 %v1096
    %1358 = vmatprep.subr.bf16.mxu0 0
    %1359 = vmatpush1.bf16.msra.mxu0 %v1097
    %1360 = vmatprep.subr.bf16.mxu0 0
    %1361 = vmatpush1.bf16.msra.mxu0 %v1098
    %1362 = vmatprep.subr.bf16.mxu0 0
    %1363 = vmatpush1.bf16.msra.mxu0 %v1099
    %1364 = vmatprep.subr.bf16.mxu0 0
    %1365 = vmatpush1.bf16.msra.mxu0 %v1100
    %1366 = vmatprep.mubr.bf16.mxu0 %v596
    %1367 = vmatmul.mubr.bf16.gmra.mrb[0].mxu0 %v595
    %v1368 = vpop.f32.mrb[0].mxu0
    %v1369 = vadd.f32 %v1328, %v1368
    %v1370 = vpop.f32.mrb[0].mxu0
    %v1371 = vpop.f32.mrb[0].mxu0
    %v1372 = vadd.f32 %v1331, %v1371
    %v1373 = vpop.f32.mrb[0].mxu0
    %1374 = vdwg.mxu0
    %1375 = vmatprep.subr.bf16.mxu0 0
    %1376 = vmatpush1.bf16.msra.mxu0 %v1101
    %1377 = vmatprep.subr.bf16.mxu0 0
    %1378 = vmatpush1.bf16.msra.mxu0 %v1102
    %1379 = vmatprep.subr.bf16.mxu0 0
    %1380 = vmatpush1.bf16.msra.mxu0 %v1103
    %1381 = vmatprep.subr.bf16.mxu0 0
    %1382 = vmatpush1.bf16.msra.mxu0 %v1104
    %1383 = vmatprep.subr.bf16.mxu0 0
    %1384 = vmatpush1.bf16.msra.mxu0 %v1105
    %1385 = vmatprep.subr.bf16.mxu0 0
    %1386 = vmatpush1.bf16.msra.mxu0 %v1106
    %1387 = vmatprep.subr.bf16.mxu0 0
    %1388 = vmatpush1.bf16.msra.mxu0 %v1107
    %1389 = vmatprep.subr.bf16.mxu0 0
    %1390 = vmatpush1.bf16.msra.mxu0 %v1108
    %1391 = vmatprep.subr.bf16.mxu0 0
    %1392 = vmatpush1.bf16.msra.mxu0 %v1109
    %1393 = vmatprep.subr.bf16.mxu0 0
    %1394 = vmatpush1.bf16.msra.mxu0 %v1110
    %1395 = vmatprep.subr.bf16.mxu0 0
    %1396 = vmatpush1.bf16.msra.mxu0 %v1111
    %1397 = vmatprep.subr.bf16.mxu0 0
    %1398 = vmatpush1.bf16.msra.mxu0 %v1112
    %1399 = vmatprep.subr.bf16.mxu0 0
    %1400 = vmatpush1.bf16.msra.mxu0 %v1113
    %1401 = vmatprep.subr.bf16.mxu0 0
    %1402 = vmatpush1.bf16.msra.mxu0 %v1114
    %1403 = vmatprep.subr.bf16.mxu0 0
    %1404 = vmatpush1.bf16.msra.mxu0 %v1115
    %1405 = vmatprep.subr.bf16.mxu0 0
    %1406 = vmatpush1.bf16.msra.mxu0 %v1116
    %1407 = vmatprep.mubr.bf16.mxu0 %v598
    %1408 = vmatmul.mubr.bf16.gmra.mrb[0].mxu0 %v597
    %v1409 = vpop.f32.mrb[0].mxu0
    %v1410 = vadd.f32 %v1369, %v1409
    %v1411 = vpop.f32.mrb[0].mxu0
    %v1412 = vpop.f32.mrb[0].mxu0
    %v1413 = vadd.f32 %v1372, %v1412
    %v1414 = vpop.f32.mrb[0].mxu0
    %1415 = vdwg.mxu0
    %1416 = vmatprep.subr.bf16.mxu0 0
    %1417 = vmatpush1.bf16.msra.mxu0 %v1117
    %1418 = vmatprep.subr.bf16.mxu0 0
    %1419 = vmatpush1.bf16.msra.mxu0 %v1118
    %1420 = vmatprep.subr.bf16.mxu0 0
    %1421 = vmatpush1.bf16.msra.mxu0 %v1119
    %1422 = vmatprep.subr.bf16.mxu0 0
    %1423 = vmatpush1.bf16.msra.mxu0 %v1120
    %1424 = vmatprep.subr.bf16.mxu0 0
    %1425 = vmatpush1.bf16.msra.mxu0 %v1121
    %1426 = vmatprep.subr.bf16.mxu0 0
    %1427 = vmatpush1.bf16.msra.mxu0 %v1122
    %1428 = vmatprep.subr.bf16.mxu0 0
    %1429 = vmatpush1.bf16.msra.mxu0 %v1123
    %1430 = vmatprep.subr.bf16.mxu0 0
    %1431 = vmatpush1.bf16.msra.mxu0 %v1124
    %1432 = vmatprep.subr.bf16.mxu0 0
    %1433 = vmatpush1.bf16.msra.mxu0 %v1125
    %1434 = vmatprep.subr.bf16.mxu0 0
    %1435 = vmatpush1.bf16.msra.mxu0 %v1126
    %1436 = vmatprep.subr.bf16.mxu0 0
    %1437 = vmatpush1.bf16.msra.mxu0 %v1127
    %1438 = vmatprep.subr.bf16.mxu0 0
    %1439 = vmatpush1.bf16.msra.mxu0 %v1128
    %1440 = vmatprep.subr.bf16.mxu0 0
    %1441 = vmatpush1.bf16.msra.mxu0 %v1129
    %1442 = vmatprep.subr.bf16.mxu0 0
    %1443 = vmatpush1.bf16.msra.mxu0 %v1130
    %1444 = vmatprep.subr.bf16.mxu0 0
    %1445 = vmatpush1.bf16.msra.mxu0 %v1131
    %1446 = vmatprep.subr.bf16.mxu0 0
    %1447 = vmatpush1.bf16.msra.mxu0 %v1132
    %1448 = vmatprep.mubr.bf16.mxu0 %v600
    %1449 = vmatmul.mubr.bf16.gmra.mrb[0].mxu0 %v599
    %v1450 = vpop.f32.mrb[0].mxu0
    %v1451 = vadd.f32 %v1410, %v1450
    %v1452 = vpop.f32.mrb[0].mxu0
    %v1453 = vpop.f32.mrb[0].mxu0
    %v1454 = vadd.f32 %v1413, %v1453
    %v1455 = vpop.f32.mrb[0].mxu0
    %1456 = vdwg.mxu0
    %1457 = vmatprep.subr.bf16.mxu0 0
    %1458 = vmatpush1.bf16.msra.mxu0 %v1133
    %1459 = vmatprep.subr.bf16.mxu0 0
    %1460 = vmatpush1.bf16.msra.mxu0 %v1134
    %1461 = vmatprep.subr.bf16.mxu0 0
    %1462 = vmatpush1.bf16.msra.mxu0 %v1135
    %1463 = vmatprep.subr.bf16.mxu0 0
    %1464 = vmatpush1.bf16.msra.mxu0 %v1136
    %1465 = vmatprep.subr.bf16.mxu0 0
    %1466 = vmatpush1.bf16.msra.mxu0 %v1137
    %1467 = vmatprep.subr.bf16.mxu0 0
    %1468 = vmatpush1.bf16.msra.mxu0 %v1138
    %1469 = vmatprep.subr.bf16.mxu0 0
    %1470 = vmatpush1.bf16.msra.mxu0 %v1139
    %1471 = vmatprep.subr.bf16.mxu0 0
    %1472 = vmatpush1.bf16.msra.mxu0 %v1140
    %1473 = vmatprep.subr.bf16.mxu0 0
    %1474 = vmatpush1.bf16.msra.mxu0 %v1141
    %1475 = vmatprep.subr.bf16.mxu0 0
    %1476 = vmatpush1.bf16.msra.mxu0 %v1142
    %1477 = vmatprep.subr.bf16.mxu0 0
    %1478 = vmatpush1.bf16.msra.mxu0 %v1143
    %1479 = vmatprep.subr.bf16.mxu0 0
    %1480 = vmatpush1.bf16.msra.mxu0 %v1144
    %1481 = vmatprep.subr.bf16.mxu0 0
    %1482 = vmatpush1.bf16.msra.mxu0 %v1145
    %1483 = vmatprep.subr.bf16.mxu0 0
    %1484 = vmatpush1.bf16.msra.mxu0 %v1146
    %1485 = vmatprep.subr.bf16.mxu0 0
    %1486 = vmatpush1.bf16.msra.mxu0 %v1147
    %1487 = vmatprep.subr.bf16.mxu0 0
    %1488 = vmatpush1.bf16.msra.mxu0 %v1148
    %1489 = vmatprep.mubr.bf16.mxu0 %v602
    %1490 = vmatmul.mubr.bf16.gmra.mrb[0].mxu0 %v601
    %v1491 = vpop.f32.mrb[0].mxu0
    %v1492 = vadd.f32 %v1451, %v1491
    %v1493 = vpop.f32.mrb[0].mxu0
    %v1494 = vpop.f32.mrb[0].mxu0
    %v1495 = vadd.f32 %v1454, %v1494
    %v1496 = vpop.f32.mrb[0].mxu0
    %1497 = vdwg.mxu0
    %1498 = vmatprep.subr.bf16.mxu0 0
    %1499 = vmatpush1.bf16.msra.mxu0 %v1149
    %1500 = vmatprep.subr.bf16.mxu0 0
    %1501 = vmatpush1.bf16.msra.mxu0 %v1150
    %1502 = vmatprep.subr.bf16.mxu0 0
    %1503 = vmatpush1.bf16.msra.mxu0 %v1151
    %1504 = vmatprep.subr.bf16.mxu0 0
    %1505 = vmatpush1.bf16.msra.mxu0 %v1152
    %1506 = vmatprep.subr.bf16.mxu0 0
    %1507 = vmatpush1.bf16.msra.mxu0 %v1153
    %1508 = vmatprep.subr.bf16.mxu0 0
    %1509 = vmatpush1.bf16.msra.mxu0 %v1154
    %1510 = vmatprep.subr.bf16.mxu0 0
    %1511 = vmatpush1.bf16.msra.mxu0 %v1155
    %1512 = vmatprep.subr.bf16.mxu0 0
    %1513 = vmatpush1.bf16.msra.mxu0 %v1156
    %1514 = vmatprep.subr.bf16.mxu0 0
    %1515 = vmatpush1.bf16.msra.mxu0 %v1157
    %1516 = vmatprep.subr.bf16.mxu0 0
    %1517 = vmatpush1.bf16.msra.mxu0 %v1158
    %1518 = vmatprep.subr.bf16.mxu0 0
    %1519 = vmatpush1.bf16.msra.mxu0 %v1159
    %1520 = vmatprep.subr.bf16.mxu0 0
    %1521 = vmatpush1.bf16.msra.mxu0 %v1160
    %1522 = vmatprep.subr.bf16.mxu0 0
    %1523 = vmatpush1.bf16.msra.mxu0 %v1161
    %1524 = vmatprep.subr.bf16.mxu0 0
    %1525 = vmatpush1.bf16.msra.mxu0 %v1162
    %1526 = vmatprep.subr.bf16.mxu0 0
    %1527 = vmatpush1.bf16.msra.mxu0 %v1163
    %1528 = vmatprep.subr.bf16.mxu0 0
    %1529 = vmatpush1.bf16.msra.mxu0 %v1164
    %1530 = vmatprep.mubr.bf16.mxu0 %v604
    %1531 = vmatmul.mubr.bf16.gmra.mrb[0].mxu0 %v603
    %v1532 = vpop.f32.mrb[0].mxu0
    %v1533 = vadd.f32 %v1492, %v1532
    %v1534 = vpop.f32.mrb[0].mxu0
    %v1535 = vpop.f32.mrb[0].mxu0
    %v1536 = vadd.f32 %v1495, %v1535
    %v1537 = vpop.f32.mrb[0].mxu0
    %1538 = vdwg.mxu0
    %1539 = vmatprep.subr.bf16.mxu0 0
    %1540 = vmatpush1.bf16.msra.mxu0 %v1165
    %1541 = vmatprep.subr.bf16.mxu0 0
    %1542 = vmatpush1.bf16.msra.mxu0 %v1166
    %1543 = vmatprep.subr.bf16.mxu0 0
    %1544 = vmatpush1.bf16.msra.mxu0 %v1167
    %1545 = vmatprep.subr.bf16.mxu0 0
    %1546 = vmatpush1.bf16.msra.mxu0 %v1168
    %1547 = vmatprep.subr.bf16.mxu0 0
    %1548 = vmatpush1.bf16.msra.mxu0 %v1169
    %1549 = vmatprep.subr.bf16.mxu0 0
    %1550 = vmatpush1.bf16.msra.mxu0 %v1170
    %1551 = vmatprep.subr.bf16.mxu0 0
    %1552 = vmatpush1.bf16.msra.mxu0 %v1171
    %1553 = vmatprep.subr.bf16.mxu0 0
    %1554 = vmatpush1.bf16.msra.mxu0 %v1172
    %1555 = vmatprep.subr.bf16.mxu0 0
    %1556 = vmatpush1.bf16.msra.mxu0 %v1173
    %1557 = vmatprep.subr.bf16.mxu0 0
    %1558 = vmatpush1.bf16.msra.mxu0 %v1174
    %1559 = vmatprep.subr.bf16.mxu0 0
    %1560 = vmatpush1.bf16.msra.mxu0 %v1175
    %1561 = vmatprep.subr.bf16.mxu0 0
    %1562 = vmatpush1.bf16.msra.mxu0 %v1176
    %1563 = vmatprep.subr.bf16.mxu0 0
    %1564 = vmatpush1.bf16.msra.mxu0 %v1177
    %1565 = vmatprep.subr.bf16.mxu0 0
    %1566 = vmatpush1.bf16.msra.mxu0 %v1178
    %1567 = vmatprep.subr.bf16.mxu0 0
    %1568 = vmatpush1.bf16.msra.mxu0 %v1179
    %1569 = vmatprep.subr.bf16.mxu0 0
    %1570 = vmatpush1.bf16.msra.mxu0 %v1180
    %1571 = vmatprep.mubr.bf16.mxu0 %v606
    %1572 = vmatmul.mubr.bf16.gmra.mrb[0].mxu0 %v605
    %v1573 = vpop.f32.mrb[0].mxu0
    %v1574 = vadd.f32 %v1533, %v1573
    %v1575 = vpop.f32.mrb[0].mxu0
    %v1576 = vpop.f32.mrb[0].mxu0
    %v1577 = vadd.f32 %v1536, %v1576
    %v1578 = vpop.f32.mrb[0].mxu0
    %1579 = vdwg.mxu0
    %vm1580 = vcmp.gt.f32.partialorder %v1574, 0.0
    %vm1581 = vcmp.gt.f32.partialorder %v1577, 0.0
    %v1582 = vmul.f32 %v1574, 0.01
    %v1583 = vmul.f32 %v1577, 0.01
    %v1584 = vsel %vm1580, %v1574, %v1582
    %v1585 = vsel %vm1581, %v1577, %v1583
    %v1586 = vpack.c.bf16 %v1585, %v1584
    %v1587 = vld [vmem:[#allocation11] sm:$0xf]
    %v1588 = vld [vmem:[#allocation11 + $0x4] sm:$0xf]
    %v1589 = vld [vmem:[#allocation11 + $0x8] sm:$0xf]
    %v1590 = vld [vmem:[#allocation11 + $0xc] sm:$0xf]
    %v1591 = vld [vmem:[#allocation11 + $0x10] sm:$0xf]
    %v1592 = vld [vmem:[#allocation11 + $0x14] sm:$0xf]
    %v1593 = vld [vmem:[#allocation11 + $0x18] sm:$0xf]
    %v1594 = vld [vmem:[#allocation11 + $0x1c] sm:$0xf]
    %v1595 = vld [vmem:[#allocation11 + $0x20] sm:$0xf]
    %v1596 = vld [vmem:[#allocation11 + $0x24] sm:$0xf]
    %v1597 = vld [vmem:[#allocation11 + $0x28] sm:$0xf]
    %v1598 = vld [vmem:[#allocation11 + $0x2c] sm:$0xf]
    %v1599 = vld [vmem:[#allocation11 + $0x30] sm:$0xf]
    %v1600 = vld [vmem:[#allocation11 + $0x34] sm:$0xf]
    %v1601 = vld [vmem:[#allocation11 + $0x38] sm:$0xf]
    %v1602 = vld [vmem:[#allocation11 + $0x3c] sm:$0xf]
    %v1603 = vld [vmem:[#allocation13] sm:$0x1]
    %v1605 = vlaneseq
    %v1606 = vshrl.u32 %v1605, 7
    %v1607 = vsub.s32 0, %v1606
    %v1608 = vrot.slane %v1603, %v1607
    %v1626 = vunpack.c.l.b16 %v1587
    %v1627 = vunpack.c.l.b16 %v1588
    %v1628 = vunpack.c.l.b16 %v1589
    %v1629 = vunpack.c.l.b16 %v1590
    %v1630 = vunpack.c.l.b16 %v1591
    %v1631 = vunpack.c.l.b16 %v1592
    %v1632 = vunpack.c.l.b16 %v1593
    %v1633 = vunpack.c.l.b16 %v1594
    %v1634 = vunpack.c.l.b16 %v1595
    %v1635 = vunpack.c.l.b16 %v1596
    %v1636 = vunpack.c.l.b16 %v1597
    %v1637 = vunpack.c.l.b16 %v1598
    %v1638 = vunpack.c.l.b16 %v1599
    %v1639 = vunpack.c.l.b16 %v1600
    %v1640 = vunpack.c.l.b16 %v1601
    %v1641 = vunpack.c.l.b16 %v1602
    %v1642 = vpack.c.b16 %v1627, %v1626
    %v1643 = vpack.c.b16 %v1629, %v1628
    %v1644 = vpack.c.b16 %v1631, %v1630
    %v1645 = vpack.c.b16 %v1633, %v1632
    %v1646 = vpack.c.b16 %v1635, %v1634
    %v1647 = vpack.c.b16 %v1637, %v1636
    %v1648 = vpack.c.b16 %v1639, %v1638
    %v1649 = vpack.c.b16 %v1641, %v1640
    %1658 = vmatprep.subr.bf16.mxu0 0
    %1659 = vmatpush1.bf16.msra.mxu0 %v1642
    %1660 = vmatprep.subr.bf16.mxu0 0
    %1661 = vmatpush1.bf16.msra.mxu0 %v1643
    %1662 = vmatprep.subr.bf16.mxu0 0
    %1663 = vmatpush1.bf16.msra.mxu0 %v1644
    %1664 = vmatprep.subr.bf16.mxu0 0
    %1665 = vmatpush1.bf16.msra.mxu0 %v1645
    %1666 = vmatprep.subr.bf16.mxu0 0
    %1667 = vmatpush1.bf16.msra.mxu0 %v1646
    %1668 = vmatprep.subr.bf16.mxu0 0
    %1669 = vmatpush1.bf16.msra.mxu0 %v1647
    %1670 = vmatprep.subr.bf16.mxu0 0
    %1671 = vmatpush1.bf16.msra.mxu0 %v1648
    %1672 = vmatprep.subr.bf16.mxu0 0
    %1673 = vmatpush1.bf16.msra.mxu0 %v1649
    %1674 = vmatprep.subr.bf16.mxu0 0
    %1675 = vmatpush1.bf16.msra.mxu0 0
    %1676 = vmatprep.subr.bf16.mxu0 0
    %1677 = vmatpush1.bf16.msra.mxu0 0
    %1678 = vmatprep.subr.bf16.mxu0 0
    %1679 = vmatpush1.bf16.msra.mxu0 0
    %1680 = vmatprep.subr.bf16.mxu0 0
    %1681 = vmatpush1.bf16.msra.mxu0 0
    %1682 = vmatprep.subr.bf16.mxu0 0
    %1683 = vmatpush1.bf16.msra.mxu0 0
    %1684 = vmatprep.subr.bf16.mxu0 0
    %1685 = vmatpush1.bf16.msra.mxu0 0
    %1686 = vmatprep.subr.bf16.mxu0 0
    %1687 = vmatpush1.bf16.msra.mxu0 0
    %1688 = vmatprep.subr.bf16.mxu0 0
    %1689 = vmatpush1.bf16.msra.mxu0 0
    %1690 = vmatprep.mubr.bf16.mxu0 0
    %1691 = vmatmul.mubr.bf16.gmra.mrb[0].mxu0 %v1586
    %v1692 = vpop.f32.mrb[0].mxu0
    %v1693 = vadd.f32 %v1608, %v1692
    %v1694 = vpop.f32.mrb[0].mxu0
    %v1695 = vpop.f32.mrb[0].mxu0
    %v1696 = vadd.f32 %v1608, %v1695
    %v1697 = vpop.f32.mrb[0].mxu0
    %1698 = vdwg.mxu0
    %vm1699 = vcmp.gt.f32.partialorder %v1693, 0.0
    %vm1700 = vcmp.gt.f32.partialorder %v1696, 0.0
    %v1701 = vmul.f32 %v1693, 0.01
    %v1702 = vmul.f32 %v1696, 0.01
    %v1703 = vsel %vm1699, %v1693, %v1701
    %v1704 = vsel %vm1700, %v1696, %v1702
    %v1705 = vmul.f32 %v1703, %v1703
    %v1706 = vmul.f32 %v1704, %v1704
    %1707 = vadd.xlane.f32.xlu0 %v1705
    %v1708 = vpop.xlane.xlu0 %1707
    %1709 = vadd.xlane.f32.xlu0 %v1706
    %v1710 = vpop.xlane.xlu0 %1709
    %v1711 = vrsqrt.pop %v1708
    %v1712 = vmul.f32 %v1708, %v1711
    %vm1713 = vcmp.eq.f32.partialorder %v1708, inf
    %v1714 = vsel %vm1713, %v1708, %v1712
    %vm1715 = vcmp.eq.f32.partialorder %v1708, 0.0
    %v1716 = vand.u32 %v1708, 2147483648
    %v1717 = vsel %vm1715, %v1716, %v1714
    %v1718 = vrsqrt.pop %v1710
    %v1719 = vmul.f32 %v1710, %v1718
    %vm1720 = vcmp.eq.f32.partialorder %v1710, inf
    %v1721 = vsel %vm1720, %v1710, %v1719
    %vm1722 = vcmp.eq.f32.partialorder %v1710, 0.0
    %v1723 = vand.u32 %v1710, 2147483648
    %v1724 = vsel %vm1722, %v1723, %v1721
    %v1725 = vadd.f32 %v1717, 1e-09
    %v1726 = vadd.f32 %v1724, 1e-09
    %v1727 = vrcp.pop %v1725
    %v1728 = vmul.f32 %v1703, %v1727
    %v1729 = vrcp.pop %v1726
    %v1730 = vmul.f32 %v1704, %v1729
    %v1731 = vpack.c.bf16 %v1730, %v1728
    %v1732 = vld [vmem:[#allocation14] sm:$0xf]
    %v1733 = vld [vmem:[#allocation14 + $0x4] sm:$0xf]
    %v1734 = vld [vmem:[#allocation14 + $0x8] sm:$0xf]
    %v1735 = vld [vmem:[#allocation14 + $0xc] sm:$0xf]
    %v1736 = vld [vmem:[#allocation14 + $0x10] sm:$0xf]
    %v1737 = vld [vmem:[#allocation14 + $0x14] sm:$0xf]
    %v1738 = vld [vmem:[#allocation14 + $0x18] sm:$0xf]
    %v1739 = vld [vmem:[#allocation14 + $0x1c] sm:$0xf]
    %v1740 = vld [vmem:[#allocation14 + $0x20] sm:$0xf]
    %v1741 = vld [vmem:[#allocation14 + $0x24] sm:$0xf]
    %v1742 = vld [vmem:[#allocation14 + $0x28] sm:$0xf]
    %v1743 = vld [vmem:[#allocation14 + $0x2c] sm:$0xf]
    %v1744 = vld [vmem:[#allocation14 + $0x30] sm:$0xf]
    %v1745 = vld [vmem:[#allocation14 + $0x34] sm:$0xf]
    %v1746 = vld [vmem:[#allocation14 + $0x38] sm:$0xf]
    %v1747 = vld [vmem:[#allocation14 + $0x3c] sm:$0xf]
    %v1748 = vld [vmem:[#allocation16] sm:$0x1]
    %v1750 = vlaneseq
    %v1751 = vshrl.u32 %v1750, 7
    %v1752 = vsub.s32 0, %v1751
    %v1753 = vrot.slane %v1748, %v1752
    %v1771 = vunpack.c.l.b16 %v1732
    %v1772 = vunpack.c.l.b16 %v1733
    %v1773 = vunpack.c.l.b16 %v1734
    %v1774 = vunpack.c.l.b16 %v1735
    %v1775 = vunpack.c.l.b16 %v1736
    %v1776 = vunpack.c.l.b16 %v1737
    %v1777 = vunpack.c.l.b16 %v1738
    %v1778 = vunpack.c.l.b16 %v1739
    %v1779 = vunpack.c.l.b16 %v1740
    %v1780 = vunpack.c.l.b16 %v1741
    %v1781 = vunpack.c.l.b16 %v1742
    %v1782 = vunpack.c.l.b16 %v1743
    %v1783 = vunpack.c.l.b16 %v1744
    %v1784 = vunpack.c.l.b16 %v1745
    %v1785 = vunpack.c.l.b16 %v1746
    %v1786 = vunpack.c.l.b16 %v1747
    %v1787 = vpack.c.b16 %v1772, %v1771
    %v1788 = vpack.c.b16 %v1774, %v1773
    %v1789 = vpack.c.b16 %v1776, %v1775
    %v1790 = vpack.c.b16 %v1778, %v1777
    %v1791 = vpack.c.b16 %v1780, %v1779
    %v1792 = vpack.c.b16 %v1782, %v1781
    %v1793 = vpack.c.b16 %v1784, %v1783
    %v1794 = vpack.c.b16 %v1786, %v1785
    %1803 = vmatprep.subr.bf16.mxu0 0
    %1804 = vmatpush1.bf16.msra.mxu0 %v1787
    %1805 = vmatprep.subr.bf16.mxu0 0
    %1806 = vmatpush1.bf16.msra.mxu0 %v1788
    %1807 = vmatprep.subr.bf16.mxu0 0
    %1808 = vmatpush1.bf16.msra.mxu0 %v1789
    %1809 = vmatprep.subr.bf16.mxu0 0
    %1810 = vmatpush1.bf16.msra.mxu0 %v1790
    %1811 = vmatprep.subr.bf16.mxu0 0
    %1812 = vmatpush1.bf16.msra.mxu0 %v1791
    %1813 = vmatprep.subr.bf16.mxu0 0
    %1814 = vmatpush1.bf16.msra.mxu0 %v1792
    %1815 = vmatprep.subr.bf16.mxu0 0
    %1816 = vmatpush1.bf16.msra.mxu0 %v1793
    %1817 = vmatprep.subr.bf16.mxu0 0
    %1818 = vmatpush1.bf16.msra.mxu0 %v1794
    %1819 = vmatprep.subr.bf16.mxu0 0
    %1820 = vmatpush1.bf16.msra.mxu0 0
    %1821 = vmatprep.subr.bf16.mxu0 0
    %1822 = vmatpush1.bf16.msra.mxu0 0
    %1823 = vmatprep.subr.bf16.mxu0 0
    %1824 = vmatpush1.bf16.msra.mxu0 0
    %1825 = vmatprep.subr.bf16.mxu0 0
    %1826 = vmatpush1.bf16.msra.mxu0 0
    %1827 = vmatprep.subr.bf16.mxu0 0
    %1828 = vmatpush1.bf16.msra.mxu0 0
    %1829 = vmatprep.subr.bf16.mxu0 0
    %1830 = vmatpush1.bf16.msra.mxu0 0
    %1831 = vmatprep.subr.bf16.mxu0 0
    %1832 = vmatpush1.bf16.msra.mxu0 0
    %1833 = vmatprep.subr.bf16.mxu0 0
    %1834 = vmatpush1.bf16.msra.mxu0 0
    %1835 = vmatprep.mubr.bf16.mxu0 0
    %1836 = vmatmul.mubr.bf16.gmra.mrb[0].mxu0 %v1731
    %v1837 = vpop.f32.mrb[0].mxu0
    %v1838 = vadd.f32 %v1753, %v1837
    %v1839 = vpop.f32.mrb[0].mxu0
    %v1840 = vpop.f32.mrb[0].mxu0
    %v1841 = vadd.f32 %v1753, %v1840
    %v1842 = vpop.f32.mrb[0].mxu0
    %1843 = vdwg.mxu0
    %1844 = vst [vmem:[#allocation32] sm:$0xff] %v1838
    %1845 = vst [vmem:[#allocation32 + $0x8] sm:$0xff] %v1841
    %v1846 = vld [vmem:[#allocation5] sm:$0xf]
    %v1847 = vld [vmem:[#allocation5 + $0x4] sm:$0xf]
    %v1848 = vld [vmem:[#allocation17] sm:$0xf]
    %v1849 = vld [vmem:[#allocation17 + $0x4] sm:$0xf]
    %v1850 = vld [vmem:[#allocation17 + $0x8] sm:$0xf]
    %v1851 = vld [vmem:[#allocation17 + $0xc] sm:$0xf]
    %v1852 = vld [vmem:[#allocation17 + $0x10] sm:$0xf]
    %v1853 = vld [vmem:[#allocation17 + $0x14] sm:$0xf]
    %v1854 = vld [vmem:[#allocation17 + $0x18] sm:$0xf]
    %v1855 = vld [vmem:[#allocation17 + $0x1c] sm:$0xf]
    %v1856 = vld [vmem:[#allocation17 + $0x20] sm:$0xf]
    %v1857 = vld [vmem:[#allocation17 + $0x24] sm:$0xf]
    %v1858 = vld [vmem:[#allocation17 + $0x28] sm:$0xf]
    %v1859 = vld [vmem:[#allocation17 + $0x2c] sm:$0xf]
    %v1860 = vld [vmem:[#allocation17 + $0x30] sm:$0xf]
    %v1861 = vld [vmem:[#allocation17 + $0x34] sm:$0xf]
    %v1862 = vld [vmem:[#allocation17 + $0x38] sm:$0xf]
    %v1863 = vld [vmem:[#allocation17 + $0x3c] sm:$0xf]
    %v1864 = vld [vmem:[#allocation19] sm:$0x1]
    %v1866 = vlaneseq
    %v1867 = vshrl.u32 %v1866, 7
    %v1868 = vsub.s32 0, %v1867
    %v1869 = vrot.slane %v1864, %v1868
    %v1873 = vunpack.c.l.b16 %v1846
    %v1874 = vunpack.c.l.b16 %v1847
    %v1875 = vpack.c.b16 %v1874, %v1873
    %v1893 = vunpack.c.l.b16 %v1848
    %v1894 = vunpack.c.l.b16 %v1849
    %v1895 = vunpack.c.l.b16 %v1850
    %v1896 = vunpack.c.l.b16 %v1851
    %v1897 = vunpack.c.l.b16 %v1852
    %v1898 = vunpack.c.l.b16 %v1853
    %v1899 = vunpack.c.l.b16 %v1854
    %v1900 = vunpack.c.l.b16 %v1855
    %v1901 = vunpack.c.l.b16 %v1856
    %v1902 = vunpack.c.l.b16 %v1857
    %v1903 = vunpack.c.l.b16 %v1858
    %v1904 = vunpack.c.l.b16 %v1859
    %v1905 = vunpack.c.l.b16 %v1860
    %v1906 = vunpack.c.l.b16 %v1861
    %v1907 = vunpack.c.l.b16 %v1862
    %v1908 = vunpack.c.l.b16 %v1863
    %v1909 = vpack.c.b16 %v1894, %v1893
    %v1910 = vpack.c.b16 %v1896, %v1895
    %v1911 = vpack.c.b16 %v1898, %v1897
    %v1912 = vpack.c.b16 %v1900, %v1899
    %v1913 = vpack.c.b16 %v1902, %v1901
    %v1914 = vpack.c.b16 %v1904, %v1903
    %v1915 = vpack.c.b16 %v1906, %v1905
    %v1916 = vpack.c.b16 %v1908, %v1907
    %1925 = vmatprep.subr.bf16.mxu0 0
    %1926 = vmatpush1.bf16.msra.mxu0 %v1909
    %1927 = vmatprep.subr.bf16.mxu0 0
    %1928 = vmatpush1.bf16.msra.mxu0 %v1910
    %1929 = vmatprep.subr.bf16.mxu0 0
    %1930 = vmatpush1.bf16.msra.mxu0 %v1911
    %1931 = vmatprep.subr.bf16.mxu0 0
    %1932 = vmatpush1.bf16.msra.mxu0 %v1912
    %1933 = vmatprep.subr.bf16.mxu0 0
    %1934 = vmatpush1.bf16.msra.mxu0 %v1913
    %1935 = vmatprep.subr.bf16.mxu0 0
    %1936 = vmatpush1.bf16.msra.mxu0 %v1914
    %1937 = vmatprep.subr.bf16.mxu0 0
    %1938 = vmatpush1.bf16.msra.mxu0 %v1915
    %1939 = vmatprep.subr.bf16.mxu0 0
    %1940 = vmatpush1.bf16.msra.mxu0 %v1916
    %1941 = vmatprep.subr.bf16.mxu0 0
    %1942 = vmatpush1.bf16.msra.mxu0 0
    %1943 = vmatprep.subr.bf16.mxu0 0
    %1944 = vmatpush1.bf16.msra.mxu0 0
    %1945 = vmatprep.subr.bf16.mxu0 0
    %1946 = vmatpush1.bf16.msra.mxu0 0
    %1947 = vmatprep.subr.bf16.mxu0 0
    %1948 = vmatpush1.bf16.msra.mxu0 0
    %1949 = vmatprep.subr.bf16.mxu0 0
    %1950 = vmatpush1.bf16.msra.mxu0 0
    %1951 = vmatprep.subr.bf16.mxu0 0
    %1952 = vmatpush1.bf16.msra.mxu0 0
    %1953 = vmatprep.subr.bf16.mxu0 0
    %1954 = vmatpush1.bf16.msra.mxu0 0
    %1955 = vmatprep.subr.bf16.mxu0 0
    %1956 = vmatpush1.bf16.msra.mxu0 0
    %1957 = vmatprep.mubr.bf16.mxu0 0
    %1958 = vmatmul.mubr.bf16.gmra.mrb[0].mxu0 %v1875
    %v1959 = vpop.f32.mrb[0].mxu0
    %v1960 = vadd.f32 %v1869, %v1959
    %v1961 = vpop.f32.mrb[0].mxu0
    %v1962 = vpop.f32.mrb[0].mxu0
    %v1963 = vadd.f32 %v1869, %v1962
    %v1964 = vpop.f32.mrb[0].mxu0
    %1965 = vdwg.mxu0
    %vm1966 = vcmp.gt.f32.partialorder %v1960, 0.0
    %vm1967 = vcmp.gt.f32.partialorder %v1963, 0.0
    %v1968 = vmul.f32 %v1960, 0.01
    %v1969 = vmul.f32 %v1963, 0.01
    %v1970 = vsel %vm1966, %v1960, %v1968
    %v1971 = vsel %vm1967, %v1963, %v1969
    %v1972 = vpack.c.bf16 %v1971, %v1970
    %v1973 = vld [vmem:[#allocation20] sm:$0xf]
    %v1974 = vld [vmem:[#allocation20 + $0x4] sm:$0xf]
    %v1975 = vld [vmem:[#allocation20 + $0x8] sm:$0xf]
    %v1976 = vld [vmem:[#allocation20 + $0xc] sm:$0xf]
    %v1977 = vld [vmem:[#allocation20 + $0x10] sm:$0xf]
    %v1978 = vld [vmem:[#allocation20 + $0x14] sm:$0xf]
    %v1979 = vld [vmem:[#allocation20 + $0x18] sm:$0xf]
    %v1980 = vld [vmem:[#allocation20 + $0x1c] sm:$0xf]
    %v1981 = vld [vmem:[#allocation20 + $0x20] sm:$0xf]
    %v1982 = vld [vmem:[#allocation20 + $0x24] sm:$0xf]
    %v1983 = vld [vmem:[#allocation20 + $0x28] sm:$0xf]
    %v1984 = vld [vmem:[#allocation20 + $0x2c] sm:$0xf]
    %v1985 = vld [vmem:[#allocation20 + $0x30] sm:$0xf]
    %v1986 = vld [vmem:[#allocation20 + $0x34] sm:$0xf]
    %v1987 = vld [vmem:[#allocation20 + $0x38] sm:$0xf]
    %v1988 = vld [vmem:[#allocation20 + $0x3c] sm:$0xf]
    %v1989 = vld [vmem:[#allocation22] sm:$0x1]
    %v1991 = vlaneseq
    %v1992 = vshrl.u32 %v1991, 7
    %v1993 = vsub.s32 0, %v1992
    %v1994 = vrot.slane %v1989, %v1993
    %v2012 = vunpack.c.l.b16 %v1973
    %v2013 = vunpack.c.l.b16 %v1974
    %v2014 = vunpack.c.l.b16 %v1975
    %v2015 = vunpack.c.l.b16 %v1976
    %v2016 = vunpack.c.l.b16 %v1977
    %v2017 = vunpack.c.l.b16 %v1978
    %v2018 = vunpack.c.l.b16 %v1979
    %v2019 = vunpack.c.l.b16 %v1980
    %v2020 = vunpack.c.l.b16 %v1981
    %v2021 = vunpack.c.l.b16 %v1982
    %v2022 = vunpack.c.l.b16 %v1983
    %v2023 = vunpack.c.l.b16 %v1984
    %v2024 = vunpack.c.l.b16 %v1985
    %v2025 = vunpack.c.l.b16 %v1986
    %v2026 = vunpack.c.l.b16 %v1987
    %v2027 = vunpack.c.l.b16 %v1988
    %v2028 = vpack.c.b16 %v2013, %v2012
    %v2029 = vpack.c.b16 %v2015, %v2014
    %v2030 = vpack.c.b16 %v2017, %v2016
    %v2031 = vpack.c.b16 %v2019, %v2018
    %v2032 = vpack.c.b16 %v2021, %v2020
    %v2033 = vpack.c.b16 %v2023, %v2022
    %v2034 = vpack.c.b16 %v2025, %v2024
    %v2035 = vpack.c.b16 %v2027, %v2026
    %2044 = vmatprep.subr.bf16.mxu0 0
    %2045 = vmatpush1.bf16.msra.mxu0 %v2028
    %2046 = vmatprep.subr.bf16.mxu0 0
    %2047 = vmatpush1.bf16.msra.mxu0 %v2029
    %2048 = vmatprep.subr.bf16.mxu0 0
    %2049 = vmatpush1.bf16.msra.mxu0 %v2030
    %2050 = vmatprep.subr.bf16.mxu0 0
    %2051 = vmatpush1.bf16.msra.mxu0 %v2031
    %2052 = vmatprep.subr.bf16.mxu0 0
    %2053 = vmatpush1.bf16.msra.mxu0 %v2032
    %2054 = vmatprep.subr.bf16.mxu0 0
    %2055 = vmatpush1.bf16.msra.mxu0 %v2033
    %2056 = vmatprep.subr.bf16.mxu0 0
    %2057 = vmatpush1.bf16.msra.mxu0 %v2034
    %2058 = vmatprep.subr.bf16.mxu0 0
    %2059 = vmatpush1.bf16.msra.mxu0 %v2035
    %2060 = vmatprep.subr.bf16.mxu0 0
    %2061 = vmatpush1.bf16.msra.mxu0 0
    %2062 = vmatprep.subr.bf16.mxu0 0
    %2063 = vmatpush1.bf16.msra.mxu0 0
    %2064 = vmatprep.subr.bf16.mxu0 0
    %2065 = vmatpush1.bf16.msra.mxu0 0
    %2066 = vmatprep.subr.bf16.mxu0 0
    %2067 = vmatpush1.bf16.msra.mxu0 0
    %2068 = vmatprep.subr.bf16.mxu0 0
    %2069 = vmatpush1.bf16.msra.mxu0 0
    %2070 = vmatprep.subr.bf16.mxu0 0
    %2071 = vmatpush1.bf16.msra.mxu0 0
    %2072 = vmatprep.subr.bf16.mxu0 0
    %2073 = vmatpush1.bf16.msra.mxu0 0
    %2074 = vmatprep.subr.bf16.mxu0 0
    %2075 = vmatpush1.bf16.msra.mxu0 0
    %2076 = vmatprep.mubr.bf16.mxu0 0
    %2077 = vmatmul.mubr.bf16.gmra.mrb[0].mxu0 %v1972
    %v2078 = vpop.f32.mrb[0].mxu0
    %v2079 = vadd.f32 %v1994, %v2078
    %v2080 = vpop.f32.mrb[0].mxu0
    %v2081 = vpop.f32.mrb[0].mxu0
    %v2082 = vadd.f32 %v1994, %v2081
    %v2083 = vpop.f32.mrb[0].mxu0
    %2084 = vdwg.mxu0
    %vm2085 = vcmp.gt.f32.partialorder %v2079, 0.0
    %vm2086 = vcmp.gt.f32.partialorder %v2082, 0.0
    %v2087 = vmul.f32 %v2079, 0.01
    %v2088 = vmul.f32 %v2082, 0.01
    %v2089 = vsel %vm2085, %v2079, %v2087
    %v2090 = vsel %vm2086, %v2082, %v2088
    %v2091 = vmul.f32 %v2089, %v2089
    %v2092 = vmul.f32 %v2090, %v2090
    %2093 = vadd.xlane.f32.xlu0 %v2091
    %v2094 = vpop.xlane.xlu0 %2093
    %2095 = vadd.xlane.f32.xlu0 %v2092
    %v2096 = vpop.xlane.xlu0 %2095
    %v2097 = vrsqrt.pop %v2094
    %v2098 = vmul.f32 %v2094, %v2097
    %vm2099 = vcmp.eq.f32.partialorder %v2094, inf
    %v2100 = vsel %vm2099, %v2094, %v2098
    %vm2101 = vcmp.eq.f32.partialorder %v2094, 0.0
    %v2102 = vand.u32 %v2094, 2147483648
    %v2103 = vsel %vm2101, %v2102, %v2100
    %v2104 = vrsqrt.pop %v2096
    %v2105 = vmul.f32 %v2096, %v2104
    %vm2106 = vcmp.eq.f32.partialorder %v2096, inf
    %v2107 = vsel %vm2106, %v2096, %v2105
    %vm2108 = vcmp.eq.f32.partialorder %v2096, 0.0
    %v2109 = vand.u32 %v2096, 2147483648
    %v2110 = vsel %vm2108, %v2109, %v2107
    %v2111 = vadd.f32 %v2103, 1e-09
    %v2112 = vadd.f32 %v2110, 1e-09
    %v2113 = vrcp.pop %v2111
    %v2114 = vmul.f32 %v2089, %v2113
    %v2115 = vrcp.pop %v2112
    %v2116 = vmul.f32 %v2090, %v2115
    %v2117 = vpack.c.bf16 %v2116, %v2114
    %v2118 = vld [vmem:[#allocation23] sm:$0xf]
    %v2119 = vld [vmem:[#allocation23 + $0x4] sm:$0xf]
    %v2120 = vld [vmem:[#allocation23 + $0x8] sm:$0xf]
    %v2121 = vld [vmem:[#allocation23 + $0xc] sm:$0xf]
    %v2122 = vld [vmem:[#allocation23 + $0x10] sm:$0xf]
    %v2123 = vld [vmem:[#allocation23 + $0x14] sm:$0xf]
    %v2124 = vld [vmem:[#allocation23 + $0x18] sm:$0xf]
    %v2125 = vld [vmem:[#allocation23 + $0x1c] sm:$0xf]
    %v2126 = vld [vmem:[#allocation23 + $0x20] sm:$0xf]
    %v2127 = vld [vmem:[#allocation23 + $0x24] sm:$0xf]
    %v2128 = vld [vmem:[#allocation23 + $0x28] sm:$0xf]
    %v2129 = vld [vmem:[#allocation23 + $0x2c] sm:$0xf]
    %v2130 = vld [vmem:[#allocation23 + $0x30] sm:$0xf]
    %v2131 = vld [vmem:[#allocation23 + $0x34] sm:$0xf]
    %v2132 = vld [vmem:[#allocation23 + $0x38] sm:$0xf]
    %v2133 = vld [vmem:[#allocation23 + $0x3c] sm:$0xf]
    %v2134 = vld [vmem:[#allocation25] sm:$0x1]
    %v2136 = vlaneseq
    %v2137 = vshrl.u32 %v2136, 7
    %v2138 = vsub.s32 0, %v2137
    %v2139 = vrot.slane %v2134, %v2138
    %v2157 = vunpack.c.l.b16 %v2118
    %v2158 = vunpack.c.l.b16 %v2119
    %v2159 = vunpack.c.l.b16 %v2120
    %v2160 = vunpack.c.l.b16 %v2121
    %v2161 = vunpack.c.l.b16 %v2122
    %v2162 = vunpack.c.l.b16 %v2123
    %v2163 = vunpack.c.l.b16 %v2124
    %v2164 = vunpack.c.l.b16 %v2125
    %v2165 = vunpack.c.l.b16 %v2126
    %v2166 = vunpack.c.l.b16 %v2127
    %v2167 = vunpack.c.l.b16 %v2128
    %v2168 = vunpack.c.l.b16 %v2129
    %v2169 = vunpack.c.l.b16 %v2130
    %v2170 = vunpack.c.l.b16 %v2131
    %v2171 = vunpack.c.l.b16 %v2132
    %v2172 = vunpack.c.l.b16 %v2133
    %v2173 = vpack.c.b16 %v2158, %v2157
    %v2174 = vpack.c.b16 %v2160, %v2159
    %v2175 = vpack.c.b16 %v2162, %v2161
    %v2176 = vpack.c.b16 %v2164, %v2163
    %v2177 = vpack.c.b16 %v2166, %v2165
    %v2178 = vpack.c.b16 %v2168, %v2167
    %v2179 = vpack.c.b16 %v2170, %v2169
    %v2180 = vpack.c.b16 %v2172, %v2171
    %2189 = vmatprep.subr.bf16.mxu0 0
    %2190 = vmatpush1.bf16.msra.mxu0 %v2173
    %2191 = vmatprep.subr.bf16.mxu0 0
    %2192 = vmatpush1.bf16.msra.mxu0 %v2174
    %2193 = vmatprep.subr.bf16.mxu0 0
    %2194 = vmatpush1.bf16.msra.mxu0 %v2175
    %2195 = vmatprep.subr.bf16.mxu0 0
    %2196 = vmatpush1.bf16.msra.mxu0 %v2176
    %2197 = vmatprep.subr.bf16.mxu0 0
    %2198 = vmatpush1.bf16.msra.mxu0 %v2177
    %2199 = vmatprep.subr.bf16.mxu0 0
    %2200 = vmatpush1.bf16.msra.mxu0 %v2178
    %2201 = vmatprep.subr.bf16.mxu0 0
    %2202 = vmatpush1.bf16.msra.mxu0 %v2179
    %2203 = vmatprep.subr.bf16.mxu0 0
    %2204 = vmatpush1.bf16.msra.mxu0 %v2180
    %2205 = vmatprep.subr.bf16.mxu0 0
    %2206 = vmatpush1.bf16.msra.mxu0 0
    %2207 = vmatprep.subr.bf16.mxu0 0
    %2208 = vmatpush1.bf16.msra.mxu0 0
    %2209 = vmatprep.subr.bf16.mxu0 0
    %2210 = vmatpush1.bf16.msra.mxu0 0
    %2211 = vmatprep.subr.bf16.mxu0 0
    %2212 = vmatpush1.bf16.msra.mxu0 0
    %2213 = vmatprep.subr.bf16.mxu0 0
    %2214 = vmatpush1.bf16.msra.mxu0 0
    %2215 = vmatprep.subr.bf16.mxu0 0
    %2216 = vmatpush1.bf16.msra.mxu0 0
    %2217 = vmatprep.subr.bf16.mxu0 0
    %2218 = vmatpush1.bf16.msra.mxu0 0
    %2219 = vmatprep.subr.bf16.mxu0 0
    %2220 = vmatpush1.bf16.msra.mxu0 0
    %2221 = vmatprep.mubr.bf16.mxu0 0
    %2222 = vmatmul.mubr.bf16.gmra.mrb[0].mxu0 %v2117
    %v2223 = vpop.f32.mrb[0].mxu0
    %v2224 = vadd.f32 %v2139, %v2223
    %v2225 = vpop.f32.mrb[0].mxu0
    %v2226 = vpop.f32.mrb[0].mxu0
    %v2227 = vadd.f32 %v2139, %v2226
    %v2228 = vpop.f32.mrb[0].mxu0
    %2229 = vdwg.mxu0
    %2230 = vst [vmem:[#allocation34] sm:$0xff] %v2224
    %2231 = vst [vmem:[#allocation34 + $0x8] sm:$0xff] %v2227
    %v2232 = vld [vmem:[#allocation7] sm:$0xf]
    %v2233 = vld [vmem:[#allocation7 + $0x4] sm:$0xf]
    %v2234 = vld [vmem:[#allocation26] sm:$0xf]
    %v2235 = vld [vmem:[#allocation26 + $0x4] sm:$0xf]
    %v2236 = vld [vmem:[#allocation26 + $0x8] sm:$0xf]
    %v2237 = vld [vmem:[#allocation26 + $0xc] sm:$0xf]
    %v2238 = vld [vmem:[#allocation26 + $0x10] sm:$0xf]
    %v2239 = vld [vmem:[#allocation26 + $0x14] sm:$0xf]
    %v2240 = vld [vmem:[#allocation26 + $0x18] sm:$0xf]
    %v2241 = vld [vmem:[#allocation26 + $0x1c] sm:$0xf]
    %v2242 = vld [vmem:[#allocation26 + $0x20] sm:$0xf]
    %v2243 = vld [vmem:[#allocation26 + $0x24] sm:$0xf]
    %v2244 = vld [vmem:[#allocation26 + $0x28] sm:$0xf]
    %v2245 = vld [vmem:[#allocation26 + $0x2c] sm:$0xf]
    %v2246 = vld [vmem:[#allocation26 + $0x30] sm:$0xf]
    %v2247 = vld [vmem:[#allocation26 + $0x34] sm:$0xf]
    %v2248 = vld [vmem:[#allocation26 + $0x38] sm:$0xf]
    %v2249 = vld [vmem:[#allocation26 + $0x3c] sm:$0xf]
    %v2250 = vld [vmem:[#allocation28] sm:$0x1]
    %v2252 = vlaneseq
    %v2253 = vshrl.u32 %v2252, 7
    %v2254 = vsub.s32 0, %v2253
    %v2255 = vrot.slane %v2250, %v2254
    %v2259 = vunpack.c.l.b16 %v2232
    %v2260 = vunpack.c.l.b16 %v2233
    %v2261 = vpack.c.b16 %v2260, %v2259
    %v2279 = vunpack.c.l.b16 %v2234
    %v2280 = vunpack.c.l.b16 %v2235
    %v2281 = vunpack.c.l.b16 %v2236
    %v2282 = vunpack.c.l.b16 %v2237
    %v2283 = vunpack.c.l.b16 %v2238
    %v2284 = vunpack.c.l.b16 %v2239
    %v2285 = vunpack.c.l.b16 %v2240
    %v2286 = vunpack.c.l.b16 %v2241
    %v2287 = vunpack.c.l.b16 %v2242
    %v2288 = vunpack.c.l.b16 %v2243
    %v2289 = vunpack.c.l.b16 %v2244
    %v2290 = vunpack.c.l.b16 %v2245
    %v2291 = vunpack.c.l.b16 %v2246
    %v2292 = vunpack.c.l.b16 %v2247
    %v2293 = vunpack.c.l.b16 %v2248
    %v2294 = vunpack.c.l.b16 %v2249
    %v2295 = vpack.c.b16 %v2280, %v2279
    %v2296 = vpack.c.b16 %v2282, %v2281
    %v2297 = vpack.c.b16 %v2284, %v2283
    %v2298 = vpack.c.b16 %v2286, %v2285
    %v2299 = vpack.c.b16 %v2288, %v2287
    %v2300 = vpack.c.b16 %v2290, %v2289
    %v2301 = vpack.c.b16 %v2292, %v2291
    %v2302 = vpack.c.b16 %v2294, %v2293
    %2311 = vmatprep.subr.bf16.mxu0 0
    %2312 = vmatpush1.bf16.msra.mxu0 %v2295
    %2313 = vmatprep.subr.bf16.mxu0 0
    %2314 = vmatpush1.bf16.msra.mxu0 %v2296
    %2315 = vmatprep.subr.bf16.mxu0 0
    %2316 = vmatpush1.bf16.msra.mxu0 %v2297
    %2317 = vmatprep.subr.bf16.mxu0 0
    %2318 = vmatpush1.bf16.msra.mxu0 %v2298
    %2319 = vmatprep.subr.bf16.mxu0 0
    %2320 = vmatpush1.bf16.msra.mxu0 %v2299
    %2321 = vmatprep.subr.bf16.mxu0 0
    %2322 = vmatpush1.bf16.msra.mxu0 %v2300
    %2323 = vmatprep.subr.bf16.mxu0 0
    %2324 = vmatpush1.bf16.msra.mxu0 %v2301
    %2325 = vmatprep.subr.bf16.mxu0 0
    %2326 = vmatpush1.bf16.msra.mxu0 %v2302
    %2327 = vmatprep.subr.bf16.mxu0 0
    %2328 = vmatpush1.bf16.msra.mxu0 0
    %2329 = vmatprep.subr.bf16.mxu0 0
    %2330 = vmatpush1.bf16.msra.mxu0 0
    %2331 = vmatprep.subr.bf16.mxu0 0
    %2332 = vmatpush1.bf16.msra.mxu0 0
    %2333 = vmatprep.subr.bf16.mxu0 0
    %2334 = vmatpush1.bf16.msra.mxu0 0
    %2335 = vmatprep.subr.bf16.mxu0 0
    %2336 = vmatpush1.bf16.msra.mxu0 0
    %2337 = vmatprep.subr.bf16.mxu0 0
    %2338 = vmatpush1.bf16.msra.mxu0 0
    %2339 = vmatprep.subr.bf16.mxu0 0
    %2340 = vmatpush1.bf16.msra.mxu0 0
    %2341 = vmatprep.subr.bf16.mxu0 0
    %2342 = vmatpush1.bf16.msra.mxu0 0
    %2343 = vmatprep.mubr.bf16.mxu0 0
    %2344 = vmatmul.mubr.bf16.gmra.mrb[0].mxu0 %v2261
    %v2345 = vpop.f32.mrb[0].mxu0
    %v2346 = vadd.f32 %v2255, %v2345
    %v2347 = vpop.f32.mrb[0].mxu0
    %v2348 = vpop.f32.mrb[0].mxu0
    %v2349 = vadd.f32 %v2255, %v2348
    %v2350 = vpop.f32.mrb[0].mxu0
    %2351 = vdwg.mxu0
    %vm2352 = vcmp.gt.f32.partialorder %v2346, 0.0
    %vm2353 = vcmp.gt.f32.partialorder %v2349, 0.0
    %v2354 = vmul.f32 %v2346, 0.01
    %v2355 = vmul.f32 %v2349, 0.01
    %v2356 = vsel %vm2352, %v2346, %v2354
    %v2357 = vsel %vm2353, %v2349, %v2355
    %v2358 = vmul.f32 %v2356, %v2356
    %v2359 = vmul.f32 %v2357, %v2357
    %2360 = vadd.xlane.f32.xlu0 %v2358
    %v2361 = vpop.xlane.xlu0 %2360
    %2362 = vadd.xlane.f32.xlu0 %v2359
    %v2363 = vpop.xlane.xlu0 %2362
    %v2364 = vrsqrt.pop %v2361
    %v2365 = vmul.f32 %v2361, %v2364
    %vm2366 = vcmp.eq.f32.partialorder %v2361, inf
    %v2367 = vsel %vm2366, %v2361, %v2365
    %vm2368 = vcmp.eq.f32.partialorder %v2361, 0.0
    %v2369 = vand.u32 %v2361, 2147483648
    %v2370 = vsel %vm2368, %v2369, %v2367
    %v2371 = vrsqrt.pop %v2363
    %v2372 = vmul.f32 %v2363, %v2371
    %vm2373 = vcmp.eq.f32.partialorder %v2363, inf
    %v2374 = vsel %vm2373, %v2363, %v2372
    %vm2375 = vcmp.eq.f32.partialorder %v2363, 0.0
    %v2376 = vand.u32 %v2363, 2147483648
    %v2377 = vsel %vm2375, %v2376, %v2374
    %v2378 = vadd.f32 %v2370, 1e-09
    %v2379 = vadd.f32 %v2377, 1e-09
    %v2380 = vrcp.pop %v2378
    %v2381 = vmul.f32 %v2356, %v2380
    %v2382 = vrcp.pop %v2379
    %v2383 = vmul.f32 %v2357, %v2382
    %v2384 = vpack.c.bf16 %v2383, %v2381
    %v2385 = vld [vmem:[%s17] sm:$0xf]
    %v2386 = vld [vmem:[%s17 + $0x4] sm:$0xf]
    %v2387 = vld [vmem:[%s17 + $0x8] sm:$0xf]
    %v2388 = vld [vmem:[%s17 + $0xc] sm:$0xf]
    %v2389 = vld [vmem:[%s17 + $0x10] sm:$0xf]
    %v2390 = vld [vmem:[%s17 + $0x14] sm:$0xf]
    %v2391 = vld [vmem:[%s17 + $0x18] sm:$0xf]
    %v2392 = vld [vmem:[%s17 + $0x1c] sm:$0xf]
    %v2393 = vld [vmem:[%s17 + $0x20] sm:$0xf]
    %v2394 = vld [vmem:[%s17 + $0x24] sm:$0xf]
    %v2395 = vld [vmem:[%s17 + $0x28] sm:$0xf]
    %v2396 = vld [vmem:[%s17 + $0x2c] sm:$0xf]
    %v2397 = vld [vmem:[%s17 + $0x30] sm:$0xf]
    %v2398 = vld [vmem:[%s17 + $0x34] sm:$0xf]
    %v2399 = vld [vmem:[%s17 + $0x38] sm:$0xf]
    %v2400 = vld [vmem:[%s17 + $0x3c] sm:$0xf]
    %v2401 = vld [vmem:[%s18] sm:$0x1]
    %v2403 = vlaneseq
    %v2404 = vshrl.u32 %v2403, 7
    %v2405 = vsub.s32 0, %v2404
    %v2406 = vrot.slane %v2401, %v2405
    %v2424 = vunpack.c.l.b16 %v2385
    %v2425 = vunpack.c.l.b16 %v2386
    %v2426 = vunpack.c.l.b16 %v2387
    %v2427 = vunpack.c.l.b16 %v2388
    %v2428 = vunpack.c.l.b16 %v2389
    %v2429 = vunpack.c.l.b16 %v2390
    %v2430 = vunpack.c.l.b16 %v2391
    %v2431 = vunpack.c.l.b16 %v2392
    %v2432 = vunpack.c.l.b16 %v2393
    %v2433 = vunpack.c.l.b16 %v2394
    %v2434 = vunpack.c.l.b16 %v2395
    %v2435 = vunpack.c.l.b16 %v2396
    %v2436 = vunpack.c.l.b16 %v2397
    %v2437 = vunpack.c.l.b16 %v2398
    %v2438 = vunpack.c.l.b16 %v2399
    %v2439 = vunpack.c.l.b16 %v2400
    %v2440 = vpack.c.b16 %v2425, %v2424
    %v2441 = vpack.c.b16 %v2427, %v2426
    %v2442 = vpack.c.b16 %v2429, %v2428
    %v2443 = vpack.c.b16 %v2431, %v2430
    %v2444 = vpack.c.b16 %v2433, %v2432
    %v2445 = vpack.c.b16 %v2435, %v2434
    %v2446 = vpack.c.b16 %v2437, %v2436
    %v2447 = vpack.c.b16 %v2439, %v2438
    %2456 = vmatprep.subr.bf16.mxu0 0
    %2457 = vmatpush1.bf16.msra.mxu0 %v2440
    %2458 = vmatprep.subr.bf16.mxu0 0
    %2459 = vmatpush1.bf16.msra.mxu0 %v2441
    %2460 = vmatprep.subr.bf16.mxu0 0
    %2461 = vmatpush1.bf16.msra.mxu0 %v2442
    %2462 = vmatprep.subr.bf16.mxu0 0
    %2463 = vmatpush1.bf16.msra.mxu0 %v2443
    %2464 = vmatprep.subr.bf16.mxu0 0
    %2465 = vmatpush1.bf16.msra.mxu0 %v2444
    %2466 = vmatprep.subr.bf16.mxu0 0
    %2467 = vmatpush1.bf16.msra.mxu0 %v2445
    %2468 = vmatprep.subr.bf16.mxu0 0
    %2469 = vmatpush1.bf16.msra.mxu0 %v2446
    %2470 = vmatprep.subr.bf16.mxu0 0
    %2471 = vmatpush1.bf16.msra.mxu0 %v2447
    %2472 = vmatprep.subr.bf16.mxu0 0
    %2473 = vmatpush1.bf16.msra.mxu0 0
    %2474 = vmatprep.subr.bf16.mxu0 0
    %2475 = vmatpush1.bf16.msra.mxu0 0
    %2476 = vmatprep.subr.bf16.mxu0 0
    %2477 = vmatpush1.bf16.msra.mxu0 0
    %2478 = vmatprep.subr.bf16.mxu0 0
    %2479 = vmatpush1.bf16.msra.mxu0 0
    %2480 = vmatprep.subr.bf16.mxu0 0
    %2481 = vmatpush1.bf16.msra.mxu0 0
    %2482 = vmatprep.subr.bf16.mxu0 0
    %2483 = vmatpush1.bf16.msra.mxu0 0
    %2484 = vmatprep.subr.bf16.mxu0 0
    %2485 = vmatpush1.bf16.msra.mxu0 0
    %2486 = vmatprep.subr.bf16.mxu0 0
    %2487 = vmatpush1.bf16.msra.mxu0 0
    %2488 = vmatprep.mubr.bf16.mxu0 0
    %2489 = vmatmul.mubr.bf16.gmra.mrb[0].mxu0 %v2384
    %v2490 = vpop.f32.mrb[0].mxu0
    %v2491 = vadd.f32 %v2406, %v2490
    %v2492 = vpop.f32.mrb[0].mxu0
    %v2493 = vpop.f32.mrb[0].mxu0
    %v2494 = vadd.f32 %v2406, %v2493
    %v2495 = vpop.f32.mrb[0].mxu0
    %2496 = vdwg.mxu0
    %2497 = vst [vmem:[#allocation35] sm:$0xff] %v2491
    %2498 = vst [vmem:[#allocation35 + $0x8] sm:$0xff] %v2494
    %v2499 = vmul.f32 %v2381, %v2381
    %v2500 = vmul.f32 %v2114, %v2114
    %v2501 = vmul.f32 %v1728, %v1728
    %v2502 = vmul.f32 %v2383, %v2383
    %v2503 = vmul.f32 %v2116, %v2116
    %v2504 = vmul.f32 %v1730, %v1730
    %v2505 = vadd.f32 %v2499, %v2500
    %v2506 = vadd.f32 %v2505, %v2501
    %2507 = vadd.xlane.f32.xlu0 %v2506
    %v2508 = vpop.xlane.xlu0 %2507
    %v2509 = vadd.f32 %v2502, %v2503
    %v2510 = vadd.f32 %v2509, %v2504
    %2511 = vadd.xlane.f32.xlu0 %v2510
    %v2512 = vpop.xlane.xlu0 %2511
    %v2513 = vrsqrt.pop %v2508
    %v2514 = vmul.f32 %v2508, %v2513
    %vm2515 = vcmp.eq.f32.partialorder %v2508, inf
    %v2516 = vsel %vm2515, %v2508, %v2514
    %vm2517 = vcmp.eq.f32.partialorder %v2508, 0.0
    %v2518 = vand.u32 %v2508, 2147483648
    %v2519 = vsel %vm2517, %v2518, %v2516
    %v2520 = vrsqrt.pop %v2512
    %v2521 = vmul.f32 %v2512, %v2520
    %vm2522 = vcmp.eq.f32.partialorder %v2512, inf
    %v2523 = vsel %vm2522, %v2512, %v2521
    %vm2524 = vcmp.eq.f32.partialorder %v2512, 0.0
    %v2525 = vand.u32 %v2512, 2147483648
    %v2526 = vsel %vm2524, %v2525, %v2523
    %v2527 = vadd.f32 %v2519, 1e-09
    %v2528 = vadd.f32 %v2526, 1e-09
    %v2529 = vrcp.pop %v2527
    %v2530 = vmul.f32 %v2381, %v2529
    %v2531 = vmul.f32 %v2114, %v2529
    %v2532 = vmul.f32 %v1728, %v2529
    %v2533 = vrcp.pop %v2528
    %v2534 = vmul.f32 %v2383, %v2533
    %v2535 = vmul.f32 %v2116, %v2533
    %v2536 = vmul.f32 %v1730, %v2533
    %v2537 = vpack.c.bf16 %v2534, %v2530
    %v2538 = vpack.c.bf16 %v2535, %v2531
    %v2539 = vpack.c.bf16 %v2536, %v2532
    %v2540 = vld [vmem:[#allocation29] sm:$0xf]
    %v2541 = vld [vmem:[#allocation29 + $0x4] sm:$0xf]
    %v2542 = vld [vmem:[#allocation29 + $0x8] sm:$0xf]
    %v2543 = vld [vmem:[#allocation29 + $0xc] sm:$0xf]
    %v2544 = vld [vmem:[#allocation29 + $0x10] sm:$0xf]
    %v2545 = vld [vmem:[#allocation29 + $0x14] sm:$0xf]
    %v2546 = vld [vmem:[#allocation29 + $0x18] sm:$0xf]
    %v2547 = vld [vmem:[#allocation29 + $0x1c] sm:$0xf]
    %v2548 = vld [vmem:[#allocation29 + $0x20] sm:$0xf]
    %v2549 = vld [vmem:[#allocation29 + $0x24] sm:$0xf]
    %v2550 = vld [vmem:[#allocation29 + $0x28] sm:$0xf]
    %v2551 = vld [vmem:[#allocation29 + $0x2c] sm:$0xf]
    %v2552 = vld [vmem:[#allocation29 + $0x30] sm:$0xf]
    %v2553 = vld [vmem:[#allocation29 + $0x34] sm:$0xf]
    %v2554 = vld [vmem:[#allocation29 + $0x38] sm:$0xf]
    %v2555 = vld [vmem:[#allocation29 + $0x3c] sm:$0xf]
    %v2556 = vld [vmem:[#allocation29 + $0x40] sm:$0xf]
    %v2557 = vld [vmem:[#allocation29 + $0x44] sm:$0xf]
    %v2558 = vld [vmem:[#allocation29 + $0x48] sm:$0xf]
    %v2559 = vld [vmem:[#allocation29 + $0x4c] sm:$0xf]
    %v2560 = vld [vmem:[#allocation29 + $0x50] sm:$0xf]
    %v2561 = vld [vmem:[#allocation29 + $0x54] sm:$0xf]
    %v2562 = vld [vmem:[#allocation29 + $0x58] sm:$0xf]
    %v2563 = vld [vmem:[#allocation29 + $0x5c] sm:$0xf]
    %v2564 = vld [vmem:[#allocation29 + $0x60] sm:$0xf]
    %v2565 = vld [vmem:[#allocation29 + $0x64] sm:$0xf]
    %v2566 = vld [vmem:[#allocation29 + $0x68] sm:$0xf]
    %v2567 = vld [vmem:[#allocation29 + $0x6c] sm:$0xf]
    %v2568 = vld [vmem:[#allocation29 + $0x70] sm:$0xf]
    %v2569 = vld [vmem:[#allocation29 + $0x74] sm:$0xf]
    %v2570 = vld [vmem:[#allocation29 + $0x78] sm:$0xf]
    %v2571 = vld [vmem:[#allocation29 + $0x7c] sm:$0xf]
    %v2572 = vld [vmem:[#allocation29 + $0x80] sm:$0xf]
    %v2573 = vld [vmem:[#allocation29 + $0x84] sm:$0xf]
    %v2574 = vld [vmem:[#allocation29 + $0x88] sm:$0xf]
    %v2575 = vld [vmem:[#allocation29 + $0x8c] sm:$0xf]
    %v2576 = vld [vmem:[#allocation29 + $0x90] sm:$0xf]
    %v2577 = vld [vmem:[#allocation29 + $0x94] sm:$0xf]
    %v2578 = vld [vmem:[#allocation29 + $0x98] sm:$0xf]
    %v2579 = vld [vmem:[#allocation29 + $0x9c] sm:$0xf]
    %v2580 = vld [vmem:[#allocation29 + $0xa0] sm:$0xf]
    %v2581 = vld [vmem:[#allocation29 + $0xa4] sm:$0xf]
    %v2582 = vld [vmem:[#allocation29 + $0xa8] sm:$0xf]
    %v2583 = vld [vmem:[#allocation29 + $0xac] sm:$0xf]
    %v2584 = vld [vmem:[#allocation29 + $0xb0] sm:$0xf]
    %v2585 = vld [vmem:[#allocation29 + $0xb4] sm:$0xf]
    %v2586 = vld [vmem:[#allocation29 + $0xb8] sm:$0xf]
    %v2587 = vld [vmem:[#allocation29 + $0xbc] sm:$0xf]
    %v2588 = vld [vmem:[%s20] sm:$0x1]
    %v2590 = vlaneseq
    %v2591 = vshrl.u32 %v2590, 7
    %v2592 = vsub.s32 0, %v2591
    %v2593 = vrot.slane %v2588, %v2592
    %v2643 = vunpack.c.l.b16 %v2540
    %v2644 = vunpack.c.l.b16 %v2541
    %v2645 = vunpack.c.l.b16 %v2542
    %v2646 = vunpack.c.l.b16 %v2543
    %v2647 = vunpack.c.l.b16 %v2544
    %v2648 = vunpack.c.l.b16 %v2545
    %v2649 = vunpack.c.l.b16 %v2546
    %v2650 = vunpack.c.l.b16 %v2547
    %v2651 = vunpack.c.l.b16 %v2548
    %v2652 = vunpack.c.l.b16 %v2549
    %v2653 = vunpack.c.l.b16 %v2550
    %v2654 = vunpack.c.l.b16 %v2551
    %v2655 = vunpack.c.l.b16 %v2552
    %v2656 = vunpack.c.l.b16 %v2553
    %v2657 = vunpack.c.l.b16 %v2554
    %v2658 = vunpack.c.l.b16 %v2555
    %v2659 = vunpack.c.l.b16 %v2556
    %v2660 = vunpack.c.l.b16 %v2557
    %v2661 = vunpack.c.l.b16 %v2558
    %v2662 = vunpack.c.l.b16 %v2559
    %v2663 = vunpack.c.l.b16 %v2560
    %v2664 = vunpack.c.l.b16 %v2561
    %v2665 = vunpack.c.l.b16 %v2562
    %v2666 = vunpack.c.l.b16 %v2563
    %v2667 = vunpack.c.l.b16 %v2564
    %v2668 = vunpack.c.l.b16 %v2565
    %v2669 = vunpack.c.l.b16 %v2566
    %v2670 = vunpack.c.l.b16 %v2567
    %v2671 = vunpack.c.l.b16 %v2568
    %v2672 = vunpack.c.l.b16 %v2569
    %v2673 = vunpack.c.l.b16 %v2570
    %v2674 = vunpack.c.l.b16 %v2571
    %v2675 = vunpack.c.l.b16 %v2572
    %v2676 = vunpack.c.l.b16 %v2573
    %v2677 = vunpack.c.l.b16 %v2574
    %v2678 = vunpack.c.l.b16 %v2575
    %v2679 = vunpack.c.l.b16 %v2576
    %v2680 = vunpack.c.l.b16 %v2577
    %v2681 = vunpack.c.l.b16 %v2578
    %v2682 = vunpack.c.l.b16 %v2579
    %v2683 = vunpack.c.l.b16 %v2580
    %v2684 = vunpack.c.l.b16 %v2581
    %v2685 = vunpack.c.l.b16 %v2582
    %v2686 = vunpack.c.l.b16 %v2583
    %v2687 = vunpack.c.l.b16 %v2584
    %v2688 = vunpack.c.l.b16 %v2585
    %v2689 = vunpack.c.l.b16 %v2586
    %v2690 = vunpack.c.l.b16 %v2587
    %v2691 = vpack.c.b16 %v2644, %v2643
    %v2692 = vpack.c.b16 %v2646, %v2645
    %v2693 = vpack.c.b16 %v2648, %v2647
    %v2694 = vpack.c.b16 %v2650, %v2649
    %v2695 = vpack.c.b16 %v2652, %v2651
    %v2696 = vpack.c.b16 %v2654, %v2653
    %v2697 = vpack.c.b16 %v2656, %v2655
    %v2698 = vpack.c.b16 %v2658, %v2657
    %v2699 = vpack.c.b16 %v2660, %v2659
    %v2700 = vpack.c.b16 %v2662, %v2661
    %v2701 = vpack.c.b16 %v2664, %v2663
    %v2702 = vpack.c.b16 %v2666, %v2665
    %v2703 = vpack.c.b16 %v2668, %v2667
    %v2704 = vpack.c.b16 %v2670, %v2669
    %v2705 = vpack.c.b16 %v2672, %v2671
    %v2706 = vpack.c.b16 %v2674, %v2673
    %v2707 = vpack.c.b16 %v2676, %v2675
    %v2708 = vpack.c.b16 %v2678, %v2677
    %v2709 = vpack.c.b16 %v2680, %v2679
    %v2710 = vpack.c.b16 %v2682, %v2681
    %v2711 = vpack.c.b16 %v2684, %v2683
    %v2712 = vpack.c.b16 %v2686, %v2685
    %v2713 = vpack.c.b16 %v2688, %v2687
    %v2714 = vpack.c.b16 %v2690, %v2689
    %2739 = vmatprep.subr.bf16.mxu0 0
    %2740 = vmatpush1.bf16.msra.mxu0 %v2691
    %2741 = vmatprep.subr.bf16.mxu0 0
    %2742 = vmatpush1.bf16.msra.mxu0 %v2692
    %2743 = vmatprep.subr.bf16.mxu0 0
    %2744 = vmatpush1.bf16.msra.mxu0 %v2693
    %2745 = vmatprep.subr.bf16.mxu0 0
    %2746 = vmatpush1.bf16.msra.mxu0 %v2694
    %2747 = vmatprep.subr.bf16.mxu0 0
    %2748 = vmatpush1.bf16.msra.mxu0 %v2695
    %2749 = vmatprep.subr.bf16.mxu0 0
    %2750 = vmatpush1.bf16.msra.mxu0 %v2696
    %2751 = vmatprep.subr.bf16.mxu0 0
    %2752 = vmatpush1.bf16.msra.mxu0 %v2697
    %2753 = vmatprep.subr.bf16.mxu0 0
    %2754 = vmatpush1.bf16.msra.mxu0 %v2698
    %2755 = vmatprep.subr.bf16.mxu0 0
    %2756 = vmatpush1.bf16.msra.mxu0 %v2699
    %2757 = vmatprep.subr.bf16.mxu0 0
    %2758 = vmatpush1.bf16.msra.mxu0 %v2700
    %2759 = vmatprep.subr.bf16.mxu0 0
    %2760 = vmatpush1.bf16.msra.mxu0 %v2701
    %2761 = vmatprep.subr.bf16.mxu0 0
    %2762 = vmatpush1.bf16.msra.mxu0 %v2702
    %2763 = vmatprep.subr.bf16.mxu0 0
    %2764 = vmatpush1.bf16.msra.mxu0 %v2703
    %2765 = vmatprep.subr.bf16.mxu0 0
    %2766 = vmatpush1.bf16.msra.mxu0 %v2704
    %2767 = vmatprep.subr.bf16.mxu0 0
    %2768 = vmatpush1.bf16.msra.mxu0 %v2705
    %2769 = vmatprep.subr.bf16.mxu0 0
    %2770 = vmatpush1.bf16.msra.mxu0 %v2706
    %2771 = vmatprep.mubr.bf16.mxu0 %v2538
    %2772 = vmatmul.mubr.bf16.gmra.mrb[0].mxu0 %v2537
    %v2773 = vpop.f32.mrb[0].mxu0
    %v2774 = vadd.f32 %v2593, %v2773
    %v2775 = vpop.f32.mrb[0].mxu0
    %v2776 = vpop.f32.mrb[0].mxu0
    %v2777 = vadd.f32 %v2593, %v2776
    %v2778 = vpop.f32.mrb[0].mxu0
    %2779 = vdwg.mxu0
    %2780 = vmatprep.subr.bf16.mxu0 0
    %2781 = vmatpush1.bf16.msra.mxu0 %v2707
    %2782 = vmatprep.subr.bf16.mxu0 0
    %2783 = vmatpush1.bf16.msra.mxu0 %v2708
    %2784 = vmatprep.subr.bf16.mxu0 0
    %2785 = vmatpush1.bf16.msra.mxu0 %v2709
    %2786 = vmatprep.subr.bf16.mxu0 0
    %2787 = vmatpush1.bf16.msra.mxu0 %v2710
    %2788 = vmatprep.subr.bf16.mxu0 0
    %2789 = vmatpush1.bf16.msra.mxu0 %v2711
    %2790 = vmatprep.subr.bf16.mxu0 0
    %2791 = vmatpush1.bf16.msra.mxu0 %v2712
    %2792 = vmatprep.subr.bf16.mxu0 0
    %2793 = vmatpush1.bf16.msra.mxu0 %v2713
    %2794 = vmatprep.subr.bf16.mxu0 0
    %2795 = vmatpush1.bf16.msra.mxu0 %v2714
    %2796 = vmatprep.subr.bf16.mxu0 0
    %2797 = vmatpush1.bf16.msra.mxu0 0
    %2798 = vmatprep.subr.bf16.mxu0 0
    %2799 = vmatpush1.bf16.msra.mxu0 0
    %2800 = vmatprep.subr.bf16.mxu0 0
    %2801 = vmatpush1.bf16.msra.mxu0 0
    %2802 = vmatprep.subr.bf16.mxu0 0
    %2803 = vmatpush1.bf16.msra.mxu0 0
    %2804 = vmatprep.subr.bf16.mxu0 0
    %2805 = vmatpush1.bf16.msra.mxu0 0
    %2806 = vmatprep.subr.bf16.mxu0 0
    %2807 = vmatpush1.bf16.msra.mxu0 0
    %2808 = vmatprep.subr.bf16.mxu0 0
    %2809 = vmatpush1.bf16.msra.mxu0 0
    %2810 = vmatprep.subr.bf16.mxu0 0
    %2811 = vmatpush1.bf16.msra.mxu0 0
    %2812 = vmatprep.mubr.bf16.mxu0 0
    %2813 = vmatmul.mubr.bf16.gmra.mrb[0].mxu0 %v2539
    %v2814 = vpop.f32.mrb[0].mxu0
    %v2815 = vadd.f32 %v2774, %v2814
    %v2816 = vpop.f32.mrb[0].mxu0
    %v2817 = vpop.f32.mrb[0].mxu0
    %v2818 = vadd.f32 %v2777, %v2817
    %v2819 = vpop.f32.mrb[0].mxu0
    %2820 = vdwg.mxu0
    %2821 = vst [vmem:[#allocation31] sm:$0xff] %v2815
    %2822 = vst [vmem:[#allocation31 + $0x8] sm:$0xff] %v2818
    // Predicated region
    $region158: #{tpu_custom_call.1} parent=1 // pred_check
      _
    $region159: #{tpu_custom_call.1} parent=1 // pred_check_branch
      %2824 = sbr.rel (0) target = $region161
    $region160: #{tpu_custom_call.1} parent=1 // pred_region
      %s2826 = ssub.s32 256, 256
      %2827 = vsyncadd [#allocation4], %s2826
      %s2828 = sshll.u32 [#allocation31], 4
      %s2829 = int_to_ptr.vmem [resolvable:$true] %s2828
      %2834 = dma.vmem_to_hbm [thread:$0]  %s2829, 256, %s21, [#allocation4], 128, 128, 8
    $region161: #{tpu_custom_call.1} parent=1 // pred_fallthru
      _
    // Predicated region
    $region162: #{tpu_custom_call.1} parent=1 // pred_check
      _
    $region163: #{tpu_custom_call.1} parent=1 // pred_check_branch
      %2836 = sbr.rel (0) target = $region165
    $region164: #{tpu_custom_call.1} parent=1 // pred_region
      %s2838 = ssub.s32 256, 256
      %2839 = vsyncadd [#allocation33], %s2838
      %s2840 = sshll.u32 [#allocation32], 4
      %s2841 = int_to_ptr.vmem [resolvable:$true] %s2840
      %2846 = dma.vmem_to_hbm [thread:$0]  %s2841, 256, %s22, [#allocation33], 128, 128, 8
    $region165: #{tpu_custom_call.1} parent=1 // pred_fallthru
      _
    // Predicated region
    $region166: #{tpu_custom_call.1} parent=1 // pred_check
      _
    $region167: #{tpu_custom_call.1} parent=1 // pred_check_branch
      %2848 = sbr.rel (0) target = $region169
    $region168: #{tpu_custom_call.1} parent=1 // pred_region
      %s2850 = ssub.s32 256, 256
      %2851 = vsyncadd [#allocation33], %s2850
      %s2852 = sshll.u32 [#allocation34], 4
      %s2853 = int_to_ptr.vmem [resolvable:$true] %s2852
      %2858 = dma.vmem_to_hbm [thread:$0]  %s2853, 256, %s23, [#allocation33], 128, 128, 8
    $region169: #{tpu_custom_call.1} parent=1 // pred_fallthru
      _
    // Predicated region
    $region170: #{tpu_custom_call.1} parent=1 // pred_check
      _
    $region171: #{tpu_custom_call.1} parent=1 // pred_check_branch
      %2860 = sbr.rel (0) target = $region173
    $region172: #{tpu_custom_call.1} parent=1 // pred_region
      %s2862 = ssub.s32 256, 256
      %2863 = vsyncadd [#allocation36], %s2862
      %s2864 = sshll.u32 [#allocation35], 4
      %s2865 = int_to_ptr.vmem [resolvable:$true] %s2864
      %2870 = dma.vmem_to_hbm [thread:$0]  %s2865, 256, %s24, [#allocation36], 128, 128, 8
    $region173: #{tpu_custom_call.1} parent=1 // pred_fallthru
      _
    // Predicated region
    $region174: #{tpu_custom_call.1} parent=1 // pred_check
      _
    $region175: #{tpu_custom_call.1} parent=1 // pred_check_branch
      %2872 = sbr.rel (0) target = $region177
    $region176: #{tpu_custom_call.1} parent=1 // pred_region
      %2873 = dma.done [#allocation4], 256
    $region177: #{tpu_custom_call.1} parent=1 // pred_fallthru
      _
    // Predicated region
    $region178: #{tpu_custom_call.1} parent=1 // pred_check
      _
    $region179: #{tpu_custom_call.1} parent=1 // pred_check_branch
      %2875 = sbr.rel (0) target = $region181
    $region180: #{tpu_custom_call.1} parent=1 // pred_region
      %2876 = dma.done [#allocation33], 256
    $region181: #{tpu_custom_call.1} parent=1 // pred_fallthru
      _
    // Predicated region
    $region182: #{tpu_custom_call.1} parent=1 // pred_check
      _
    $region183: #{tpu_custom_call.1} parent=1 // pred_check_branch
      %2878 = sbr.rel (0) target = $region185
    $region184: #{tpu_custom_call.1} parent=1 // pred_region
      %2879 = dma.done [#allocation33], 256
    $region185: #{tpu_custom_call.1} parent=1 // pred_fallthru
      _
    // Predicated region
    $region186: #{tpu_custom_call.1} parent=1 // pred_check
      _
    $region187: #{tpu_custom_call.1} parent=1 // pred_check_branch
      %2881 = sbr.rel (0) target = $region189
    $region188: #{tpu_custom_call.1} parent=1 // pred_region
      %2882 = dma.done [#allocation36], 256
    $region189: #{tpu_custom_call.1} parent=1 // pred_fallthru
      _
    %2883 = vsyncpa [#allocation3], 1
    %2884 = vsyncpa [#allocation6], 1
    %2885 = vsyncpa [#allocation9], 1
    %2886 = vsyncpa [#allocation12], 1
    %2887 = vsyncpa [#allocation15], 1
    %2888 = vsyncpa [#allocation18], 1
    %2889 = vsyncpa [#allocation21], 1
    %2890 = vsyncpa [#allocation24], 1
    %2891 = vsyncpa [#allocation27], 1
    %2892 = vsyncpa [#allocation30], 1
    %2893 = vsyncpa [#allocation4], 1
    %2894 = vsyncpa [#allocation33], 1
    %2895 = vsyncpa [#allocation36], 1

</llo_original>
